<compile_context>
chip_gen: v6e
topology: v6e:2x2x1
jax: 0.10.0
libtpu: 0.0.40
codegen_flags: <defaults>
</compile_context>

<pallas_src>
import functools

import jax
import jax.numpy as jnp
import numpy as np
from jax import lax
from jax.experimental import pallas as pl
from jax.experimental.pallas import tpu as pltpu

_VMEM_LIMIT = 32 * 1024 * 1024        # explicit VMEM budget (safe v5e/v6e/v7x)
_TAPS = tuple((dy, dx) for dy in range(3) for dx in range(3))


# ------- K_attn: QKV + multi-head attention + out-proj + residual + LN1 ------

def _attn_ln_kernel(x_ref, wqkv_ref, bqkv_ref, wo_ref, bo_ref, g_ref, b_ref,
                    o_ref, *, head_num, inv_temp, eps):
    S = x_ref.shape[1]
    C = x_ref.shape[2]
    D = C // head_num

    x = x_ref[0]                                        # (S, C) f32 (residual)
    xb = x.astype(wqkv_ref.dtype)                       # bf16 MXU operand
    qkv = jnp.dot(xb, wqkv_ref[...],
                  preferred_element_type=jnp.float32) + bqkv_ref[...]  # (S,3C)

    # Per-head attention (static unroll, bf16 operands, f32 accumulation).
    # TODO(synk): at production head_dim, batch all heads in one dot_general /
    # head-major layout instead of 8-lane slices (depth-D matmuls are
    # inherently MXU-starved at D=8 regardless of staging).
    heads = []
    for h in range(head_num):
        q = qkv[:, h * D:(h + 1) * D].astype(jnp.bfloat16)
        k = qkv[:, C + h * D:C + (h + 1) * D].astype(jnp.bfloat16)
        v = qkv[:, 2 * C + h * D:2 * C + (h + 1) * D].astype(jnp.bfloat16)
        # contract last dims (no explicit K transpose), scale by 1/temperature
        s = lax.dot_general(q, k, (((1,), (1,)), ((), ())),
                            preferred_element_type=jnp.float32) * inv_temp
        s = s - jnp.max(s, axis=-1, keepdims=True)
        p = jnp.exp(s)
        p = p * pl.reciprocal(jnp.sum(p, axis=-1, keepdims=True), approx=True)
        heads.append(jnp.dot(p.astype(jnp.bfloat16), v,
                             preferred_element_type=jnp.float32))       # (S,D)

    # Head concat + out_linear as ONE full-depth (S,C)@(C,C) matmul.
    o_cat = jnp.concatenate(heads, axis=-1).astype(jnp.bfloat16)        # (S,C)
    att = jnp.dot(o_cat, wo_ref[...],
                  preferred_element_type=jnp.float32) + bo_ref[...]

    z = att + x                                          # residual (f32)
    mean = jnp.mean(z, axis=-1, keepdims=True)
    var = jnp.mean((z - mean) ** 2, axis=-1, keepdims=True)
    zn = (z - mean) * lax.rsqrt(var + eps)
    o_ref[0] = (zn * g_ref[...] + b_ref[...]).astype(o_ref.dtype)


def attention_block(x, wqkv_bf16, bqkv, wo_bf16, bo, gamma, beta,
                    head_num, inv_temp, eps=1e-5):
    B, S, C = x.shape
    kern = functools.partial(_attn_ln_kernel, head_num=head_num,
                             inv_temp=inv_temp, eps=eps)
    flops = B * (2 * S * C * 3 * C + 4 * S * S * C + 2 * S * C * C)
    cost = pl.CostEstimate(
        flops=flops,
        transcendentals=B * head_num * S * S,
        bytes_accessed=8 * B * S * C + 2 * C * 3 * C + 2 * C * C)
    return pl.pallas_call(
        kern,
        out_shape=jax.ShapeDtypeStruct((B, S, C), x.dtype),
        grid=(B,),
        in_specs=[pl.BlockSpec((1, S, C), lambda b: (b, 0, 0)),
                  pl.BlockSpec((C, 3 * C), lambda b: (0, 0)),
                  pl.BlockSpec((1, 3 * C), lambda b: (0, 0)),
                  pl.BlockSpec((C, C), lambda b: (0, 0)),
                  pl.BlockSpec((1, C), lambda b: (0, 0)),
                  pl.BlockSpec((1, C), lambda b: (0, 0)),
                  pl.BlockSpec((1, C), lambda b: (0, 0))],
        out_specs=pl.BlockSpec((1, S, C), lambda b: (b, 0, 0)),
        compiler_params=pltpu.CompilerParams(
            dimension_semantics=("parallel",),
            vmem_limit_bytes=_VMEM_LIMIT),
        cost_estimate=cost,
    )(x, wqkv_bf16, bqkv, wo_bf16, bo, gamma, beta)


# ------- K_ffn: conv3x3+ReLU -> conv3x3+ReLU -> residual -> LayerNorm2 -------

def _ffn_ln_kernel(xin_ref, res_ref, w1_ref, w2_ref, g_ref, b_ref, o_ref,
                   pad1, pad2, col1, col2, *, H, W, eps):
    S = res_ref.shape[1]
    C = res_ref.shape[2]
    F = w1_ref.shape[1]
    HW = H * W

    # Zero ONLY the 1-pixel halo border (interior is fully overwritten below).
    # Done every step so it stays correct when the "parallel" grid is sharded
    # across TensorCores (per-core scratch never sees program_id 0).
    zc = jnp.zeros((1, W + 2, C), pad1.dtype)
    zf = jnp.zeros((1, W + 2, F), pad2.dtype)
    pad1[0:1, :, :] = zc
    pad1[H + 1:H + 2, :, :] = zc
    pad1[:, 0:1, :] = jnp.zeros((H + 2, 1, C), pad1.dtype)
    pad1[:, W + 1:W + 2, :] = jnp.zeros((H + 2, 1, C), pad1.dtype)
    pad2[0:1, :, :] = zf
    pad2[H + 1:H + 2, :, :] = zf
    pad2[:, 0:1, :] = jnp.zeros((H + 2, 1, F), pad2.dtype)
    pad2[:, W + 1:W + 2, :] = jnp.zeros((H + 2, 1, F), pad2.dtype)

    # torch `.view(shape)`: the (S,C) row-major buffer reinterpreted as
    # (C,H,W).  xin_ref is that (C, H*W) view; transpose to NHWC in VMEM (XLU).
    x_cs = xin_ref[0]                                    # (C, H*W) f32
    x_hwc = jnp.transpose(x_cs)                          # (H*W, C)
    pad1[1:H + 1, 1:W + 1, :] = x_hwc.reshape(H, W, C)

    # conv1: ONE im2col matmul (K = 9*C); columns staged in bf16 VMEM scratch.
    for j, (dy, dx) in enumerate(_TAPS):
        col1[:, j * C:(j + 1) * C] = (
            pad1[dy:dy + H, dx:dx + W, :].reshape(HW, C).astype(col1.dtype))
    h1 = jnp.dot(col1[...], w1_ref[...], preferred_element_type=jnp.float32)
    h1 = jnp.maximum(h1, 0.0)                            # ReLU, (HW, F)

    # conv2 on the VMEM-resident intermediate (K = 9*F).
    pad2[1:H + 1, 1:W + 1, :] = h1.reshape(H, W, F)
    for j, (dy, dx) in enumerate(_TAPS):
        col2[:, j * F:(j + 1) * F] = (
            pad2[dy:dy + H, dx:dx + W, :].reshape(HW, F).astype(col2.dtype))
    h2 = jnp.dot(col2[...], w2_ref[...], preferred_element_type=jnp.float32)
    h2 = jnp.maximum(h2, 0.0)                            # ReLU, (HW, C)

    # torch `.view(input_shape)`: back to the (S, C) layout, still in VMEM.
    # (transpose -> row-major reinterpret; the reshape is a no-op when C==H*W)
    ff = jnp.transpose(h2).reshape(S, C)

    # residual + LayerNorm2
    z = ff + res_ref[0]
    mean = jnp.mean(z, axis=-1, keepdims=True)
    var = jnp.mean((z - mean) ** 2, axis=-1, keepdims=True)
    zn = (z - mean) * lax.rsqrt(var + eps)
    o_ref[0] = (zn * g_ref[...] + b_ref[...]).astype(o_ref.dtype)


def ffn_block(out1, H, W, w1_bf16, w2_bf16, gamma, beta, eps=1e-5):
    B, S, C = out1.shape
    F = w1_bf16.shape[1]
    HW = H * W
    assert S == HW
    # Free row-major view: exactly torch's `.view(B, C, H, W)` (flattened HW).
    out1_cs = out1.reshape(B, C, HW)
    kern = functools.partial(_ffn_ln_kernel, H=H, W=W, eps=eps)
    flops = B * (2 * HW * 9 * C * F + 2 * HW * 9 * F * C)
    cost = pl.CostEstimate(
        flops=flops,
        transcendentals=B * S,
        bytes_accessed=12 * B * S * C + 2 * 9 * C * F + 2 * 9 * F * C)
    # TODO(synk): for production H/W/C on v7x, add an H-row grid axis with a
    # 1-row halo so pad/col scratch fits the 64 MiB VMEM.
    return pl.pallas_call(
        kern,
        out_shape=jax.ShapeDtypeStruct((B, S, C), out1.dtype),
        grid=(B,),
        in_specs=[pl.BlockSpec((1, C, HW), lambda b: (b, 0, 0)),
                  pl.BlockSpec((1, S, C), lambda b: (b, 0, 0)),
                  pl.BlockSpec((9 * C, F), lambda b: (0, 0)),
                  pl.BlockSpec((9 * F, C), lambda b: (0, 0)),
                  pl.BlockSpec((1, C), lambda b: (0, 0)),
                  pl.BlockSpec((1, C), lambda b: (0, 0))],
        out_specs=pl.BlockSpec((1, S, C), lambda b: (b, 0, 0)),
        scratch_shapes=[pltpu.VMEM((H + 2, W + 2, C), jnp.float32),
                        pltpu.VMEM((H + 2, W + 2, F), jnp.float32),
                        pltpu.VMEM((HW, 9 * C), jnp.bfloat16),
                        pltpu.VMEM((HW, 9 * F), jnp.bfloat16)],
        compiler_params=pltpu.CompilerParams(
            dimension_semantics=("parallel",),
            vmem_limit_bytes=_VMEM_LIMIT),
        cost_estimate=cost,
    )(out1_cs, out1, w1_bf16, w2_bf16, gamma, beta)


# --------------------------- params & module forward -------------------------

def init_params(key, input_size, filter_size, head_num):
    del head_num
    C = input_size
    ks = jax.random.split(key, 10)

    def w(k, shape, scale=0.05):
        return (scale * jax.random.normal(k, shape)).astype(jnp.float32)

    return {
        # Linear weights stored already transposed: (in, out)
        "wq": w(ks[0], (C, C)), "bq": w(ks[1], (1, C)),
        "wk": w(ks[2], (C, C)), "bk": w(ks[3], (1, C)),
        "wv": w(ks[4], (C, C)), "bv": w(ks[5], (1, C)),
        "wo": w(ks[6], (C, C)), "bo": w(ks[7], (1, C)),
        "ln1_g": jnp.ones((1, C), jnp.float32),
        "ln1_b": jnp.zeros((1, C), jnp.float32),
        "ln2_g": jnp.ones((1, C), jnp.float32),
        "ln2_b": jnp.zeros((1, C), jnp.float32),
        # Conv weights stored PyTorch-style: (Cout, Cin, 3, 3), bias=False
        "conv1": w(ks[8], (filter_size, C, 3, 3)),
        "conv2": w(ks[9], (C, filter_size, 3, 3)),
    }


def prepare_params(params):
    """Hoist per-call weight layout / precision work out of the forward."""
    C = params["wq"].shape[0]
    F = params["conv1"].shape[0]
    wqkv = jnp.concatenate([params["wq"], params["wk"], params["wv"]], axis=1)
    bqkv = jnp.concatenate([params["bq"], params["bk"], params["bv"]], axis=1)
    w1 = jnp.transpose(params["conv1"], (2, 3, 1, 0)).reshape(9 * C, F)
    w2 = jnp.transpose(params["conv2"], (2, 3, 1, 0)).reshape(9 * F, C)
    return {
        "wqkv_bf16": wqkv.astype(jnp.bfloat16), "bqkv": bqkv,
        "wo_bf16": params["wo"].astype(jnp.bfloat16), "bo": params["bo"],
        "ln1_g": params["ln1_g"], "ln1_b": params["ln1_b"],
        "ln2_g": params["ln2_g"], "ln2_b": params["ln2_b"],
        "w1_bf16": w1.astype(jnp.bfloat16),
        "w2_bf16": w2.astype(jnp.bfloat16),
    }


def transformer_encoder_layer(x, shape, prepared, head_num):
    B, S, C = x.shape
    _, C2, H, W = shape
    assert C2 == C and S == H * W
    inv_temp = 1.0 / float(C ** 0.5)          # SATRN temperature sqrt(h*d)

    # MultiHeadAttention + residual + LayerNorm1 (x kept f32 for the residual;
    # the kernel casts its matmul operand to bf16 once per block).
    out1 = attention_block(x, prepared["wqkv_bf16"], prepared["bqkv"],
                           prepared["wo_bf16"], prepared["bo"],
                           prepared["ln1_g"], prepared["ln1_b"],
                           head_num, inv_temp)

    # LocalityAwareFeedforward + residual + LayerNorm2 (torch `.view()` layout
    # handled inside the kernel — no XLA transposes, no ff HBM round trip).
    out2 = ffn_block(out1, H, W, prepared["w1_bf16"], prepared["w2_bf16"],
                     prepared["ln2_g"], prepared["ln2_b"])
    return out2


# ------------------------------ pure-JAX reference ---------------------------

def reference(x, shape, params, head_num):
    B, S, C = x.shape
    hd = C // head_num
    temp = (head_num * hd) ** 0.5

    def lin(z, w, b):
        return z @ w + b

    def ln(z, g, b):
        m = z.mean(-1, keepdims=True)
        var = ((z - m) ** 2).mean(-1, keepdims=True)
        return (z - m) / jnp.sqrt(var + 1e-5) * g + b

    q = lin(x, params["wq"], params["bq"]).reshape(B, S, head_num, hd).transpose(0, 2, 1, 3)
    k = lin(x, params["wk"], params["bk"]).reshape(B, S, head_num, hd).transpose(0, 2, 1, 3)
    v = lin(x, params["wv"], params["bv"]).reshape(B, S, head_num, hd).transpose(0, 2, 1, 3)
    s = jnp.einsum("bhqd,bhkd->bhqk", q, k) / temp
    p = jax.nn.softmax(s, axis=-1)
    o = jnp.einsum("bhqk,bhkd->bhqd", p, v).transpose(0, 2, 1, 3).reshape(B, S, C)
    o = lin(o, params["wo"], params["bo"])
    out1 = ln(o + x, params["ln1_g"], params["ln1_b"])

    xc = out1.reshape(shape)
    h = jax.lax.conv_general_dilated(xc, params["conv1"], (1, 1), ((1, 1), (1, 1)),
                                     dimension_numbers=("NCHW", "OIHW", "NCHW"))
    h = jnp.maximum(h, 0.0)
    h = jax.lax.conv_general_dilated(h, params["conv2"], (1, 1), ((1, 1), (1, 1)),
                                     dimension_numbers=("NCHW", "OIHW", "NCHW"))
    h = jnp.maximum(h, 0.0)
    ff = h.reshape(B, S, C)
    out2 = ln(ff + out1, params["ln2_g"], params["ln2_b"])
    return out2


# ----------------------------------- main ------------------------------------

if __name__ == "__main__":
    B, C, H, W = 2, 32, 4, 8            # input_size = 32
    S = H * W                            # seq len = H*W
    head_num = 4
    filter_size = 64

    key = jax.random.PRNGKey(0)
    kp, kx = jax.random.split(key)
    params = init_params(kp, C, filter_size, head_num)
    prepared = prepare_params(params)
    x = jax.random.normal(kx, (B, S, C), dtype=jnp.float32)
    shape = (B, C, H, W)                 # the `shape` argument of forward()

    fwd = jax.jit(transformer_encoder_layer, static_argnums=(1, 3))
    out = jax.block_until_ready(fwd(x, shape, prepared, head_num))

    ref = reference(x, shape, params, head_num)
    # bf16 MXU operands (f32 accumulation) vs the all-f32 reference -> relaxed
    # tolerance.
    np.testing.assert_allclose(np.asarray(out), np.asarray(ref),
                               rtol=2e-2, atol=2e-2)
    print("KERNEL_OK")
</pallas_src>

<mosaic_0001>
module attributes {stable_mosaic.version = 11 : i64} {
  func.func @_attn_ln_kernel(%arg0: i32, %arg1: memref<1x32x32xf32, #tpu.memory_space<vmem>>, %arg2: memref<32x96xbf16, #tpu.memory_space<vmem>>, %arg3: memref<1x96xf32, #tpu.memory_space<vmem>>, %arg4: memref<32x32xbf16, #tpu.memory_space<vmem>>, %arg5: memref<1x32xf32, #tpu.memory_space<vmem>>, %arg6: memref<1x32xf32, #tpu.memory_space<vmem>>, %arg7: memref<1x32xf32, #tpu.memory_space<vmem>>, %arg8: memref<1x32x32xf32, #tpu.memory_space<vmem>>) attributes {dimension_semantics = [#tpu.dimension_semantics<parallel>], iteration_bounds = array<i64: 2>, scalar_prefetch = 0 : i64, scratch_operands = 0 : i64, tpu.core_type = #tpu.core_type<tc>, window_params = [{transform_indices = @transform_0, window_bounds = array<i64: 1, 32, 32>}, {pipeline_mode = #tpu.pipeline_mode<synchronous>, transform_indices = @transform_1, window_bounds = array<i64: 32, 96>}, {pipeline_mode = #tpu.pipeline_mode<synchronous>, transform_indices = @transform_2, window_bounds = array<i64: 1, 96>}, {pipeline_mode = #tpu.pipeline_mode<synchronous>, transform_indices = @transform_3, window_bounds = array<i64: 32, 32>}, {pipeline_mode = #tpu.pipeline_mode<synchronous>, transform_indices = @transform_4, window_bounds = array<i64: 1, 32>}, {pipeline_mode = #tpu.pipeline_mode<synchronous>, transform_indices = @transform_5, window_bounds = array<i64: 1, 32>}, {pipeline_mode = #tpu.pipeline_mode<synchronous>, transform_indices = @transform_6, window_bounds = array<i64: 1, 32>}, {transform_indices = @transform_7, window_bounds = array<i64: 1, 32, 32>}]} {
    %c0 = arith.constant 0 : index
    %c0_0 = arith.constant 0 : index
    %c0_1 = arith.constant 0 : index
    %0 = vector.load %arg1[%c0, %c0_0, %c0_1] : memref<1x32x32xf32, #tpu.memory_space<vmem>>, vector<1x32x32xf32>
    %1 = vector.shape_cast %0 : vector<1x32x32xf32> to vector<32x32xf32>
    %2 = arith.truncf %1 : vector<32x32xf32> to vector<32x32xbf16>
    %c0_2 = arith.constant 0 : index
    %c0_3 = arith.constant 0 : index
    %3 = vector.load %arg2[%c0_2, %c0_3] : memref<32x96xbf16, #tpu.memory_space<vmem>>, vector<32x96xbf16>
    %cst = arith.constant dense<0.000000e+00> : vector<32x96xf32>
    %4 = tpu.matmul %2, %3, %cst {dimension_numbers = #tpu.dot_dimension_numbers<[1], [0], [0], [1], [0, 0, 1, 1], [], []>} : vector<32x32xbf16>, vector<32x96xbf16>, vector<32x96xf32> -> vector<32x96xf32>
    %c0_4 = arith.constant 0 : index
    %c0_5 = arith.constant 0 : index
    %5 = vector.load %arg3[%c0_4, %c0_5] : memref<1x96xf32, #tpu.memory_space<vmem>>, vector<1x96xf32>
    %6 = vector.broadcast %5 : vector<1x96xf32> to vector<32x96xf32>
    %7 = arith.addf %4, %6 : vector<32x96xf32>
    %8 = vector.extract_strided_slice %7 {offsets = [0, 0], sizes = [32, 8], strides = [1, 1]} : vector<32x96xf32> to vector<32x8xf32>
    %9 = arith.truncf %8 : vector<32x8xf32> to vector<32x8xbf16>
    %10 = vector.extract_strided_slice %7 {offsets = [0, 32], sizes = [32, 8], strides = [1, 1]} : vector<32x96xf32> to vector<32x8xf32>
    %11 = arith.truncf %10 : vector<32x8xf32> to vector<32x8xbf16>
    %12 = vector.extract_strided_slice %7 {offsets = [0, 64], sizes = [32, 8], strides = [1, 1]} : vector<32x96xf32> to vector<32x8xf32>
    %13 = arith.truncf %12 : vector<32x8xf32> to vector<32x8xbf16>
    %cst_6 = arith.constant dense<0.000000e+00> : vector<32x32xf32>
    %14 = tpu.matmul %9, %11, %cst_6 {dimension_numbers = #tpu.dot_dimension_numbers<[1], [1], [0], [0], [0, 0, 1, 0], [], []>} : vector<32x8xbf16>, vector<32x8xbf16>, vector<32x32xf32> -> vector<32x32xf32>
    %cst_7 = arith.constant 0.176776692 : f32
    %15 = vector.broadcast %cst_7 : f32 to vector<32x32xf32>
    %16 = arith.mulf %14, %15 : vector<32x32xf32>
    %cst_8 = arith.constant dense<0xFF800000> : vector<32xf32>
    %17 = vector.multi_reduction <maximumf>, %16, %cst_8 [1] : vector<32x32xf32> to vector<32xf32>
    %18 = vector.shape_cast %17 : vector<32xf32> to vector<32x1xf32>
    %19 = vector.broadcast %18 : vector<32x1xf32> to vector<32x32xf32>
    %20 = arith.subf %16, %19 : vector<32x32xf32>
    %21 = math.exp %20 : vector<32x32xf32>
    %cst_9 = arith.constant dense<0.000000e+00> : vector<32xf32>
    %22 = vector.multi_reduction <add>, %21, %cst_9 [1] : vector<32x32xf32> to vector<32xf32>
    %23 = vector.shape_cast %22 : vector<32xf32> to vector<32x1xf32>
    %24 = tpu.reciprocal %23 {approx = true} : vector<32x1xf32> -> vector<32x1xf32>
    %25 = vector.broadcast %24 : vector<32x1xf32> to vector<32x32xf32>
    %26 = arith.mulf %21, %25 : vector<32x32xf32>
    %27 = arith.truncf %26 : vector<32x32xf32> to vector<32x32xbf16>
    %cst_10 = arith.constant dense<0.000000e+00> : vector<32x8xf32>
    %28 = tpu.matmul %27, %13, %cst_10 {dimension_numbers = #tpu.dot_dimension_numbers<[1], [0], [0], [1], [0, 0, 1, 1], [], []>} : vector<32x32xbf16>, vector<32x8xbf16>, vector<32x8xf32> -> vector<32x8xf32>
    %29 = vector.extract_strided_slice %7 {offsets = [0, 8], sizes = [32, 8], strides = [1, 1]} : vector<32x96xf32> to vector<32x8xf32>
    %30 = arith.truncf %29 : vector<32x8xf32> to vector<32x8xbf16>
    %31 = vector.extract_strided_slice %7 {offsets = [0, 40], sizes = [32, 8], strides = [1, 1]} : vector<32x96xf32> to vector<32x8xf32>
    %32 = arith.truncf %31 : vector<32x8xf32> to vector<32x8xbf16>
    %33 = vector.extract_strided_slice %7 {offsets = [0, 72], sizes = [32, 8], strides = [1, 1]} : vector<32x96xf32> to vector<32x8xf32>
    %34 = arith.truncf %33 : vector<32x8xf32> to vector<32x8xbf16>
    %cst_11 = arith.constant dense<0.000000e+00> : vector<32x32xf32>
    %35 = tpu.matmul %30, %32, %cst_11 {dimension_numbers = #tpu.dot_dimension_numbers<[1], [1], [0], [0], [0, 0, 1, 0], [], []>} : vector<32x8xbf16>, vector<32x8xbf16>, vector<32x32xf32> -> vector<32x32xf32>
    %cst_12 = arith.constant 0.176776692 : f32
    %36 = vector.broadcast %cst_12 : f32 to vector<32x32xf32>
    %37 = arith.mulf %35, %36 : vector<32x32xf32>
    %cst_13 = arith.constant dense<0xFF800000> : vector<32xf32>
    %38 = vector.multi_reduction <maximumf>, %37, %cst_13 [1] : vector<32x32xf32> to vector<32xf32>
    %39 = vector.shape_cast %38 : vector<32xf32> to vector<32x1xf32>
    %40 = vector.broadcast %39 : vector<32x1xf32> to vector<32x32xf32>
    %41 = arith.subf %37, %40 : vector<32x32xf32>
    %42 = math.exp %41 : vector<32x32xf32>
    %cst_14 = arith.constant dense<0.000000e+00> : vector<32xf32>
    %43 = vector.multi_reduction <add>, %42, %cst_14 [1] : vector<32x32xf32> to vector<32xf32>
    %44 = vector.shape_cast %43 : vector<32xf32> to vector<32x1xf32>
    %45 = tpu.reciprocal %44 {approx = true} : vector<32x1xf32> -> vector<32x1xf32>
    %46 = vector.broadcast %45 : vector<32x1xf32> to vector<32x32xf32>
    %47 = arith.mulf %42, %46 : vector<32x32xf32>
    %48 = arith.truncf %47 : vector<32x32xf32> to vector<32x32xbf16>
    %cst_15 = arith.constant dense<0.000000e+00> : vector<32x8xf32>
    %49 = tpu.matmul %48, %34, %cst_15 {dimension_numbers = #tpu.dot_dimension_numbers<[1], [0], [0], [1], [0, 0, 1, 1], [], []>} : vector<32x32xbf16>, vector<32x8xbf16>, vector<32x8xf32> -> vector<32x8xf32>
    %50 = vector.extract_strided_slice %7 {offsets = [0, 16], sizes = [32, 8], strides = [1, 1]} : vector<32x96xf32> to vector<32x8xf32>
    %51 = arith.truncf %50 : vector<32x8xf32> to vector<32x8xbf16>
    %52 = vector.extract_strided_slice %7 {offsets = [0, 48], sizes = [32, 8], strides = [1, 1]} : vector<32x96xf32> to vector<32x8xf32>
    %53 = arith.truncf %52 : vector<32x8xf32> to vector<32x8xbf16>
    %54 = vector.extract_strided_slice %7 {offsets = [0, 80], sizes = [32, 8], strides = [1, 1]} : vector<32x96xf32> to vector<32x8xf32>
    %55 = arith.truncf %54 : vector<32x8xf32> to vector<32x8xbf16>
    %cst_16 = arith.constant dense<0.000000e+00> : vector<32x32xf32>
    %56 = tpu.matmul %51, %53, %cst_16 {dimension_numbers = #tpu.dot_dimension_numbers<[1], [1], [0], [0], [0, 0, 1, 0], [], []>} : vector<32x8xbf16>, vector<32x8xbf16>, vector<32x32xf32> -> vector<32x32xf32>
    %cst_17 = arith.constant 0.176776692 : f32
    %57 = vector.broadcast %cst_17 : f32 to vector<32x32xf32>
    %58 = arith.mulf %56, %57 : vector<32x32xf32>
    %cst_18 = arith.constant dense<0xFF800000> : vector<32xf32>
    %59 = vector.multi_reduction <maximumf>, %58, %cst_18 [1] : vector<32x32xf32> to vector<32xf32>
    %60 = vector.shape_cast %59 : vector<32xf32> to vector<32x1xf32>
    %61 = vector.broadcast %60 : vector<32x1xf32> to vector<32x32xf32>
    %62 = arith.subf %58, %61 : vector<32x32xf32>
    %63 = math.exp %62 : vector<32x32xf32>
    %cst_19 = arith.constant dense<0.000000e+00> : vector<32xf32>
    %64 = vector.multi_reduction <add>, %63, %cst_19 [1] : vector<32x32xf32> to vector<32xf32>
    %65 = vector.shape_cast %64 : vector<32xf32> to vector<32x1xf32>
    %66 = tpu.reciprocal %65 {approx = true} : vector<32x1xf32> -> vector<32x1xf32>
    %67 = vector.broadcast %66 : vector<32x1xf32> to vector<32x32xf32>
    %68 = arith.mulf %63, %67 : vector<32x32xf32>
    %69 = arith.truncf %68 : vector<32x32xf32> to vector<32x32xbf16>
    %cst_20 = arith.constant dense<0.000000e+00> : vector<32x8xf32>
    %70 = tpu.matmul %69, %55, %cst_20 {dimension_numbers = #tpu.dot_dimension_numbers<[1], [0], [0], [1], [0, 0, 1, 1], [], []>} : vector<32x32xbf16>, vector<32x8xbf16>, vector<32x8xf32> -> vector<32x8xf32>
    %71 = vector.extract_strided_slice %7 {offsets = [0, 24], sizes = [32, 8], strides = [1, 1]} : vector<32x96xf32> to vector<32x8xf32>
    %72 = arith.truncf %71 : vector<32x8xf32> to vector<32x8xbf16>
    %73 = vector.extract_strided_slice %7 {offsets = [0, 56], sizes = [32, 8], strides = [1, 1]} : vector<32x96xf32> to vector<32x8xf32>
    %74 = arith.truncf %73 : vector<32x8xf32> to vector<32x8xbf16>
    %75 = vector.extract_strided_slice %7 {offsets = [0, 88], sizes = [32, 8], strides = [1, 1]} : vector<32x96xf32> to vector<32x8xf32>
    %76 = arith.truncf %75 : vector<32x8xf32> to vector<32x8xbf16>
    %cst_21 = arith.constant dense<0.000000e+00> : vector<32x32xf32>
    %77 = tpu.matmul %72, %74, %cst_21 {dimension_numbers = #tpu.dot_dimension_numbers<[1], [1], [0], [0], [0, 0, 1, 0], [], []>} : vector<32x8xbf16>, vector<32x8xbf16>, vector<32x32xf32> -> vector<32x32xf32>
    %cst_22 = arith.constant 0.176776692 : f32
    %78 = vector.broadcast %cst_22 : f32 to vector<32x32xf32>
    %79 = arith.mulf %77, %78 : vector<32x32xf32>
    %cst_23 = arith.constant dense<0xFF800000> : vector<32xf32>
    %80 = vector.multi_reduction <maximumf>, %79, %cst_23 [1] : vector<32x32xf32> to vector<32xf32>
    %81 = vector.shape_cast %80 : vector<32xf32> to vector<32x1xf32>
    %82 = vector.broadcast %81 : vector<32x1xf32> to vector<32x32xf32>
    %83 = arith.subf %79, %82 : vector<32x32xf32>
    %84 = math.exp %83 : vector<32x32xf32>
    %cst_24 = arith.constant dense<0.000000e+00> : vector<32xf32>
    %85 = vector.multi_reduction <add>, %84, %cst_24 [1] : vector<32x32xf32> to vector<32xf32>
    %86 = vector.shape_cast %85 : vector<32xf32> to vector<32x1xf32>
    %87 = tpu.reciprocal %86 {approx = true} : vector<32x1xf32> -> vector<32x1xf32>
    %88 = vector.broadcast %87 : vector<32x1xf32> to vector<32x32xf32>
    %89 = arith.mulf %84, %88 : vector<32x32xf32>
    %90 = arith.truncf %89 : vector<32x32xf32> to vector<32x32xbf16>
    %cst_25 = arith.constant dense<0.000000e+00> : vector<32x8xf32>
    %91 = tpu.matmul %90, %76, %cst_25 {dimension_numbers = #tpu.dot_dimension_numbers<[1], [0], [0], [1], [0, 0, 1, 1], [], []>} : vector<32x32xbf16>, vector<32x8xbf16>, vector<32x8xf32> -> vector<32x8xf32>
    %92 = tpu.concatenate %28, %49, %70, %91 in 1 : vector<32x8xf32>, vector<32x8xf32>, vector<32x8xf32>, vector<32x8xf32> -> vector<32x32xf32>
    %93 = arith.truncf %92 : vector<32x32xf32> to vector<32x32xbf16>
    %c0_26 = arith.constant 0 : index
    %c0_27 = arith.constant 0 : index
    %94 = vector.load %arg4[%c0_26, %c0_27] : memref<32x32xbf16, #tpu.memory_space<vmem>>, vector<32x32xbf16>
    %cst_28 = arith.constant dense<0.000000e+00> : vector<32x32xf32>
    %95 = tpu.matmul %93, %94, %cst_28 {dimension_numbers = #tpu.dot_dimension_numbers<[1], [0], [0], [1], [0, 0, 1, 1], [], []>} : vector<32x32xbf16>, vector<32x32xbf16>, vector<32x32xf32> -> vector<32x32xf32>
    %c0_29 = arith.constant 0 : index
    %c0_30 = arith.constant 0 : index
    %96 = vector.load %arg5[%c0_29, %c0_30] : memref<1x32xf32, #tpu.memory_space<vmem>>, vector<1x32xf32>
    %97 = vector.broadcast %96 : vector<1x32xf32> to vector<32x32xf32>
    %98 = arith.addf %95, %97 : vector<32x32xf32>
    %99 = arith.addf %98, %1 : vector<32x32xf32>
    %cst_31 = arith.constant dense<0.000000e+00> : vector<32xf32>
    %100 = vector.multi_reduction <add>, %99, %cst_31 [1] : vector<32x32xf32> to vector<32xf32>
    %101 = vector.shape_cast %100 : vector<32xf32> to vector<32x1xf32>
    %cst_32 = arith.constant 3.200000e+01 : f32
    %102 = vector.broadcast %cst_32 : f32 to vector<32x1xf32>
    %103 = arith.divf %101, %102 : vector<32x1xf32>
    %104 = vector.broadcast %103 : vector<32x1xf32> to vector<32x32xf32>
    %105 = arith.subf %99, %104 : vector<32x32xf32>
    %106 = arith.mulf %105, %105 : vector<32x32xf32>
    %cst_33 = arith.constant dense<0.000000e+00> : vector<32xf32>
    %107 = vector.multi_reduction <add>, %106, %cst_33 [1] : vector<32x32xf32> to vector<32xf32>
    %108 = vector.shape_cast %107 : vector<32xf32> to vector<32x1xf32>
    %cst_34 = arith.constant 3.200000e+01 : f32
    %109 = vector.broadcast %cst_34 : f32 to vector<32x1xf32>
    %110 = arith.divf %108, %109 : vector<32x1xf32>
    %111 = vector.broadcast %103 : vector<32x1xf32> to vector<32x32xf32>
    %112 = arith.subf %99, %111 : vector<32x32xf32>
    %cst_35 = arith.constant 9.99999974E-6 : f32
    %113 = vector.broadcast %cst_35 : f32 to vector<32x1xf32>
    %114 = arith.addf %110, %113 : vector<32x1xf32>
    %115 = math.rsqrt %114 : vector<32x1xf32>
    %116 = vector.broadcast %115 : vector<32x1xf32> to vector<32x32xf32>
    %117 = arith.mulf %112, %116 : vector<32x32xf32>
    %c0_36 = arith.constant 0 : index
    %c0_37 = arith.constant 0 : index
    %118 = vector.load %arg6[%c0_36, %c0_37] : memref<1x32xf32, #tpu.memory_space<vmem>>, vector<1x32xf32>
    %119 = vector.broadcast %118 : vector<1x32xf32> to vector<32x32xf32>
    %120 = arith.mulf %117, %119 : vector<32x32xf32>
    %c0_38 = arith.constant 0 : index
    %c0_39 = arith.constant 0 : index
    %121 = vector.load %arg7[%c0_38, %c0_39] : memref<1x32xf32, #tpu.memory_space<vmem>>, vector<1x32xf32>
    %122 = vector.broadcast %121 : vector<1x32xf32> to vector<32x32xf32>
    %123 = arith.addf %120, %122 : vector<32x32xf32>
    %c0_40 = arith.constant 0 : index
    %c0_41 = arith.constant 0 : index
    %c0_42 = arith.constant 0 : index
    %124 = vector.load %arg8[%c0_40, %c0_41, %c0_42] : memref<1x32x32xf32, #tpu.memory_space<vmem>>, vector<1x32x32xf32>
    %125 = vector.shape_cast %124 : vector<1x32x32xf32> to vector<32x32xf32>
    %126 = vector.shape_cast %123 : vector<32x32xf32> to vector<1x32x32xf32>
    tpu.vector_store %arg8[%c0_40, %c0_41, %c0_42], %126 {strides = array<i32>} : memref<1x32x32xf32, #tpu.memory_space<vmem>>, vector<1x32x32xf32>,
    return
  }
  func.func @transform_0(%arg0: i32) -> (i32, i32, i32) {
    %c0_i32 = arith.constant 0 : i32
    %c0_i32_0 = arith.constant 0 : i32
    %c0_i32_1 = arith.constant 0 : i32
    return %arg0, %c0_i32, %c0_i32_0 : i32, i32, i32
  }
  func.func @transform_1(%arg0: i32) -> (i32, i32) {
    %c0_i32 = arith.constant 0 : i32
    %c0_i32_0 = arith.constant 0 : i32
    %c0_i32_1 = arith.constant 0 : i32
    return %c0_i32, %c0_i32_0 : i32, i32
  }
  func.func @transform_2(%arg0: i32) -> (i32, i32) {
    %c0_i32 = arith.constant 0 : i32
    %c0_i32_0 = arith.constant 0 : i32
    %c0_i32_1 = arith.constant 0 : i32
    return %c0_i32, %c0_i32_0 : i32, i32
  }
  func.func @transform_3(%arg0: i32) -> (i32, i32) {
    %c0_i32 = arith.constant 0 : i32
    %c0_i32_0 = arith.constant 0 : i32
    %c0_i32_1 = arith.constant 0 : i32
    return %c0_i32, %c0_i32_0 : i32, i32
  }
  func.func @transform_4(%arg0: i32) -> (i32, i32) {
    %c0_i32 = arith.constant 0 : i32
    %c0_i32_0 = arith.constant 0 : i32
    %c0_i32_1 = arith.constant 0 : i32
    return %c0_i32, %c0_i32_0 : i32, i32
  }
  func.func @transform_5(%arg0: i32) -> (i32, i32) {
    %c0_i32 = arith.constant 0 : i32
    %c0_i32_0 = arith.constant 0 : i32
    %c0_i32_1 = arith.constant 0 : i32
    return %c0_i32, %c0_i32_0 : i32, i32
  }
  func.func @transform_6(%arg0: i32) -> (i32, i32) {
    %c0_i32 = arith.constant 0 : i32
    %c0_i32_0 = arith.constant 0 : i32
    %c0_i32_1 = arith.constant 0 : i32
    return %c0_i32, %c0_i32_0 : i32, i32
  }
  func.func @transform_7(%arg0: i32) -> (i32, i32, i32) {
    %c0_i32 = arith.constant 0 : i32
    %c0_i32_0 = arith.constant 0 : i32
    %c0_i32_1 = arith.constant 0 : i32
    return %arg0, %c0_i32, %c0_i32_0 : i32, i32, i32
  }
}

module attributes {stable_mosaic.version = 11 : i64} {
  func.func @_ffn_ln_kernel(%arg0: i32, %arg1: memref<1x32x32xf32, #tpu.memory_space<vmem>>, %arg2: memref<1x32x32xf32, #tpu.memory_space<vmem>>, %arg3: memref<288x64xbf16, #tpu.memory_space<vmem>>, %arg4: memref<576x32xbf16, #tpu.memory_space<vmem>>, %arg5: memref<1x32xf32, #tpu.memory_space<vmem>>, %arg6: memref<1x32xf32, #tpu.memory_space<vmem>>, %arg7: memref<1x32x32xf32, #tpu.memory_space<vmem>>, %arg8: memref<6x10x32xf32, #tpu.memory_space<vmem>>, %arg9: memref<6x10x64xf32, #tpu.memory_space<vmem>>, %arg10: memref<32x288xbf16, #tpu.memory_space<vmem>>, %arg11: memref<32x576xbf16, #tpu.memory_space<vmem>>) attributes {dimension_semantics = [#tpu.dimension_semantics<parallel>], iteration_bounds = array<i64: 2>, scalar_prefetch = 0 : i64, scratch_operands = 4 : i64, tpu.core_type = #tpu.core_type<tc>, window_params = [{transform_indices = @transform_0, window_bounds = array<i64: 1, 32, 32>}, {transform_indices = @transform_1, window_bounds = array<i64: 1, 32, 32>}, {pipeline_mode = #tpu.pipeline_mode<synchronous>, transform_indices = @transform_2, window_bounds = array<i64: 288, 64>}, {pipeline_mode = #tpu.pipeline_mode<synchronous>, transform_indices = @transform_3, window_bounds = array<i64: 576, 32>}, {pipeline_mode = #tpu.pipeline_mode<synchronous>, transform_indices = @transform_4, window_bounds = array<i64: 1, 32>}, {pipeline_mode = #tpu.pipeline_mode<synchronous>, transform_indices = @transform_5, window_bounds = array<i64: 1, 32>}, {transform_indices = @transform_6, window_bounds = array<i64: 1, 32, 32>}]} {
    %cst = arith.constant 0.000000e+00 : f32
    %0 = vector.broadcast %cst : f32 to vector<1x10x32xf32>
    %cst_0 = arith.constant 0.000000e+00 : f32
    %1 = vector.broadcast %cst_0 : f32 to vector<1x10x64xf32>
    %c0 = arith.constant 0 : index
    %c0_1 = arith.constant 0 : index
    %c0_2 = arith.constant 0 : index
    %2 = vector.load %arg8[%c0, %c0_1, %c0_2] : memref<6x10x32xf32, #tpu.memory_space<vmem>>, vector<1x10x32xf32>
    tpu.vector_store %arg8[%c0, %c0_1, %c0_2], %0 {strides = array<i32>} : memref<6x10x32xf32, #tpu.memory_space<vmem>>, vector<1x10x32xf32>,
    %c5 = arith.constant 5 : index
    %c0_3 = arith.constant 0 : index
    %c0_4 = arith.constant 0 : index
    %3 = vector.load %arg8[%c5, %c0_3, %c0_4] : memref<6x10x32xf32, #tpu.memory_space<vmem>>, vector<1x10x32xf32>
    tpu.vector_store %arg8[%c5, %c0_3, %c0_4], %0 {strides = array<i32>} : memref<6x10x32xf32, #tpu.memory_space<vmem>>, vector<1x10x32xf32>,
    %cst_5 = arith.constant 0.000000e+00 : f32
    %4 = vector.broadcast %cst_5 : f32 to vector<6x1x32xf32>
    %c0_6 = arith.constant 0 : index
    %c0_7 = arith.constant 0 : index
    %c0_8 = arith.constant 0 : index
    %5 = vector.load %arg8[%c0_6, %c0_7, %c0_8] : memref<6x10x32xf32, #tpu.memory_space<vmem>>, vector<6x1x32xf32>
    tpu.vector_store %arg8[%c0_6, %c0_7, %c0_8], %4 {strides = array<i32>} : memref<6x10x32xf32, #tpu.memory_space<vmem>>, vector<6x1x32xf32>,
    %cst_9 = arith.constant 0.000000e+00 : f32
    %6 = vector.broadcast %cst_9 : f32 to vector<6x1x32xf32>
    %c0_10 = arith.constant 0 : index
    %c9 = arith.constant 9 : index
    %c0_11 = arith.constant 0 : index
    %7 = vector.load %arg8[%c0_10, %c9, %c0_11] : memref<6x10x32xf32, #tpu.memory_space<vmem>>, vector<6x1x32xf32>
    tpu.vector_store %arg8[%c0_10, %c9, %c0_11], %6 {strides = array<i32>} : memref<6x10x32xf32, #tpu.memory_space<vmem>>, vector<6x1x32xf32>,
    %c0_12 = arith.constant 0 : index
    %c0_13 = arith.constant 0 : index
    %c0_14 = arith.constant 0 : index
    %8 = vector.load %arg9[%c0_12, %c0_13, %c0_14] : memref<6x10x64xf32, #tpu.memory_space<vmem>>, vector<1x10x64xf32>
    tpu.vector_store %arg9[%c0_12, %c0_13, %c0_14], %1 {strides = array<i32>} : memref<6x10x64xf32, #tpu.memory_space<vmem>>, vector<1x10x64xf32>,
    %c5_15 = arith.constant 5 : index
    %c0_16 = arith.constant 0 : index
    %c0_17 = arith.constant 0 : index
    %9 = vector.load %arg9[%c5_15, %c0_16, %c0_17] : memref<6x10x64xf32, #tpu.memory_space<vmem>>, vector<1x10x64xf32>
    tpu.vector_store %arg9[%c5_15, %c0_16, %c0_17], %1 {strides = array<i32>} : memref<6x10x64xf32, #tpu.memory_space<vmem>>, vector<1x10x64xf32>,
    %cst_18 = arith.constant 0.000000e+00 : f32
    %10 = vector.broadcast %cst_18 : f32 to vector<6x1x64xf32>
    %c0_19 = arith.constant 0 : index
    %c0_20 = arith.constant 0 : index
    %c0_21 = arith.constant 0 : index
    %11 = vector.load %arg9[%c0_19, %c0_20, %c0_21] : memref<6x10x64xf32, #tpu.memory_space<vmem>>, vector<6x1x64xf32>
    tpu.vector_store %arg9[%c0_19, %c0_20, %c0_21], %10 {strides = array<i32>} : memref<6x10x64xf32, #tpu.memory_space<vmem>>, vector<6x1x64xf32>,
    %cst_22 = arith.constant 0.000000e+00 : f32
    %12 = vector.broadcast %cst_22 : f32 to vector<6x1x64xf32>
    %c0_23 = arith.constant 0 : index
    %c9_24 = arith.constant 9 : index
    %c0_25 = arith.constant 0 : index
    %13 = vector.load %arg9[%c0_23, %c9_24, %c0_25] : memref<6x10x64xf32, #tpu.memory_space<vmem>>, vector<6x1x64xf32>
    tpu.vector_store %arg9[%c0_23, %c9_24, %c0_25], %12 {strides = array<i32>} : memref<6x10x64xf32, #tpu.memory_space<vmem>>, vector<6x1x64xf32>,
    %c0_26 = arith.constant 0 : index
    %c0_27 = arith.constant 0 : index
    %c0_28 = arith.constant 0 : index
    %14 = vector.load %arg1[%c0_26, %c0_27, %c0_28] : memref<1x32x32xf32, #tpu.memory_space<vmem>>, vector<1x32x32xf32>
    %15 = vector.shape_cast %14 : vector<1x32x32xf32> to vector<32x32xf32>
    %16 = tpu.transpose %15, [1, 0] : vector<32x32xf32> -> vector<32x32xf32>
    %17 = vector.shape_cast %16 : vector<32x32xf32> to vector<4x8x32xf32>
    %c1 = arith.constant 1 : index
    %c1_29 = arith.constant 1 : index
    %c0_30 = arith.constant 0 : index
    %18 = vector.load %arg8[%c1, %c1_29, %c0_30] : memref<6x10x32xf32, #tpu.memory_space<vmem>>, vector<4x8x32xf32>
    tpu.vector_store %arg8[%c1, %c1_29, %c0_30], %17 {strides = array<i32>} : memref<6x10x32xf32, #tpu.memory_space<vmem>>, vector<4x8x32xf32>,
    %c0_31 = arith.constant 0 : index
    %c0_32 = arith.constant 0 : index
    %c0_33 = arith.constant 0 : index
    %19 = vector.load %arg8[%c0_31, %c0_32, %c0_33] : memref<6x10x32xf32, #tpu.memory_space<vmem>>, vector<4x8x32xf32>
    %20 = vector.shape_cast %19 : vector<4x8x32xf32> to vector<32x32xf32>
    %21 = arith.truncf %20 : vector<32x32xf32> to vector<32x32xbf16>
    %c0_34 = arith.constant 0 : index
    %c0_35 = arith.constant 0 : index
    %22 = vector.load %arg10[%c0_34, %c0_35] : memref<32x288xbf16, #tpu.memory_space<vmem>>, vector<32x32xbf16>
    tpu.vector_store %arg10[%c0_34, %c0_35], %21 {strides = array<i32>} : memref<32x288xbf16, #tpu.memory_space<vmem>>, vector<32x32xbf16>,
    %c0_36 = arith.constant 0 : index
    %c1_37 = arith.constant 1 : index
    %c0_38 = arith.constant 0 : index
    %23 = vector.load %arg8[%c0_36, %c1_37, %c0_38] : memref<6x10x32xf32, #tpu.memory_space<vmem>>, vector<4x8x32xf32>
    %24 = vector.shape_cast %23 : vector<4x8x32xf32> to vector<32x32xf32>
    %25 = arith.truncf %24 : vector<32x32xf32> to vector<32x32xbf16>
    %c0_39 = arith.constant 0 : index
    %c32 = arith.constant 32 : index
    %26 = vector.load %arg10[%c0_39, %c32] : memref<32x288xbf16, #tpu.memory_space<vmem>>, vector<32x32xbf16>
    tpu.vector_store %arg10[%c0_39, %c32], %25 {strides = array<i32>} : memref<32x288xbf16, #tpu.memory_space<vmem>>, vector<32x32xbf16>,
    %c0_40 = arith.constant 0 : index
    %c2 = arith.constant 2 : index
    %c0_41 = arith.constant 0 : index
    %27 = vector.load %arg8[%c0_40, %c2, %c0_41] : memref<6x10x32xf32, #tpu.memory_space<vmem>>, vector<4x8x32xf32>
    %28 = vector.shape_cast %27 : vector<4x8x32xf32> to vector<32x32xf32>
    %29 = arith.truncf %28 : vector<32x32xf32> to vector<32x32xbf16>
    %c0_42 = arith.constant 0 : index
    %c64 = arith.constant 64 : index
    %30 = vector.load %arg10[%c0_42, %c64] : memref<32x288xbf16, #tpu.memory_space<vmem>>, vector<32x32xbf16>
    tpu.vector_store %arg10[%c0_42, %c64], %29 {strides = array<i32>} : memref<32x288xbf16, #tpu.memory_space<vmem>>, vector<32x32xbf16>,
    %c1_43 = arith.constant 1 : index
    %c0_44 = arith.constant 0 : index
    %c0_45 = arith.constant 0 : index
    %31 = vector.load %arg8[%c1_43, %c0_44, %c0_45] : memref<6x10x32xf32, #tpu.memory_space<vmem>>, vector<4x8x32xf32>
    %32 = vector.shape_cast %31 : vector<4x8x32xf32> to vector<32x32xf32>
    %33 = arith.truncf %32 : vector<32x32xf32> to vector<32x32xbf16>
    %c0_46 = arith.constant 0 : index
    %c96 = arith.constant 96 : index
    %34 = vector.load %arg10[%c0_46, %c96] : memref<32x288xbf16, #tpu.memory_space<vmem>>, vector<32x32xbf16>
    tpu.vector_store %arg10[%c0_46, %c96], %33 {strides = array<i32>} : memref<32x288xbf16, #tpu.memory_space<vmem>>, vector<32x32xbf16>,
    %c1_47 = arith.constant 1 : index
    %c1_48 = arith.constant 1 : index
    %c0_49 = arith.constant 0 : index
    %35 = vector.load %arg8[%c1_47, %c1_48, %c0_49] : memref<6x10x32xf32, #tpu.memory_space<vmem>>, vector<4x8x32xf32>
    %36 = vector.shape_cast %35 : vector<4x8x32xf32> to vector<32x32xf32>
    %37 = arith.truncf %36 : vector<32x32xf32> to vector<32x32xbf16>
    %c0_50 = arith.constant 0 : index
    %c128 = arith.constant 128 : index
    %38 = vector.load %arg10[%c0_50, %c128] : memref<32x288xbf16, #tpu.memory_space<vmem>>, vector<32x32xbf16>
    tpu.vector_store %arg10[%c0_50, %c128], %37 {strides = array<i32>} : memref<32x288xbf16, #tpu.memory_space<vmem>>, vector<32x32xbf16>,
    %c1_51 = arith.constant 1 : index
    %c2_52 = arith.constant 2 : index
    %c0_53 = arith.constant 0 : index
    %39 = vector.load %arg8[%c1_51, %c2_52, %c0_53] : memref<6x10x32xf32, #tpu.memory_space<vmem>>, vector<4x8x32xf32>
    %40 = vector.shape_cast %39 : vector<4x8x32xf32> to vector<32x32xf32>
    %41 = arith.truncf %40 : vector<32x32xf32> to vector<32x32xbf16>
    %c0_54 = arith.constant 0 : index
    %c160 = arith.constant 160 : index
    %42 = vector.load %arg10[%c0_54, %c160] : memref<32x288xbf16, #tpu.memory_space<vmem>>, vector<32x32xbf16>
    tpu.vector_store %arg10[%c0_54, %c160], %41 {strides = array<i32>} : memref<32x288xbf16, #tpu.memory_space<vmem>>, vector<32x32xbf16>,
    %c2_55 = arith.constant 2 : index
    %c0_56 = arith.constant 0 : index
    %c0_57 = arith.constant 0 : index
    %43 = vector.load %arg8[%c2_55, %c0_56, %c0_57] : memref<6x10x32xf32, #tpu.memory_space<vmem>>, vector<4x8x32xf32>
    %44 = vector.shape_cast %43 : vector<4x8x32xf32> to vector<32x32xf32>
    %45 = arith.truncf %44 : vector<32x32xf32> to vector<32x32xbf16>
    %c0_58 = arith.constant 0 : index
    %c192 = arith.constant 192 : index
    %46 = vector.load %arg10[%c0_58, %c192] : memref<32x288xbf16, #tpu.memory_space<vmem>>, vector<32x32xbf16>
    tpu.vector_store %arg10[%c0_58, %c192], %45 {strides = array<i32>} : memref<32x288xbf16, #tpu.memory_space<vmem>>, vector<32x32xbf16>,
    %c2_59 = arith.constant 2 : index
    %c1_60 = arith.constant 1 : index
    %c0_61 = arith.constant 0 : index
    %47 = vector.load %arg8[%c2_59, %c1_60, %c0_61] : memref<6x10x32xf32, #tpu.memory_space<vmem>>, vector<4x8x32xf32>
    %48 = vector.shape_cast %47 : vector<4x8x32xf32> to vector<32x32xf32>
    %49 = arith.truncf %48 : vector<32x32xf32> to vector<32x32xbf16>
    %c0_62 = arith.constant 0 : index
    %c224 = arith.constant 224 : index
    %50 = vector.load %arg10[%c0_62, %c224] : memref<32x288xbf16, #tpu.memory_space<vmem>>, vector<32x32xbf16>
    tpu.vector_store %arg10[%c0_62, %c224], %49 {strides = array<i32>} : memref<32x288xbf16, #tpu.memory_space<vmem>>, vector<32x32xbf16>,
    %c2_63 = arith.constant 2 : index
    %c2_64 = arith.constant 2 : index
    %c0_65 = arith.constant 0 : index
    %51 = vector.load %arg8[%c2_63, %c2_64, %c0_65] : memref<6x10x32xf32, #tpu.memory_space<vmem>>, vector<4x8x32xf32>
    %52 = vector.shape_cast %51 : vector<4x8x32xf32> to vector<32x32xf32>
    %53 = arith.truncf %52 : vector<32x32xf32> to vector<32x32xbf16>
    %c0_66 = arith.constant 0 : index
    %c256 = arith.constant 256 : index
    %54 = vector.load %arg10[%c0_66, %c256] : memref<32x288xbf16, #tpu.memory_space<vmem>>, vector<32x32xbf16>
    tpu.vector_store %arg10[%c0_66, %c256], %53 {strides = array<i32>} : memref<32x288xbf16, #tpu.memory_space<vmem>>, vector<32x32xbf16>,
    %c0_67 = arith.constant 0 : index
    %c0_68 = arith.constant 0 : index
    %55 = vector.load %arg10[%c0_67, %c0_68] : memref<32x288xbf16, #tpu.memory_space<vmem>>, vector<32x288xbf16>
    %c0_69 = arith.constant 0 : index
    %c0_70 = arith.constant 0 : index
    %56 = vector.load %arg3[%c0_69, %c0_70] : memref<288x64xbf16, #tpu.memory_space<vmem>>, vector<288x64xbf16>
    %cst_71 = arith.constant dense<0.000000e+00> : vector<32x64xf32>
    %57 = tpu.matmul %55, %56, %cst_71 {dimension_numbers = #tpu.dot_dimension_numbers<[1], [0], [0], [1], [0, 0, 1, 1], [], []>} : vector<32x288xbf16>, vector<288x64xbf16>, vector<32x64xf32> -> vector<32x64xf32>
    %cst_72 = arith.constant 0.000000e+00 : f32
    %58 = vector.broadcast %cst_72 : f32 to vector<32x64xf32>
    %59 = arith.maximumf %57, %58 : vector<32x64xf32>
    %60 = vector.shape_cast %59 : vector<32x64xf32> to vector<4x8x64xf32>
    %c1_73 = arith.constant 1 : index
    %c1_74 = arith.constant 1 : index
    %c0_75 = arith.constant 0 : index
    %61 = vector.load %arg9[%c1_73, %c1_74, %c0_75] : memref<6x10x64xf32, #tpu.memory_space<vmem>>, vector<4x8x64xf32>
    tpu.vector_store %arg9[%c1_73, %c1_74, %c0_75], %60 {strides = array<i32>} : memref<6x10x64xf32, #tpu.memory_space<vmem>>, vector<4x8x64xf32>,
    %c0_76 = arith.constant 0 : index
    %c0_77 = arith.constant 0 : index
    %c0_78 = arith.constant 0 : index
    %62 = vector.load %arg9[%c0_76, %c0_77, %c0_78] : memref<6x10x64xf32, #tpu.memory_space<vmem>>, vector<4x8x64xf32>
    %63 = vector.shape_cast %62 : vector<4x8x64xf32> to vector<32x64xf32>
    %64 = arith.truncf %63 : vector<32x64xf32> to vector<32x64xbf16>
    %c0_79 = arith.constant 0 : index
    %c0_80 = arith.constant 0 : index
    %65 = vector.load %arg11[%c0_79, %c0_80] : memref<32x576xbf16, #tpu.memory_space<vmem>>, vector<32x64xbf16>
    tpu.vector_store %arg11[%c0_79, %c0_80], %64 {strides = array<i32>} : memref<32x576xbf16, #tpu.memory_space<vmem>>, vector<32x64xbf16>,
    %c0_81 = arith.constant 0 : index
    %c1_82 = arith.constant 1 : index
    %c0_83 = arith.constant 0 : index
    %66 = vector.load %arg9[%c0_81, %c1_82, %c0_83] : memref<6x10x64xf32, #tpu.memory_space<vmem>>, vector<4x8x64xf32>
    %67 = vector.shape_cast %66 : vector<4x8x64xf32> to vector<32x64xf32>
    %68 = arith.truncf %67 : vector<32x64xf32> to vector<32x64xbf16>
    %c0_84 = arith.constant 0 : index
    %c64_85 = arith.constant 64 : index
    %69 = vector.load %arg11[%c0_84, %c64_85] : memref<32x576xbf16, #tpu.memory_space<vmem>>, vector<32x64xbf16>
    tpu.vector_store %arg11[%c0_84, %c64_85], %68 {strides = array<i32>} : memref<32x576xbf16, #tpu.memory_space<vmem>>, vector<32x64xbf16>,
    %c0_86 = arith.constant 0 : index
    %c2_87 = arith.constant 2 : index
    %c0_88 = arith.constant 0 : index
    %70 = vector.load %arg9[%c0_86, %c2_87, %c0_88] : memref<6x10x64xf32, #tpu.memory_space<vmem>>, vector<4x8x64xf32>
    %71 = vector.shape_cast %70 : vector<4x8x64xf32> to vector<32x64xf32>
    %72 = arith.truncf %71 : vector<32x64xf32> to vector<32x64xbf16>
    %c0_89 = arith.constant 0 : index
    %c128_90 = arith.constant 128 : index
    %73 = vector.load %arg11[%c0_89, %c128_90] : memref<32x576xbf16, #tpu.memory_space<vmem>>, vector<32x64xbf16>
    tpu.vector_store %arg11[%c0_89, %c128_90], %72 {strides = array<i32>} : memref<32x576xbf16, #tpu.memory_space<vmem>>, vector<32x64xbf16>,
    %c1_91 = arith.constant 1 : index
    %c0_92 = arith.constant 0 : index
    %c0_93 = arith.constant 0 : index
    %74 = vector.load %arg9[%c1_91, %c0_92, %c0_93] : memref<6x10x64xf32, #tpu.memory_space<vmem>>, vector<4x8x64xf32>
    %75 = vector.shape_cast %74 : vector<4x8x64xf32> to vector<32x64xf32>
    %76 = arith.truncf %75 : vector<32x64xf32> to vector<32x64xbf16>
    %c0_94 = arith.constant 0 : index
    %c192_95 = arith.constant 192 : index
    %77 = vector.load %arg11[%c0_94, %c192_95] : memref<32x576xbf16, #tpu.memory_space<vmem>>, vector<32x64xbf16>
    tpu.vector_store %arg11[%c0_94, %c192_95], %76 {strides = array<i32>} : memref<32x576xbf16, #tpu.memory_space<vmem>>, vector<32x64xbf16>,
    %c1_96 = arith.constant 1 : index
    %c1_97 = arith.constant 1 : index
    %c0_98 = arith.constant 0 : index
    %78 = vector.load %arg9[%c1_96, %c1_97, %c0_98] : memref<6x10x64xf32, #tpu.memory_space<vmem>>, vector<4x8x64xf32>
    %79 = vector.shape_cast %78 : vector<4x8x64xf32> to vector<32x64xf32>
    %80 = arith.truncf %79 : vector<32x64xf32> to vector<32x64xbf16>
    %c0_99 = arith.constant 0 : index
    %c256_100 = arith.constant 256 : index
    %81 = vector.load %arg11[%c0_99, %c256_100] : memref<32x576xbf16, #tpu.memory_space<vmem>>, vector<32x64xbf16>
    tpu.vector_store %arg11[%c0_99, %c256_100], %80 {strides = array<i32>} : memref<32x576xbf16, #tpu.memory_space<vmem>>, vector<32x64xbf16>,
    %c1_101 = arith.constant 1 : index
    %c2_102 = arith.constant 2 : index
    %c0_103 = arith.constant 0 : index
    %82 = vector.load %arg9[%c1_101, %c2_102, %c0_103] : memref<6x10x64xf32, #tpu.memory_space<vmem>>, vector<4x8x64xf32>
    %83 = vector.shape_cast %82 : vector<4x8x64xf32> to vector<32x64xf32>
    %84 = arith.truncf %83 : vector<32x64xf32> to vector<32x64xbf16>
    %c0_104 = arith.constant 0 : index
    %c320 = arith.constant 320 : index
    %85 = vector.load %arg11[%c0_104, %c320] : memref<32x576xbf16, #tpu.memory_space<vmem>>, vector<32x64xbf16>
    tpu.vector_store %arg11[%c0_104, %c320], %84 {strides = array<i32>} : memref<32x576xbf16, #tpu.memory_space<vmem>>, vector<32x64xbf16>,
    %c2_105 = arith.constant 2 : index
    %c0_106 = arith.constant 0 : index
    %c0_107 = arith.constant 0 : index
    %86 = vector.load %arg9[%c2_105, %c0_106, %c0_107] : memref<6x10x64xf32, #tpu.memory_space<vmem>>, vector<4x8x64xf32>
    %87 = vector.shape_cast %86 : vector<4x8x64xf32> to vector<32x64xf32>
    %88 = arith.truncf %87 : vector<32x64xf32> to vector<32x64xbf16>
    %c0_108 = arith.constant 0 : index
    %c384 = arith.constant 384 : index
    %89 = vector.load %arg11[%c0_108, %c384] : memref<32x576xbf16, #tpu.memory_space<vmem>>, vector<32x64xbf16>
    tpu.vector_store %arg11[%c0_108, %c384], %88 {strides = array<i32>} : memref<32x576xbf16, #tpu.memory_space<vmem>>, vector<32x64xbf16>,
    %c2_109 = arith.constant 2 : index
    %c1_110 = arith.constant 1 : index
    %c0_111 = arith.constant 0 : index
    %90 = vector.load %arg9[%c2_109, %c1_110, %c0_111] : memref<6x10x64xf32, #tpu.memory_space<vmem>>, vector<4x8x64xf32>
    %91 = vector.shape_cast %90 : vector<4x8x64xf32> to vector<32x64xf32>
    %92 = arith.truncf %91 : vector<32x64xf32> to vector<32x64xbf16>
    %c0_112 = arith.constant 0 : index
    %c448 = arith.constant 448 : index
    %93 = vector.load %arg11[%c0_112, %c448] : memref<32x576xbf16, #tpu.memory_space<vmem>>, vector<32x64xbf16>
    tpu.vector_store %arg11[%c0_112, %c448], %92 {strides = array<i32>} : memref<32x576xbf16, #tpu.memory_space<vmem>>, vector<32x64xbf16>,
    %c2_113 = arith.constant 2 : index
    %c2_114 = arith.constant 2 : index
    %c0_115 = arith.constant 0 : index
    %94 = vector.load %arg9[%c2_113, %c2_114, %c0_115] : memref<6x10x64xf32, #tpu.memory_space<vmem>>, vector<4x8x64xf32>
    %95 = vector.shape_cast %94 : vector<4x8x64xf32> to vector<32x64xf32>
    %96 = arith.truncf %95 : vector<32x64xf32> to vector<32x64xbf16>
    %c0_116 = arith.constant 0 : index
    %c512 = arith.constant 512 : index
    %97 = vector.load %arg11[%c0_116, %c512] : memref<32x576xbf16, #tpu.memory_space<vmem>>, vector<32x64xbf16>
    tpu.vector_store %arg11[%c0_116, %c512], %96 {strides = array<i32>} : memref<32x576xbf16, #tpu.memory_space<vmem>>, vector<32x64xbf16>,
    %c0_117 = arith.constant 0 : index
    %c0_118 = arith.constant 0 : index
    %98 = vector.load %arg11[%c0_117, %c0_118] : memref<32x576xbf16, #tpu.memory_space<vmem>>, vector<32x576xbf16>
    %c0_119 = arith.constant 0 : index
    %c0_120 = arith.constant 0 : index
    %99 = vector.load %arg4[%c0_119, %c0_120] : memref<576x32xbf16, #tpu.memory_space<vmem>>, vector<576x32xbf16>
    %cst_121 = arith.constant dense<0.000000e+00> : vector<32x32xf32>
    %100 = tpu.matmul %98, %99, %cst_121 {dimension_numbers = #tpu.dot_dimension_numbers<[1], [0], [0], [1], [0, 0, 1, 1], [], []>} : vector<32x576xbf16>, vector<576x32xbf16>, vector<32x32xf32> -> vector<32x32xf32>
    %cst_122 = arith.constant 0.000000e+00 : f32
    %101 = vector.broadcast %cst_122 : f32 to vector<32x32xf32>
    %102 = arith.maximumf %100, %101 : vector<32x32xf32>
    %103 = tpu.transpose %102, [1, 0] : vector<32x32xf32> -> vector<32x32xf32>
    %c0_123 = arith.constant 0 : index
    %c0_124 = arith.constant 0 : index
    %c0_125 = arith.constant 0 : index
    %104 = vector.load %arg2[%c0_123, %c0_124, %c0_125] : memref<1x32x32xf32, #tpu.memory_space<vmem>>, vector<1x32x32xf32>
    %105 = vector.shape_cast %104 : vector<1x32x32xf32> to vector<32x32xf32>
    %106 = arith.addf %103, %105 : vector<32x32xf32>
    %cst_126 = arith.constant dense<0.000000e+00> : vector<32xf32>
    %107 = vector.multi_reduction <add>, %106, %cst_126 [1] : vector<32x32xf32> to vector<32xf32>
    %108 = vector.shape_cast %107 : vector<32xf32> to vector<32x1xf32>
    %cst_127 = arith.constant 3.200000e+01 : f32
    %109 = vector.broadcast %cst_127 : f32 to vector<32x1xf32>
    %110 = arith.divf %108, %109 : vector<32x1xf32>
    %111 = vector.broadcast %110 : vector<32x1xf32> to vector<32x32xf32>
    %112 = arith.subf %106, %111 : vector<32x32xf32>
    %113 = arith.mulf %112, %112 : vector<32x32xf32>
    %cst_128 = arith.constant dense<0.000000e+00> : vector<32xf32>
    %114 = vector.multi_reduction <add>, %113, %cst_128 [1] : vector<32x32xf32> to vector<32xf32>
    %115 = vector.shape_cast %114 : vector<32xf32> to vector<32x1xf32>
    %cst_129 = arith.constant 3.200000e+01 : f32
    %116 = vector.broadcast %cst_129 : f32 to vector<32x1xf32>
    %117 = arith.divf %115, %116 : vector<32x1xf32>
    %118 = vector.broadcast %110 : vector<32x1xf32> to vector<32x32xf32>
    %119 = arith.subf %106, %118 : vector<32x32xf32>
    %cst_130 = arith.constant 9.99999974E-6 : f32
    %120 = vector.broadcast %cst_130 : f32 to vector<32x1xf32>
    %121 = arith.addf %117, %120 : vector<32x1xf32>
    %122 = math.rsqrt %121 : vector<32x1xf32>
    %123 = vector.broadcast %122 : vector<32x1xf32> to vector<32x32xf32>
    %124 = arith.mulf %119, %123 : vector<32x32xf32>
    %c0_131 = arith.constant 0 : index
    %c0_132 = arith.constant 0 : index
    %125 = vector.load %arg5[%c0_131, %c0_132] : memref<1x32xf32, #tpu.memory_space<vmem>>, vector<1x32xf32>
    %126 = vector.broadcast %125 : vector<1x32xf32> to vector<32x32xf32>
    %127 = arith.mulf %124, %126 : vector<32x32xf32>
    %c0_133 = arith.constant 0 : index
    %c0_134 = arith.constant 0 : index
    %128 = vector.load %arg6[%c0_133, %c0_134] : memref<1x32xf32, #tpu.memory_space<vmem>>, vector<1x32xf32>
    %129 = vector.broadcast %128 : vector<1x32xf32> to vector<32x32xf32>
    %130 = arith.addf %127, %129 : vector<32x32xf32>
    %c0_135 = arith.constant 0 : index
    %c0_136 = arith.constant 0 : index
    %c0_137 = arith.constant 0 : index
    %131 = vector.load %arg7[%c0_135, %c0_136, %c0_137] : memref<1x32x32xf32, #tpu.memory_space<vmem>>, vector<1x32x32xf32>
    %132 = vector.shape_cast %131 : vector<1x32x32xf32> to vector<32x32xf32>
    %133 = vector.shape_cast %130 : vector<32x32xf32> to vector<1x32x32xf32>
    tpu.vector_store %arg7[%c0_135, %c0_136, %c0_137], %133 {strides = array<i32>} : memref<1x32x32xf32, #tpu.memory_space<vmem>>, vector<1x32x32xf32>,
    return
  }
  func.func @transform_0(%arg0: i32) -> (i32, i32, i32) {
    %c0_i32 = arith.constant 0 : i32
    %c0_i32_0 = arith.constant 0 : i32
    %c0_i32_1 = arith.constant 0 : i32
    return %arg0, %c0_i32, %c0_i32_0 : i32, i32, i32
  }
  func.func @transform_1(%arg0: i32) -> (i32, i32, i32) {
    %c0_i32 = arith.constant 0 : i32
    %c0_i32_0 = arith.constant 0 : i32
    %c0_i32_1 = arith.constant 0 : i32
    return %arg0, %c0_i32, %c0_i32_0 : i32, i32, i32
  }
  func.func @transform_2(%arg0: i32) -> (i32, i32) {
    %c0_i32 = arith.constant 0 : i32
    %c0_i32_0 = arith.constant 0 : i32
    %c0_i32_1 = arith.constant 0 : i32
    return %c0_i32, %c0_i32_0 : i32, i32
  }
  func.func @transform_3(%arg0: i32) -> (i32, i32) {
    %c0_i32 = arith.constant 0 : i32
    %c0_i32_0 = arith.constant 0 : i32
    %c0_i32_1 = arith.constant 0 : i32
    return %c0_i32, %c0_i32_0 : i32, i32
  }
  func.func @transform_4(%arg0: i32) -> (i32, i32) {
    %c0_i32 = arith.constant 0 : i32
    %c0_i32_0 = arith.constant 0 : i32
    %c0_i32_1 = arith.constant 0 : i32
    return %c0_i32, %c0_i32_0 : i32, i32
  }
  func.func @transform_5(%arg0: i32) -> (i32, i32) {
    %c0_i32 = arith.constant 0 : i32
    %c0_i32_0 = arith.constant 0 : i32
    %c0_i32_1 = arith.constant 0 : i32
    return %c0_i32, %c0_i32_0 : i32, i32
  }
  func.func @transform_6(%arg0: i32) -> (i32, i32, i32) {
    %c0_i32 = arith.constant 0 : i32
    %c0_i32_0 = arith.constant 0 : i32
    %c0_i32_1 = arith.constant 0 : i32
    return %arg0, %c0_i32, %c0_i32_0 : i32, i32, i32
  }
}

</mosaic_0001>

<llo_original>
// kernel: transformer_encoder_layer.2
$region0: #{transformer_encoder_layer.2}
  #allocation0 [shape = 'u32[]', space=smem, size = 0x4, offset = 0x4, fixed_abs, tag = 'smem constant byte address 0x4 - core index']
  #allocation1 [shape = 'u32[144,128]{1,0:T(1,128)}', space=vmem, size = 0x12000, scoped, tag = 'internal scratch']
  %s0 = inlined_call_operand.hbm [shape: f32[2,32,32], index: 0, kind: input, shape index: {}]
  %s1 = inlined_call_operand.vmem [shape: bf16[32,96], index: 1, kind: input, shape index: {}]
  %s2 = inlined_call_operand.hbm [shape: f32[1,96], index: 2, kind: input, shape index: {}]
  %s3 = inlined_call_operand.hbm [shape: bf16[32,32], index: 3, kind: input, shape index: {}]
  %s4 = inlined_call_operand.hbm [shape: f32[1,32], index: 4, kind: input, shape index: {}]
  %s5 = inlined_call_operand.hbm [shape: f32[1,32], index: 5, kind: input, shape index: {}]
  %s6 = inlined_call_operand.hbm [shape: f32[1,32], index: 6, kind: input, shape index: {}]
  %s7 = inlined_call_operand.vmem [shape: f32[2,32,32], index: 7, kind: output, shape index: {}]
  %s8 = sld [smem:[#allocation0]]
  $region85: #{transformer_encoder_layer.2} parent=0
    _
  %s10 = ssub.s32 1, %s8
  %s11 = scalar_select 0, %s10, %s8
  $region1: #{transformer_encoder_layer.2} parent=0
    #allocation2 [shape = 'u8[32768]{0}', space=vmem, size = 0x8000, scoped, tag = 'input window, operand 0']
    #allocation3 [shape = 's32[2]{0}', space=sflag, size = 0x8, scoped, tag = 'scoped memory for transformer_encoder_layer.2']
    #allocation4 [shape = 'u8[512]{0}', space=vmem, size = 0x400, scoped, tag = 'input window, operand 2, single buffered']
    #allocation5 [shape = 's32[1]{0}', space=sflag, size = 0x4, scoped, tag = 'scoped memory for transformer_encoder_layer.2']
    #allocation6 [shape = 'u8[8192]{0}', space=vmem, size = 0x2000, scoped, tag = 'input window, operand 3, single buffered']
    #allocation7 [shape = 'u8[512]{0}', space=vmem, size = 0x400, scoped, tag = 'input window, operand 4, single buffered']
    #allocation8 [shape = 's32[1]{0}', space=sflag, size = 0x4, scoped, tag = 'scoped memory for transformer_encoder_layer.2']
    #allocation9 [shape = 'u8[512]{0}', space=vmem, size = 0x400, scoped, tag = 'input window, operand 5, single buffered']
    #allocation10 [shape = 'u8[512]{0}', space=vmem, size = 0x400, scoped, tag = 'input window, operand 6, single buffered']
    #allocation11 [shape = 's32[1]{0}', space=sflag, size = 0x4, scoped, tag = 'scoped memory for transformer_encoder_layer.2']
    %12 = vsyncpa [#allocation3], 0
    %s13 = scalar_lea.sflag [#allocation3], 1
    %14 = vsyncpa %s13, 0
    %15 = vsyncpa [#allocation5], 0
    %16 = vsyncpa [#allocation8], 0
    %17 = vsyncpa [#allocation11], 0
    loop: start=0, step=1, limit=4
    $region2: #{transformer_encoder_layer.2} parent=1 // loop_pre_header
      _
    $region3: #{transformer_encoder_layer.2} parent=1 // loop_header
      %s19 = sphi 0, %s23
      %p20 = scmp.ge.s32.totalorder %s19, 4
      %s29 = sphi 0, %s31
      %s32 = sphi 0, %s29
      %s33 = sphi 0, %s32
      %s49 = sphi 0, %s33
      %s53 = sphi 0, %s53
      %s55 = sphi 0, %s53
      %s56 = sphi 0, %s55
      %s70 = sphi 0, %s56
      %s74 = sphi 0, %s74
      %s76 = sphi 0, %s74
      %s77 = sphi 0, %s76
      %s91 = sphi 0, %s77
      %s95 = sphi 0, %s95
      %s97 = sphi 0, %s95
      %s98 = sphi 0, %s97
      %s112 = sphi 0, %s98
      %s116 = sphi 0, %s116
      %s118 = sphi 0, %s116
      %s119 = sphi 0, %s118
      %s133 = sphi 0, %s119
      %s137 = sphi 0, %s137
      %s139 = sphi 0, %s137
      %s140 = sphi 0, %s139
      %s154 = sphi 0, %s140
      %s158 = sphi 0, %s158
      %s160 = sphi 0, %s158
      %s161 = sphi 0, %s160
      %s175 = sphi 0, %s161
      %s181 = sphi 0, %s183
      %s184 = sphi 0, %s181
      %s185 = sphi 0, %s184
      %s201 = sphi 0, %s185
    $region4: #{transformer_encoder_layer.2} parent=1 // loop_header_branch
      %22 = sbr.rel (%p20) target = $region8
    $region5: #{transformer_encoder_layer.2} parent=1 // loop_body
      %s24 = ssub.s32 %s19, 1
      %s25 = ssub.s32 %s19, 2
      %s26 = sadd.s32 %s19, 1
      %s27 = ssub.s32 %s19, %s26
      %p28 = scmp.eq.s32.totalorder %s27, 0
      %s30 = sadd.s32 %s29, 1
      %s31 = scalar_select %p28, %s29, %s30
      %p34 = pneg %p28
      %p35 = scmp.eq.s32.totalorder %s19, 1
      %p36 = por %p34, %p35
      %p37 = scmp.ne.s32.totalorder %s29, %s32
      %p38 = scmp.eq.s32.totalorder %s19, 0
      %p39 = por %p37, %p38
      %p40 = scmp.ne.s32.totalorder %s29, %s32
      %p41 = scmp.eq.s32.totalorder %s24, 1
      %p42 = por %p40, %p41
      %p43 = scmp.ne.s32.totalorder %s32, %s33
      %p44 = scmp.eq.s32.totalorder %s24, 0
      %p45 = por %p43, %p44
      %p46 = scmp.ne.s32.totalorder %s32, %s33
      %p47 = scmp.eq.s32.totalorder %s25, 1
      %p48 = por %p46, %p47
      %p50 = scmp.ne.s32.totalorder %s33, %s49
      %p51 = scmp.eq.s32.totalorder %s25, 0
      %p52 = por %p50, %p51
      %s54 = sadd.s32 %s53, 1
      %p57 = scmp.eq.s32.totalorder %s19, 1
      %p58 = scmp.ne.s32.totalorder %s53, %s55
      %p59 = scmp.eq.s32.totalorder %s19, 0
      %p60 = por %p58, %p59
      %p61 = scmp.ne.s32.totalorder %s53, %s55
      %p62 = scmp.eq.s32.totalorder %s24, 1
      %p63 = por %p61, %p62
      %p64 = scmp.ne.s32.totalorder %s55, %s56
      %p65 = scmp.eq.s32.totalorder %s24, 0
      %p66 = por %p64, %p65
      %p67 = scmp.ne.s32.totalorder %s55, %s56
      %p68 = scmp.eq.s32.totalorder %s25, 1
      %p69 = por %p67, %p68
      %p71 = scmp.ne.s32.totalorder %s56, %s70
      %p72 = scmp.eq.s32.totalorder %s25, 0
      %p73 = por %p71, %p72
      %s75 = sadd.s32 %s74, 1
      %p78 = scmp.eq.s32.totalorder %s19, 1
      %p79 = scmp.ne.s32.totalorder %s74, %s76
      %p80 = scmp.eq.s32.totalorder %s19, 0
      %p81 = por %p79, %p80
      %p82 = scmp.ne.s32.totalorder %s74, %s76
      %p83 = scmp.eq.s32.totalorder %s24, 1
      %p84 = por %p82, %p83
      %p85 = scmp.ne.s32.totalorder %s76, %s77
      %p86 = scmp.eq.s32.totalorder %s24, 0
      %p87 = por %p85, %p86
      %p88 = scmp.ne.s32.totalorder %s76, %s77
      %p89 = scmp.eq.s32.totalorder %s25, 1
      %p90 = por %p88, %p89
      %p92 = scmp.ne.s32.totalorder %s77, %s91
      %p93 = scmp.eq.s32.totalorder %s25, 0
      %p94 = por %p92, %p93
      %s96 = sadd.s32 %s95, 1
      %p99 = scmp.eq.s32.totalorder %s19, 1
      %p100 = scmp.ne.s32.totalorder %s95, %s97
      %p101 = scmp.eq.s32.totalorder %s19, 0
      %p102 = por %p100, %p101
      %p103 = scmp.ne.s32.totalorder %s95, %s97
      %p104 = scmp.eq.s32.totalorder %s24, 1
      %p105 = por %p103, %p104
      %p106 = scmp.ne.s32.totalorder %s97, %s98
      %p107 = scmp.eq.s32.totalorder %s24, 0
      %p108 = por %p106, %p107
      %p109 = scmp.ne.s32.totalorder %s97, %s98
      %p110 = scmp.eq.s32.totalorder %s25, 1
      %p111 = por %p109, %p110
      %p113 = scmp.ne.s32.totalorder %s98, %s112
      %p114 = scmp.eq.s32.totalorder %s25, 0
      %p115 = por %p113, %p114
      %s117 = sadd.s32 %s116, 1
      %p120 = scmp.eq.s32.totalorder %s19, 1
      %p121 = scmp.ne.s32.totalorder %s116, %s118
      %p122 = scmp.eq.s32.totalorder %s19, 0
      %p123 = por %p121, %p122
      %p124 = scmp.ne.s32.totalorder %s116, %s118
      %p125 = scmp.eq.s32.totalorder %s24, 1
      %p126 = por %p124, %p125
      %p127 = scmp.ne.s32.totalorder %s118, %s119
      %p128 = scmp.eq.s32.totalorder %s24, 0
      %p129 = por %p127, %p128
      %p130 = scmp.ne.s32.totalorder %s118, %s119
      %p131 = scmp.eq.s32.totalorder %s25, 1
      %p132 = por %p130, %p131
      %p134 = scmp.ne.s32.totalorder %s119, %s133
      %p135 = scmp.eq.s32.totalorder %s25, 0
      %p136 = por %p134, %p135
      %s138 = sadd.s32 %s137, 1
      %p141 = scmp.eq.s32.totalorder %s19, 1
      %p142 = scmp.ne.s32.totalorder %s137, %s139
      %p143 = scmp.eq.s32.totalorder %s19, 0
      %p144 = por %p142, %p143
      %p145 = scmp.ne.s32.totalorder %s137, %s139
      %p146 = scmp.eq.s32.totalorder %s24, 1
      %p147 = por %p145, %p146
      %p148 = scmp.ne.s32.totalorder %s139, %s140
      %p149 = scmp.eq.s32.totalorder %s24, 0
      %p150 = por %p148, %p149
      %p151 = scmp.ne.s32.totalorder %s139, %s140
      %p152 = scmp.eq.s32.totalorder %s25, 1
      %p153 = por %p151, %p152
      %p155 = scmp.ne.s32.totalorder %s140, %s154
      %p156 = scmp.eq.s32.totalorder %s25, 0
      %p157 = por %p155, %p156
      %s159 = sadd.s32 %s158, 1
      %p162 = scmp.eq.s32.totalorder %s19, 1
      %p163 = scmp.ne.s32.totalorder %s158, %s160
      %p164 = scmp.eq.s32.totalorder %s19, 0
      %p165 = por %p163, %p164
      %p166 = scmp.ne.s32.totalorder %s158, %s160
      %p167 = scmp.eq.s32.totalorder %s24, 1
      %p168 = por %p166, %p167
      %p169 = scmp.ne.s32.totalorder %s160, %s161
      %p170 = scmp.eq.s32.totalorder %s24, 0
      %p171 = por %p169, %p170
      %p172 = scmp.ne.s32.totalorder %s160, %s161
      %p173 = scmp.eq.s32.totalorder %s25, 1
      %p174 = por %p172, %p173
      %p176 = scmp.ne.s32.totalorder %s161, %s175
      %p177 = scmp.eq.s32.totalorder %s25, 0
      %p178 = por %p176, %p177
      %s179 = ssub.s32 %s19, %s26
      %p180 = scmp.eq.s32.totalorder %s179, 0
      %s182 = sadd.s32 %s181, 1
      %s183 = scalar_select %p180, %s181, %s182
      %p186 = pneg %p180
      %p187 = scmp.eq.s32.totalorder %s19, 1
      %p188 = por %p186, %p187
      %p189 = scmp.ne.s32.totalorder %s181, %s184
      %p190 = scmp.eq.s32.totalorder %s19, 0
      %p191 = por %p189, %p190
      %p192 = scmp.ne.s32.totalorder %s181, %s184
      %p193 = scmp.eq.s32.totalorder %s24, 1
      %p194 = por %p192, %p193
      %p195 = scmp.ne.s32.totalorder %s184, %s185
      %p196 = scmp.eq.s32.totalorder %s24, 0
      %p197 = por %p195, %p196
      %p198 = scmp.ne.s32.totalorder %s184, %s185
      %p199 = scmp.eq.s32.totalorder %s25, 1
      %p200 = por %p198, %p199
      %p202 = scmp.ne.s32.totalorder %s185, %s201
      %p203 = scmp.eq.s32.totalorder %s25, 0
      %p204 = por %p202, %p203
      %p205 = scmp.le.s32.totalorder 1, %s19
      %p206 = scmp.lt.s32.totalorder %s19, 3
      %p207 = pnand %p205, %p206
      %p208 = pneg %p207
      // Predicated region
      $region9: #{transformer_encoder_layer.2} parent=5 // pred_check
        _
      $region10: #{transformer_encoder_layer.2} parent=5 // pred_check_branch
        %210 = sbr.rel (%p207) target = $region12
      $region11: #{transformer_encoder_layer.2} parent=5 // pred_region
        %s211 = ssub.s32 %s19, 1
        // Predicated region
        $region13: #{transformer_encoder_layer.2} parent=11 // pred_check
          %p212 = pneg %p66
        $region14: #{transformer_encoder_layer.2} parent=11 // pred_check_branch
          %214 = sbr.rel (%p212) target = $region16
        $region15: #{transformer_encoder_layer.2} parent=11 // pred_region
          _
        $region16: #{transformer_encoder_layer.2} parent=11 // pred_fallthru
          _
        // Predicated region
        $region17: #{transformer_encoder_layer.2} parent=11 // pred_check
          %p215 = pneg %p87
        $region18: #{transformer_encoder_layer.2} parent=11 // pred_check_branch
          %217 = sbr.rel (%p215) target = $region20
        $region19: #{transformer_encoder_layer.2} parent=11 // pred_region
          %s219 = ssub.s32 16, 16
          %220 = vsyncadd [#allocation5], %s219
          %s222 = sshll.u32 [#allocation4], 4
          %s223 = int_to_ptr.vmem [resolvable:$true] %s222
          %225 = dma.hbm_to_vmem [thread:$0]  %s2, 16, %s223, [#allocation5]
        $region20: #{transformer_encoder_layer.2} parent=11 // pred_fallthru
          _
        // Predicated region
        $region21: #{transformer_encoder_layer.2} parent=11 // pred_check
          %p226 = pneg %p108
        $region22: #{transformer_encoder_layer.2} parent=11 // pred_check_branch
          %228 = sbr.rel (%p226) target = $region24
        $region23: #{transformer_encoder_layer.2} parent=11 // pred_region
          %s230 = ssub.s32 256, 256
          %231 = vsyncadd [#allocation5], %s230
          %s232 = sshll.u32 [#allocation6], 4
          %s233 = int_to_ptr.vmem [resolvable:$true] %s232
          %238 = dma.hbm_to_vmem [thread:$0]  %s3, 256, %s233, [#allocation5], 64, 64, 4
        $region24: #{transformer_encoder_layer.2} parent=11 // pred_fallthru
          _
        // Predicated region
        $region25: #{transformer_encoder_layer.2} parent=11 // pred_check
          %p239 = pneg %p129
        $region26: #{transformer_encoder_layer.2} parent=11 // pred_check_branch
          %241 = sbr.rel (%p239) target = $region28
        $region27: #{transformer_encoder_layer.2} parent=11 // pred_region
          %s243 = ssub.s32 16, 16
          %244 = vsyncadd [#allocation8], %s243
          %s246 = sshll.u32 [#allocation7], 4
          %s247 = int_to_ptr.vmem [resolvable:$true] %s246
          %249 = dma.hbm_to_vmem [thread:$0]  %s4, 16, %s247, [#allocation8]
        $region28: #{transformer_encoder_layer.2} parent=11 // pred_fallthru
          _
        // Predicated region
        $region29: #{transformer_encoder_layer.2} parent=11 // pred_check
          %p250 = pneg %p150
        $region30: #{transformer_encoder_layer.2} parent=11 // pred_check_branch
          %252 = sbr.rel (%p250) target = $region32
        $region31: #{transformer_encoder_layer.2} parent=11 // pred_region
          %s254 = ssub.s32 16, 16
          %255 = vsyncadd [#allocation8], %s254
          %s257 = sshll.u32 [#allocation9], 4
          %s258 = int_to_ptr.vmem [resolvable:$true] %s257
          %260 = dma.hbm_to_vmem [thread:$0]  %s5, 16, %s258, [#allocation8]
        $region32: #{transformer_encoder_layer.2} parent=11 // pred_fallthru
          _
        // Predicated region
        $region33: #{transformer_encoder_layer.2} parent=11 // pred_check
          %p261 = pneg %p171
        $region34: #{transformer_encoder_layer.2} parent=11 // pred_check_branch
          %263 = sbr.rel (%p261) target = $region36
        $region35: #{transformer_encoder_layer.2} parent=11 // pred_region
          %s265 = ssub.s32 16, 16
          %266 = vsyncadd [#allocation11], %s265
          %s268 = sshll.u32 [#allocation10], 4
          %s269 = int_to_ptr.vmem [resolvable:$true] %s268
          %271 = dma.hbm_to_vmem [thread:$0]  %s6, 16, %s269, [#allocation11]
        $region36: #{transformer_encoder_layer.2} parent=11 // pred_fallthru
          _
      $region12: #{transformer_encoder_layer.2} parent=5 // pred_fallthru
        _
      %p272 = scmp.lt.s32.totalorder %s19, 2
      // Predicated region
      $region37: #{transformer_encoder_layer.2} parent=5 // pred_check
        %p273 = pneg %p272
      $region38: #{transformer_encoder_layer.2} parent=5 // pred_check_branch
        %275 = sbr.rel (%p273) target = $region40
      $region39: #{transformer_encoder_layer.2} parent=5 // pred_region
        // Predicated region
        $region41: #{transformer_encoder_layer.2} parent=39 // pred_check
          %p276 = pneg %p39
        $region42: #{transformer_encoder_layer.2} parent=39 // pred_check_branch
          %278 = sbr.rel (%p276) target = $region44
        $region43: #{transformer_encoder_layer.2} parent=39 // pred_region
          %s279 = sand.u32 %s29, 1
          %s280 = scalar_lea.sflag [#allocation3], %s279
          %s281 = sand.u32 %s29, 1
          %s282 = smul.addr %s281, 32
          %s283 = scalar_lea.vmem [#allocation2], %s282
          %s285 = ssub.s32 512, 512
          %286 = vsyncadd %s280, %s285
          %s287 = smul.addr %s19, 4
          %s288 = smul.addr %s287, 128
          %s289 = scalar_lea.hbm %s0, %s288
          %s290 = sshll.u32 %s283, 4
          %s291 = int_to_ptr.vmem [resolvable:$true] %s290
          %296 = dma.hbm_to_vmem [thread:$0]  %s289, 512, %s291, %s280, 128, 128, 8
        $region44: #{transformer_encoder_layer.2} parent=39 // pred_fallthru
          _
      $region40: #{transformer_encoder_layer.2} parent=5 // pred_fallthru
        _
      %p297 = scmp.le.s32.totalorder 1, %s19
      %p298 = scmp.lt.s32.totalorder %s19, 3
      %p299 = pnand %p297, %p298
      %p300 = pneg %p299
      // Predicated region
      $region45: #{transformer_encoder_layer.2} parent=5 // pred_check
        _
      $region46: #{transformer_encoder_layer.2} parent=5 // pred_check_branch
        %302 = sbr.rel (%p299) target = $region48
      $region47: #{transformer_encoder_layer.2} parent=5 // pred_region
        %s303 = ssub.s32 %s19, 1
        %s304 = sand.u32 %s32, 1
        %s305 = scalar_lea.sflag [#allocation3], %s304
        %s306 = sand.u32 %s32, 1
        %s307 = smul.addr %s306, 32
        %s308 = scalar_lea.vmem [#allocation2], %s307
        // Predicated region
        $region49: #{transformer_encoder_layer.2} parent=47 // pred_check
          %p309 = pneg %p45
        $region50: #{transformer_encoder_layer.2} parent=47 // pred_check_branch
          %311 = sbr.rel (%p309) target = $region52
        $region51: #{transformer_encoder_layer.2} parent=47 // pred_region
          %312 = dma.done %s305, 512
        $region52: #{transformer_encoder_layer.2} parent=47 // pred_fallthru
          _
        // Predicated region
        $region53: #{transformer_encoder_layer.2} parent=47 // pred_check
          %p313 = pneg %p87
        $region54: #{transformer_encoder_layer.2} parent=47 // pred_check_branch
          %315 = sbr.rel (%p313) target = $region56
        $region55: #{transformer_encoder_layer.2} parent=47 // pred_region
          %316 = dma.done [#allocation5], 16
        $region56: #{transformer_encoder_layer.2} parent=47 // pred_fallthru
          _
        // Predicated region
        $region57: #{transformer_encoder_layer.2} parent=47 // pred_check
          %p317 = pneg %p108
        $region58: #{transformer_encoder_layer.2} parent=47 // pred_check_branch
          %319 = sbr.rel (%p317) target = $region60
        $region59: #{transformer_encoder_layer.2} parent=47 // pred_region
          %320 = dma.done [#allocation5], 256
        $region60: #{transformer_encoder_layer.2} parent=47 // pred_fallthru
          _
        // Predicated region
        $region61: #{transformer_encoder_layer.2} parent=47 // pred_check
          %p321 = pneg %p129
        $region62: #{transformer_encoder_layer.2} parent=47 // pred_check_branch
          %323 = sbr.rel (%p321) target = $region64
        $region63: #{transformer_encoder_layer.2} parent=47 // pred_region
          %324 = dma.done [#allocation8], 16
        $region64: #{transformer_encoder_layer.2} parent=47 // pred_fallthru
          _
        // Predicated region
        $region65: #{transformer_encoder_layer.2} parent=47 // pred_check
          %p325 = pneg %p150
        $region66: #{transformer_encoder_layer.2} parent=47 // pred_check_branch
          %327 = sbr.rel (%p325) target = $region68
        $region67: #{transformer_encoder_layer.2} parent=47 // pred_region
          %328 = dma.done [#allocation8], 16
        $region68: #{transformer_encoder_layer.2} parent=47 // pred_fallthru
          _
        // Predicated region
        $region69: #{transformer_encoder_layer.2} parent=47 // pred_check
          %p329 = pneg %p171
        $region70: #{transformer_encoder_layer.2} parent=47 // pred_check_branch
          %331 = sbr.rel (%p329) target = $region72
        $region71: #{transformer_encoder_layer.2} parent=47 // pred_region
          %332 = dma.done [#allocation11], 16
        $region72: #{transformer_encoder_layer.2} parent=47 // pred_fallthru
          _
        %s333 = sand.u32 %s32, 1
        %s334 = scalar_lea.sflag [#allocation3], %s333
        %s335 = sand.u32 %s32, 1
        %s336 = smul.addr %s335, 32
        %s337 = scalar_lea.vmem [#allocation2], %s336
        %p338 = pneg %p45
        %p339 = pneg %p42
        %p340 = pneg %p66
        %p341 = pneg %p63
        %p342 = pneg %p87
        %p343 = pneg %p84
        %p344 = pneg %p108
        %p345 = pneg %p105
        %p346 = pneg %p129
        %p347 = pneg %p126
        %p348 = pneg %p150
        %p349 = pneg %p147
        %p350 = pneg %p171
        %p351 = pneg %p168
        %p352 = pneg %p197
        %p353 = pneg %p194
        %p354 = scmp.lt.s32.totalorder %s24, 1
        %s355 = scalar_select %p354, %s24, 1
        %s356 = smul.addr %s355, 4
        %s357 = smul.addr %s356, 8
        %s358 = scalar_lea.vmem %s7, %s357
        %p359 = scmp.lt.s32.totalorder %s24, 1
        %s360 = scalar_select %p359, %s24, 1
        %s361 = smul.addr %s360, 4
        %s362 = smul.addr %s361, 8
        %s363 = scalar_lea.vmem %s7, %s362
        %v365 = vld [vmem:[%s308] sm:$0xff]
        %v366 = vld [vmem:[%s308 + $0x8] sm:$0xff]
        %v367 = vld [vmem:[%s308 + $0x10] sm:$0xff]
        %v368 = vld [vmem:[%s308 + $0x18] sm:$0xff]
        %v369 = vpack.c.bf16 %v366, %v365
        %v370 = vpack.c.bf16 %v368, %v367
        %v371 = vld [vmem:[%s1] sm:$0xf]
        %v372 = vld [vmem:[%s1 + $0x4] sm:$0xf]
        %v373 = vld [vmem:[%s1 + $0x8] sm:$0xf]
        %v374 = vld [vmem:[%s1 + $0xc] sm:$0xf]
        %v375 = vld [vmem:[#allocation4] sm:$0x1]
        %v377 = vlaneseq
        %v378 = vshrl.u32 %v377, 7
        %v379 = vsub.s32 0, %v378
        %v380 = vrot.slane %v375, %v379
        %v386 = vunpack.c.l.b16 %v371
        %v387 = vunpack.c.l.b16 %v372
        %v388 = vunpack.c.l.b16 %v373
        %v389 = vunpack.c.l.b16 %v374
        %v390 = vpack.c.b16 %v387, %v386
        %v391 = vpack.c.b16 %v389, %v388
        %vm394 = vcmask 261120
        %v396 = vsel %vm394, %v369, 0
        %v399 = vsel %vm394, %v370, 0
        %401 = vmatprep.subr.bf16.mxu0 0
        %402 = vmatpush1.bf16.msra.mxu0 0
        %403 = vmatprep.subr.bf16.mxu0 0
        %404 = vmatpush1.bf16.msra.mxu0 0
        %405 = vmatprep.subr.bf16.mxu0 0
        %406 = vmatpush1.bf16.msra.mxu0 0
        %407 = vmatprep.subr.bf16.mxu0 0
        %408 = vmatpush1.bf16.msra.mxu0 0
        %409 = vmatprep.subr.bf16.mxu0 0
        %410 = vmatpush1.bf16.msra.mxu0 0
        %411 = vmatprep.subr.bf16.mxu0 0
        %412 = vmatpush1.bf16.msra.mxu0 0
        %413 = vmatprep.subr.bf16.mxu0 0
        %414 = vmatpush1.bf16.msra.mxu0 %v391
        %415 = vmatprep.subr.bf16.mxu0 0
        %416 = vmatpush1.bf16.msra.mxu0 %v390
        %417 = vmatprep.subr.bf16.mxu0 0
        %418 = vmatpush2.bf16.msra.mxu0 0
        %419 = vmatprep.subr.bf16.mxu0 0
        %420 = vmatpush2.bf16.msra.mxu0 0
        %421 = vmatprep.subr.bf16.mxu0 0
        %422 = vmatpush2.bf16.msra.mxu0 0
        %423 = vmatprep.subr.bf16.mxu0 0
        %424 = vmatpush2.bf16.msra.mxu0 0
        %425 = vmatprep.subr.bf16.mxu0 0
        %426 = vmatpush2.bf16.msra.mxu0 0
        %427 = vmatprep.subr.bf16.mxu0 0
        %428 = vmatpush2.bf16.msra.mxu0 0
        %429 = vmatprep.subr.bf16.mxu0 0
        %430 = vmatpush2.bf16.msra.mxu0 0
        %431 = vmatprep.subr.bf16.mxu0 0
        %432 = vmatpush2.bf16.msra.mxu0 0
        %433 = vmatprep.mubr.bf16.mxu0 0
        %434 = vmatmul.mubr.bf16.gmra.mxu0 %v396
        %v435 = vpop.f32.mrf.mxu0
        %v436 = vadd.f32 %v380, %v435
        %v437 = vpop.f32.mrf.mxu0
        %v438 = vpop.f32.mrf.mxu0
        %v439 = vadd.f32 %v380, %v438
        %v440 = vpop.f32.mrf.mxu0
        %441 = vmatprep.mubr.bf16.mxu0 0
        %442 = vmatmul.mubr.bf16.gmra.mxu0 %v399
        %v443 = vpop.f32.mrf.mxu0
        %v444 = vadd.f32 %v380, %v443
        %v445 = vpop.f32.mrf.mxu0
        %v446 = vpop.f32.mrf.mxu0
        %v447 = vadd.f32 %v380, %v446
        %v448 = vpop.f32.mrf.mxu0
        %449 = vdwg.mxu0
        %v450 = vpack.c.bf16 %v439, %v436
        %v451 = vpack.c.bf16 %v447, %v444
        %454 = vrot.lane.b32.xlu0 %v450, 96
        %v455 = vpop.permute.xlu0 %454
        %456 = vrot.lane.b32.xlu0 %v451, 96
        %v457 = vpop.permute.xlu0 %456
        %vm458 = vcmask 64512
        %v460 = vsel %vm458, %v450, 0
        %v463 = vsel %vm458, %v451, 0
        %v466 = vsel %vm458, %v455, 0
        %v469 = vsel %vm458, %v457, 0
        %471 = vmatprep.subr.bf16.mxu0 0
        %472 = vmatpush1.bf16.xpose.msra.mxu0 0
        %473 = vmatprep.subr.bf16.mxu0 0
        %474 = vmatpush1.bf16.xpose.msra.mxu0 0
        %475 = vmatprep.subr.bf16.mxu0 0
        %476 = vmatpush1.bf16.xpose.msra.mxu0 0
        %477 = vmatprep.subr.bf16.mxu0 0
        %478 = vmatpush1.bf16.xpose.msra.mxu0 0
        %479 = vmatprep.subr.bf16.mxu0 0
        %480 = vmatpush1.bf16.xpose.msra.mxu0 0
        %481 = vmatprep.subr.bf16.mxu0 0
        %482 = vmatpush1.bf16.xpose.msra.mxu0 0
        %483 = vmatprep.subr.bf16.mxu0 0
        %484 = vmatpush1.bf16.xpose.msra.mxu0 %v469
        %485 = vmatprep.subr.bf16.mxu0 0
        %486 = vmatpush1.bf16.xpose.msra.mxu0 %v466
        %487 = vmatprep.subr.bf16.mxu0 0
        %488 = vmatpush2.bf16.xpose.msra.mxu0 0
        %489 = vmatprep.subr.bf16.mxu0 0
        %490 = vmatpush2.bf16.xpose.msra.mxu0 0
        %491 = vmatprep.subr.bf16.mxu0 0
        %492 = vmatpush2.bf16.xpose.msra.mxu0 0
        %493 = vmatprep.subr.bf16.mxu0 0
        %494 = vmatpush2.bf16.xpose.msra.mxu0 0
        %495 = vmatprep.subr.bf16.mxu0 0
        %496 = vmatpush2.bf16.xpose.msra.mxu0 0
        %497 = vmatprep.subr.bf16.mxu0 0
        %498 = vmatpush2.bf16.xpose.msra.mxu0 0
        %499 = vmatprep.subr.bf16.mxu0 0
        %500 = vmatpush2.bf16.xpose.msra.mxu0 0
        %501 = vmatprep.subr.bf16.mxu0 0
        %502 = vmatpush2.bf16.xpose.msra.mxu0 0
        %503 = vmatprep.mubr.bf16.mxu0 0
        %504 = vmatmul.mubr.bf16.gmra.mxu0 %v460
        %v505 = vpop.f32.mrf.mxu0
        %v506 = vadd.f32 0.0, %v505
        %v507 = vpop.f32.mrf.mxu0
        %v508 = vpop.f32.mrf.mxu0
        %v509 = vadd.f32 0.0, %v508
        %v510 = vpop.f32.mrf.mxu0
        %511 = vmatprep.mubr.bf16.mxu0 0
        %512 = vmatmul.mubr.bf16.gmra.mxu0 %v463
        %v513 = vpop.f32.mrf.mxu0
        %v514 = vadd.f32 0.0, %v513
        %v515 = vpop.f32.mrf.mxu0
        %v516 = vpop.f32.mrf.mxu0
        %v517 = vadd.f32 0.0, %v516
        %v518 = vpop.f32.mrf.mxu0
        %519 = vdwg.mxu0
        %v520 = vmul.f32 %v506, 0.17677669
        %v521 = vmul.f32 %v509, 0.17677669
        %v522 = vmul.f32 %v514, 0.17677669
        %v523 = vmul.f32 %v517, 0.17677669
        %v524 = vsel %vm394, %v520, -inf
        %525 = vmax.xlane.f32.xlu0 %v524
        %v526 = vpop.xlane.xlu0 %525
        %v527 = vsel %vm394, %v521, -inf
        %528 = vmax.xlane.f32.xlu0 %v527
        %v529 = vpop.xlane.xlu0 %528
        %v530 = vsel %vm394, %v522, -inf
        %531 = vmax.xlane.f32.xlu0 %v530
        %v532 = vpop.xlane.xlu0 %531
        %v533 = vsel %vm394, %v523, -inf
        %534 = vmax.xlane.f32.xlu0 %v533
        %v535 = vpop.xlane.xlu0 %534
        %v536 = vsub.f32 %v520, %v526
        %v537 = vsub.f32 %v521, %v529
        %v538 = vsub.f32 %v522, %v532
        %v539 = vsub.f32 %v523, %v535
        %v540 = vmul.f32 %v536, 1.442695
        %v541 = vpow.pop %v540
        %v542 = vmul.f32 %v537, 1.442695
        %v543 = vpow.pop %v542
        %v544 = vmul.f32 %v538, 1.442695
        %v545 = vpow.pop %v544
        %v546 = vmul.f32 %v539, 1.442695
        %v547 = vpow.pop %v546
        %v548 = vsel %vm394, %v541, 0.0
        %549 = vadd.xlane.f32.xlu0 %v548
        %v550 = vpop.xlane.xlu0 %549
        %v551 = vsel %vm394, %v543, 0.0
        %552 = vadd.xlane.f32.xlu0 %v551
        %v553 = vpop.xlane.xlu0 %552
        %v554 = vsel %vm394, %v545, 0.0
        %555 = vadd.xlane.f32.xlu0 %v554
        %v556 = vpop.xlane.xlu0 %555
        %v557 = vsel %vm394, %v547, 0.0
        %558 = vadd.xlane.f32.xlu0 %v557
        %v559 = vpop.xlane.xlu0 %558
        %v560 = vrcp.pop %v550
        %v561 = vrcp.pop %v553
        %v562 = vrcp.pop %v556
        %v563 = vrcp.pop %v559
        %v564 = vmul.f32 %v541, %v560
        %v565 = vmul.f32 %v543, %v561
        %v566 = vmul.f32 %v545, %v562
        %v567 = vmul.f32 %v547, %v563
        %v568 = vpack.c.bf16 %v565, %v564
        %v569 = vpack.c.bf16 %v567, %v566
        %570 = vrot.lane.b32.xlu0 %v450, 64
        %v571 = vpop.permute.xlu0 %570
        %572 = vrot.lane.b32.xlu0 %v451, 64
        %v573 = vpop.permute.xlu0 %572
        %v577 = vsel %vm394, %v568, 0
        %v580 = vsel %vm394, %v569, 0
        %582 = vmatprep.subr.bf16.mxu0 0
        %583 = vmatpush1.bf16.msra.mxu0 0
        %584 = vmatprep.subr.bf16.mxu0 0
        %585 = vmatpush1.bf16.msra.mxu0 0
        %586 = vmatprep.subr.bf16.mxu0 0
        %587 = vmatpush1.bf16.msra.mxu0 0
        %588 = vmatprep.subr.bf16.mxu0 0
        %589 = vmatpush1.bf16.msra.mxu0 0
        %590 = vmatprep.subr.bf16.mxu0 0
        %591 = vmatpush1.bf16.msra.mxu0 0
        %592 = vmatprep.subr.bf16.mxu0 0
        %593 = vmatpush1.bf16.msra.mxu0 0
        %594 = vmatprep.subr.bf16.mxu0 0
        %595 = vmatpush1.bf16.msra.mxu0 %v573
        %596 = vmatprep.subr.bf16.mxu0 0
        %597 = vmatpush1.bf16.msra.mxu0 %v571
        %598 = vmatprep.subr.bf16.mxu0 0
        %599 = vmatpush2.bf16.msra.mxu0 0
        %600 = vmatprep.subr.bf16.mxu0 0
        %601 = vmatpush2.bf16.msra.mxu0 0
        %602 = vmatprep.subr.bf16.mxu0 0
        %603 = vmatpush2.bf16.msra.mxu0 0
        %604 = vmatprep.subr.bf16.mxu0 0
        %605 = vmatpush2.bf16.msra.mxu0 0
        %606 = vmatprep.subr.bf16.mxu0 0
        %607 = vmatpush2.bf16.msra.mxu0 0
        %608 = vmatprep.subr.bf16.mxu0 0
        %609 = vmatpush2.bf16.msra.mxu0 0
        %610 = vmatprep.subr.bf16.mxu0 0
        %611 = vmatpush2.bf16.msra.mxu0 0
        %612 = vmatprep.subr.bf16.mxu0 0
        %613 = vmatpush2.bf16.msra.mxu0 0
        %614 = vmatprep.mubr.bf16.mxu0 0
        %615 = vmatmul.mubr.bf16.gmra.mxu0 %v577
        %v616 = vpop.f32.mrf.mxu0
        %v617 = vadd.f32 0.0, %v616
        %v618 = vpop.f32.mrf.mxu0
        %v619 = vpop.f32.mrf.mxu0
        %v620 = vadd.f32 0.0, %v619
        %v621 = vpop.f32.mrf.mxu0
        %622 = vmatprep.mubr.bf16.mxu0 0
        %623 = vmatmul.mubr.bf16.gmra.mxu0 %v580
        %v624 = vpop.f32.mrf.mxu0
        %v625 = vadd.f32 0.0, %v624
        %v626 = vpop.f32.mrf.mxu0
        %v627 = vpop.f32.mrf.mxu0
        %v628 = vadd.f32 0.0, %v627
        %v629 = vpop.f32.mrf.mxu0
        %630 = vdwg.mxu0
        %631 = vrot.lane.b32.xlu0 %v450, 120
        %v632 = vpop.permute.xlu0 %631
        %633 = vrot.lane.b32.xlu0 %v451, 120
        %v634 = vpop.permute.xlu0 %633
        %635 = vrot.lane.b32.xlu0 %v450, 88
        %v636 = vpop.permute.xlu0 %635
        %637 = vrot.lane.b32.xlu0 %v451, 88
        %v638 = vpop.permute.xlu0 %637
        %v640 = vsel %vm458, %v632, 0
        %v643 = vsel %vm458, %v634, 0
        %v646 = vsel %vm458, %v636, 0
        %v649 = vsel %vm458, %v638, 0
        %651 = vmatprep.subr.bf16.mxu0 0
        %652 = vmatpush1.bf16.xpose.msra.mxu0 0
        %653 = vmatprep.subr.bf16.mxu0 0
        %654 = vmatpush1.bf16.xpose.msra.mxu0 0
        %655 = vmatprep.subr.bf16.mxu0 0
        %656 = vmatpush1.bf16.xpose.msra.mxu0 0
        %657 = vmatprep.subr.bf16.mxu0 0
        %658 = vmatpush1.bf16.xpose.msra.mxu0 0
        %659 = vmatprep.subr.bf16.mxu0 0
        %660 = vmatpush1.bf16.xpose.msra.mxu0 0
        %661 = vmatprep.subr.bf16.mxu0 0
        %662 = vmatpush1.bf16.xpose.msra.mxu0 0
        %663 = vmatprep.subr.bf16.mxu0 0
        %664 = vmatpush1.bf16.xpose.msra.mxu0 %v649
        %665 = vmatprep.subr.bf16.mxu0 0
        %666 = vmatpush1.bf16.xpose.msra.mxu0 %v646
        %667 = vmatprep.subr.bf16.mxu0 0
        %668 = vmatpush2.bf16.xpose.msra.mxu0 0
        %669 = vmatprep.subr.bf16.mxu0 0
        %670 = vmatpush2.bf16.xpose.msra.mxu0 0
        %671 = vmatprep.subr.bf16.mxu0 0
        %672 = vmatpush2.bf16.xpose.msra.mxu0 0
        %673 = vmatprep.subr.bf16.mxu0 0
        %674 = vmatpush2.bf16.xpose.msra.mxu0 0
        %675 = vmatprep.subr.bf16.mxu0 0
        %676 = vmatpush2.bf16.xpose.msra.mxu0 0
        %677 = vmatprep.subr.bf16.mxu0 0
        %678 = vmatpush2.bf16.xpose.msra.mxu0 0
        %679 = vmatprep.subr.bf16.mxu0 0
        %680 = vmatpush2.bf16.xpose.msra.mxu0 0
        %681 = vmatprep.subr.bf16.mxu0 0
        %682 = vmatpush2.bf16.xpose.msra.mxu0 0
        %683 = vmatprep.mubr.bf16.mxu0 0
        %684 = vmatmul.mubr.bf16.gmra.mxu0 %v640
        %v685 = vpop.f32.mrf.mxu0
        %v686 = vadd.f32 0.0, %v685
        %v687 = vpop.f32.mrf.mxu0
        %v688 = vpop.f32.mrf.mxu0
        %v689 = vadd.f32 0.0, %v688
        %v690 = vpop.f32.mrf.mxu0
        %691 = vmatprep.mubr.bf16.mxu0 0
        %692 = vmatmul.mubr.bf16.gmra.mxu0 %v643
        %v693 = vpop.f32.mrf.mxu0
        %v694 = vadd.f32 0.0, %v693
        %v695 = vpop.f32.mrf.mxu0
        %v696 = vpop.f32.mrf.mxu0
        %v697 = vadd.f32 0.0, %v696
        %v698 = vpop.f32.mrf.mxu0
        %699 = vdwg.mxu0
        %v700 = vmul.f32 %v686, 0.17677669
        %v701 = vmul.f32 %v689, 0.17677669
        %v702 = vmul.f32 %v694, 0.17677669
        %v703 = vmul.f32 %v697, 0.17677669
        %v704 = vsel %vm394, %v700, -inf
        %705 = vmax.xlane.f32.xlu0 %v704
        %v706 = vpop.xlane.xlu0 %705
        %v707 = vsel %vm394, %v701, -inf
        %708 = vmax.xlane.f32.xlu0 %v707
        %v709 = vpop.xlane.xlu0 %708
        %v710 = vsel %vm394, %v702, -inf
        %711 = vmax.xlane.f32.xlu0 %v710
        %v712 = vpop.xlane.xlu0 %711
        %v713 = vsel %vm394, %v703, -inf
        %714 = vmax.xlane.f32.xlu0 %v713
        %v715 = vpop.xlane.xlu0 %714
        %v716 = vsub.f32 %v700, %v706
        %v717 = vsub.f32 %v701, %v709
        %v718 = vsub.f32 %v702, %v712
        %v719 = vsub.f32 %v703, %v715
        %v720 = vmul.f32 %v716, 1.442695
        %v721 = vpow.pop %v720
        %v722 = vmul.f32 %v717, 1.442695
        %v723 = vpow.pop %v722
        %v724 = vmul.f32 %v718, 1.442695
        %v725 = vpow.pop %v724
        %v726 = vmul.f32 %v719, 1.442695
        %v727 = vpow.pop %v726
        %v728 = vsel %vm394, %v721, 0.0
        %729 = vadd.xlane.f32.xlu0 %v728
        %v730 = vpop.xlane.xlu0 %729
        %v731 = vsel %vm394, %v723, 0.0
        %732 = vadd.xlane.f32.xlu0 %v731
        %v733 = vpop.xlane.xlu0 %732
        %v734 = vsel %vm394, %v725, 0.0
        %735 = vadd.xlane.f32.xlu0 %v734
        %v736 = vpop.xlane.xlu0 %735
        %v737 = vsel %vm394, %v727, 0.0
        %738 = vadd.xlane.f32.xlu0 %v737
        %v739 = vpop.xlane.xlu0 %738
        %v740 = vrcp.pop %v730
        %v741 = vrcp.pop %v733
        %v742 = vrcp.pop %v736
        %v743 = vrcp.pop %v739
        %v744 = vmul.f32 %v721, %v740
        %v745 = vmul.f32 %v723, %v741
        %v746 = vmul.f32 %v725, %v742
        %v747 = vmul.f32 %v727, %v743
        %v748 = vpack.c.bf16 %v745, %v744
        %v749 = vpack.c.bf16 %v747, %v746
        %750 = vrot.lane.b32.xlu0 %v450, 56
        %v751 = vpop.permute.xlu0 %750
        %752 = vrot.lane.b32.xlu0 %v451, 56
        %v753 = vpop.permute.xlu0 %752
        %v757 = vsel %vm394, %v748, 0
        %v760 = vsel %vm394, %v749, 0
        %762 = vmatprep.subr.bf16.mxu0 0
        %763 = vmatpush1.bf16.msra.mxu0 0
        %764 = vmatprep.subr.bf16.mxu0 0
        %765 = vmatpush1.bf16.msra.mxu0 0
        %766 = vmatprep.subr.bf16.mxu0 0
        %767 = vmatpush1.bf16.msra.mxu0 0
        %768 = vmatprep.subr.bf16.mxu0 0
        %769 = vmatpush1.bf16.msra.mxu0 0
        %770 = vmatprep.subr.bf16.mxu0 0
        %771 = vmatpush1.bf16.msra.mxu0 0
        %772 = vmatprep.subr.bf16.mxu0 0
        %773 = vmatpush1.bf16.msra.mxu0 0
        %774 = vmatprep.subr.bf16.mxu0 0
        %775 = vmatpush1.bf16.msra.mxu0 %v753
        %776 = vmatprep.subr.bf16.mxu0 0
        %777 = vmatpush1.bf16.msra.mxu0 %v751
        %778 = vmatprep.subr.bf16.mxu0 0
        %779 = vmatpush2.bf16.msra.mxu0 0
        %780 = vmatprep.subr.bf16.mxu0 0
        %781 = vmatpush2.bf16.msra.mxu0 0
        %782 = vmatprep.subr.bf16.mxu0 0
        %783 = vmatpush2.bf16.msra.mxu0 0
        %784 = vmatprep.subr.bf16.mxu0 0
        %785 = vmatpush2.bf16.msra.mxu0 0
        %786 = vmatprep.subr.bf16.mxu0 0
        %787 = vmatpush2.bf16.msra.mxu0 0
        %788 = vmatprep.subr.bf16.mxu0 0
        %789 = vmatpush2.bf16.msra.mxu0 0
        %790 = vmatprep.subr.bf16.mxu0 0
        %791 = vmatpush2.bf16.msra.mxu0 0
        %792 = vmatprep.subr.bf16.mxu0 0
        %793 = vmatpush2.bf16.msra.mxu0 0
        %794 = vmatprep.mubr.bf16.mxu0 0
        %795 = vmatmul.mubr.bf16.gmra.mxu0 %v757
        %v796 = vpop.f32.mrf.mxu0
        %v797 = vadd.f32 0.0, %v796
        %v798 = vpop.f32.mrf.mxu0
        %v799 = vpop.f32.mrf.mxu0
        %v800 = vadd.f32 0.0, %v799
        %v801 = vpop.f32.mrf.mxu0
        %802 = vmatprep.mubr.bf16.mxu0 0
        %803 = vmatmul.mubr.bf16.gmra.mxu0 %v760
        %v804 = vpop.f32.mrf.mxu0
        %v805 = vadd.f32 0.0, %v804
        %v806 = vpop.f32.mrf.mxu0
        %v807 = vpop.f32.mrf.mxu0
        %v808 = vadd.f32 0.0, %v807
        %v809 = vpop.f32.mrf.mxu0
        %810 = vdwg.mxu0
        %811 = vrot.lane.b32.xlu0 %v450, 112
        %v812 = vpop.permute.xlu0 %811
        %813 = vrot.lane.b32.xlu0 %v451, 112
        %v814 = vpop.permute.xlu0 %813
        %815 = vrot.lane.b32.xlu0 %v450, 80
        %v816 = vpop.permute.xlu0 %815
        %817 = vrot.lane.b32.xlu0 %v451, 80
        %v818 = vpop.permute.xlu0 %817
        %v820 = vsel %vm458, %v812, 0
        %v823 = vsel %vm458, %v814, 0
        %v826 = vsel %vm458, %v816, 0
        %v829 = vsel %vm458, %v818, 0
        %831 = vmatprep.subr.bf16.mxu0 0
        %832 = vmatpush1.bf16.xpose.msra.mxu0 0
        %833 = vmatprep.subr.bf16.mxu0 0
        %834 = vmatpush1.bf16.xpose.msra.mxu0 0
        %835 = vmatprep.subr.bf16.mxu0 0
        %836 = vmatpush1.bf16.xpose.msra.mxu0 0
        %837 = vmatprep.subr.bf16.mxu0 0
        %838 = vmatpush1.bf16.xpose.msra.mxu0 0
        %839 = vmatprep.subr.bf16.mxu0 0
        %840 = vmatpush1.bf16.xpose.msra.mxu0 0
        %841 = vmatprep.subr.bf16.mxu0 0
        %842 = vmatpush1.bf16.xpose.msra.mxu0 0
        %843 = vmatprep.subr.bf16.mxu0 0
        %844 = vmatpush1.bf16.xpose.msra.mxu0 %v829
        %845 = vmatprep.subr.bf16.mxu0 0
        %846 = vmatpush1.bf16.xpose.msra.mxu0 %v826
        %847 = vmatprep.subr.bf16.mxu0 0
        %848 = vmatpush2.bf16.xpose.msra.mxu0 0
        %849 = vmatprep.subr.bf16.mxu0 0
        %850 = vmatpush2.bf16.xpose.msra.mxu0 0
        %851 = vmatprep.subr.bf16.mxu0 0
        %852 = vmatpush2.bf16.xpose.msra.mxu0 0
        %853 = vmatprep.subr.bf16.mxu0 0
        %854 = vmatpush2.bf16.xpose.msra.mxu0 0
        %855 = vmatprep.subr.bf16.mxu0 0
        %856 = vmatpush2.bf16.xpose.msra.mxu0 0
        %857 = vmatprep.subr.bf16.mxu0 0
        %858 = vmatpush2.bf16.xpose.msra.mxu0 0
        %859 = vmatprep.subr.bf16.mxu0 0
        %860 = vmatpush2.bf16.xpose.msra.mxu0 0
        %861 = vmatprep.subr.bf16.mxu0 0
        %862 = vmatpush2.bf16.xpose.msra.mxu0 0
        %863 = vmatprep.mubr.bf16.mxu0 0
        %864 = vmatmul.mubr.bf16.gmra.mxu0 %v820
        %v865 = vpop.f32.mrf.mxu0
        %v866 = vadd.f32 0.0, %v865
        %v867 = vpop.f32.mrf.mxu0
        %v868 = vpop.f32.mrf.mxu0
        %v869 = vadd.f32 0.0, %v868
        %v870 = vpop.f32.mrf.mxu0
        %871 = vmatprep.mubr.bf16.mxu0 0
        %872 = vmatmul.mubr.bf16.gmra.mxu0 %v823
        %v873 = vpop.f32.mrf.mxu0
        %v874 = vadd.f32 0.0, %v873
        %v875 = vpop.f32.mrf.mxu0
        %v876 = vpop.f32.mrf.mxu0
        %v877 = vadd.f32 0.0, %v876
        %v878 = vpop.f32.mrf.mxu0
        %879 = vdwg.mxu0
        %v880 = vmul.f32 %v866, 0.17677669
        %v881 = vmul.f32 %v869, 0.17677669
        %v882 = vmul.f32 %v874, 0.17677669
        %v883 = vmul.f32 %v877, 0.17677669
        %v884 = vsel %vm394, %v880, -inf
        %885 = vmax.xlane.f32.xlu0 %v884
        %v886 = vpop.xlane.xlu0 %885
        %v887 = vsel %vm394, %v881, -inf
        %888 = vmax.xlane.f32.xlu0 %v887
        %v889 = vpop.xlane.xlu0 %888
        %v890 = vsel %vm394, %v882, -inf
        %891 = vmax.xlane.f32.xlu0 %v890
        %v892 = vpop.xlane.xlu0 %891
        %v893 = vsel %vm394, %v883, -inf
        %894 = vmax.xlane.f32.xlu0 %v893
        %v895 = vpop.xlane.xlu0 %894
        %v896 = vsub.f32 %v880, %v886
        %v897 = vsub.f32 %v881, %v889
        %v898 = vsub.f32 %v882, %v892
        %v899 = vsub.f32 %v883, %v895
        %v900 = vmul.f32 %v896, 1.442695
        %v901 = vpow.pop %v900
        %v902 = vmul.f32 %v897, 1.442695
        %v903 = vpow.pop %v902
        %v904 = vmul.f32 %v898, 1.442695
        %v905 = vpow.pop %v904
        %v906 = vmul.f32 %v899, 1.442695
        %v907 = vpow.pop %v906
        %v908 = vsel %vm394, %v901, 0.0
        %909 = vadd.xlane.f32.xlu0 %v908
        %v910 = vpop.xlane.xlu0 %909
        %v911 = vsel %vm394, %v903, 0.0
        %912 = vadd.xlane.f32.xlu0 %v911
        %v913 = vpop.xlane.xlu0 %912
        %v914 = vsel %vm394, %v905, 0.0
        %915 = vadd.xlane.f32.xlu0 %v914
        %v916 = vpop.xlane.xlu0 %915
        %v917 = vsel %vm394, %v907, 0.0
        %918 = vadd.xlane.f32.xlu0 %v917
        %v919 = vpop.xlane.xlu0 %918
        %v920 = vrcp.pop %v910
        %v921 = vrcp.pop %v913
        %v922 = vrcp.pop %v916
        %v923 = vrcp.pop %v919
        %v924 = vmul.f32 %v901, %v920
        %v925 = vmul.f32 %v903, %v921
        %v926 = vmul.f32 %v905, %v922
        %v927 = vmul.f32 %v907, %v923
        %v928 = vpack.c.bf16 %v925, %v924
        %v929 = vpack.c.bf16 %v927, %v926
        %930 = vrot.lane.b32.xlu0 %v450, 48
        %v931 = vpop.permute.xlu0 %930
        %932 = vrot.lane.b32.xlu0 %v451, 48
        %v933 = vpop.permute.xlu0 %932
        %v937 = vsel %vm394, %v928, 0
        %v940 = vsel %vm394, %v929, 0
        %942 = vmatprep.subr.bf16.mxu0 0
        %943 = vmatpush1.bf16.msra.mxu0 0
        %944 = vmatprep.subr.bf16.mxu0 0
        %945 = vmatpush1.bf16.msra.mxu0 0
        %946 = vmatprep.subr.bf16.mxu0 0
        %947 = vmatpush1.bf16.msra.mxu0 0
        %948 = vmatprep.subr.bf16.mxu0 0
        %949 = vmatpush1.bf16.msra.mxu0 0
        %950 = vmatprep.subr.bf16.mxu0 0
        %951 = vmatpush1.bf16.msra.mxu0 0
        %952 = vmatprep.subr.bf16.mxu0 0
        %953 = vmatpush1.bf16.msra.mxu0 0
        %954 = vmatprep.subr.bf16.mxu0 0
        %955 = vmatpush1.bf16.msra.mxu0 %v933
        %956 = vmatprep.subr.bf16.mxu0 0
        %957 = vmatpush1.bf16.msra.mxu0 %v931
        %958 = vmatprep.subr.bf16.mxu0 0
        %959 = vmatpush2.bf16.msra.mxu0 0
        %960 = vmatprep.subr.bf16.mxu0 0
        %961 = vmatpush2.bf16.msra.mxu0 0
        %962 = vmatprep.subr.bf16.mxu0 0
        %963 = vmatpush2.bf16.msra.mxu0 0
        %964 = vmatprep.subr.bf16.mxu0 0
        %965 = vmatpush2.bf16.msra.mxu0 0
        %966 = vmatprep.subr.bf16.mxu0 0
        %967 = vmatpush2.bf16.msra.mxu0 0
        %968 = vmatprep.subr.bf16.mxu0 0
        %969 = vmatpush2.bf16.msra.mxu0 0
        %970 = vmatprep.subr.bf16.mxu0 0
        %971 = vmatpush2.bf16.msra.mxu0 0
        %972 = vmatprep.subr.bf16.mxu0 0
        %973 = vmatpush2.bf16.msra.mxu0 0
        %974 = vmatprep.mubr.bf16.mxu0 0
        %975 = vmatmul.mubr.bf16.gmra.mxu0 %v937
        %v976 = vpop.f32.mrf.mxu0
        %v977 = vadd.f32 0.0, %v976
        %v978 = vpop.f32.mrf.mxu0
        %v979 = vpop.f32.mrf.mxu0
        %v980 = vadd.f32 0.0, %v979
        %v981 = vpop.f32.mrf.mxu0
        %982 = vmatprep.mubr.bf16.mxu0 0
        %983 = vmatmul.mubr.bf16.gmra.mxu0 %v940
        %v984 = vpop.f32.mrf.mxu0
        %v985 = vadd.f32 0.0, %v984
        %v986 = vpop.f32.mrf.mxu0
        %v987 = vpop.f32.mrf.mxu0
        %v988 = vadd.f32 0.0, %v987
        %v989 = vpop.f32.mrf.mxu0
        %990 = vdwg.mxu0
        %991 = vrot.lane.b32.xlu0 %v450, 104
        %v992 = vpop.permute.xlu0 %991
        %993 = vrot.lane.b32.xlu0 %v451, 104
        %v994 = vpop.permute.xlu0 %993
        %995 = vrot.lane.b32.xlu0 %v450, 72
        %v996 = vpop.permute.xlu0 %995
        %997 = vrot.lane.b32.xlu0 %v451, 72
        %v998 = vpop.permute.xlu0 %997
        %v1000 = vsel %vm458, %v992, 0
        %v1003 = vsel %vm458, %v994, 0
        %v1006 = vsel %vm458, %v996, 0
        %v1009 = vsel %vm458, %v998, 0
        %1011 = vmatprep.subr.bf16.mxu0 0
        %1012 = vmatpush1.bf16.xpose.msra.mxu0 0
        %1013 = vmatprep.subr.bf16.mxu0 0
        %1014 = vmatpush1.bf16.xpose.msra.mxu0 0
        %1015 = vmatprep.subr.bf16.mxu0 0
        %1016 = vmatpush1.bf16.xpose.msra.mxu0 0
        %1017 = vmatprep.subr.bf16.mxu0 0
        %1018 = vmatpush1.bf16.xpose.msra.mxu0 0
        %1019 = vmatprep.subr.bf16.mxu0 0
        %1020 = vmatpush1.bf16.xpose.msra.mxu0 0
        %1021 = vmatprep.subr.bf16.mxu0 0
        %1022 = vmatpush1.bf16.xpose.msra.mxu0 0
        %1023 = vmatprep.subr.bf16.mxu0 0
        %1024 = vmatpush1.bf16.xpose.msra.mxu0 %v1009
        %1025 = vmatprep.subr.bf16.mxu0 0
        %1026 = vmatpush1.bf16.xpose.msra.mxu0 %v1006
        %1027 = vmatprep.subr.bf16.mxu0 0
        %1028 = vmatpush2.bf16.xpose.msra.mxu0 0
        %1029 = vmatprep.subr.bf16.mxu0 0
        %1030 = vmatpush2.bf16.xpose.msra.mxu0 0
        %1031 = vmatprep.subr.bf16.mxu0 0
        %1032 = vmatpush2.bf16.xpose.msra.mxu0 0
        %1033 = vmatprep.subr.bf16.mxu0 0
        %1034 = vmatpush2.bf16.xpose.msra.mxu0 0
        %1035 = vmatprep.subr.bf16.mxu0 0
        %1036 = vmatpush2.bf16.xpose.msra.mxu0 0
        %1037 = vmatprep.subr.bf16.mxu0 0
        %1038 = vmatpush2.bf16.xpose.msra.mxu0 0
        %1039 = vmatprep.subr.bf16.mxu0 0
        %1040 = vmatpush2.bf16.xpose.msra.mxu0 0
        %1041 = vmatprep.subr.bf16.mxu0 0
        %1042 = vmatpush2.bf16.xpose.msra.mxu0 0
        %1043 = vmatprep.mubr.bf16.mxu0 0
        %1044 = vmatmul.mubr.bf16.gmra.mxu0 %v1000
        %v1045 = vpop.f32.mrf.mxu0
        %v1046 = vadd.f32 0.0, %v1045
        %v1047 = vpop.f32.mrf.mxu0
        %v1048 = vpop.f32.mrf.mxu0
        %v1049 = vadd.f32 0.0, %v1048
        %v1050 = vpop.f32.mrf.mxu0
        %1051 = vmatprep.mubr.bf16.mxu0 0
        %1052 = vmatmul.mubr.bf16.gmra.mxu0 %v1003
        %v1053 = vpop.f32.mrf.mxu0
        %v1054 = vadd.f32 0.0, %v1053
        %v1055 = vpop.f32.mrf.mxu0
        %v1056 = vpop.f32.mrf.mxu0
        %v1057 = vadd.f32 0.0, %v1056
        %v1058 = vpop.f32.mrf.mxu0
        %1059 = vdwg.mxu0
        %v1060 = vmul.f32 %v1046, 0.17677669
        %v1061 = vmul.f32 %v1049, 0.17677669
        %v1062 = vmul.f32 %v1054, 0.17677669
        %v1063 = vmul.f32 %v1057, 0.17677669
        %v1064 = vsel %vm394, %v1060, -inf
        %1065 = vmax.xlane.f32.xlu0 %v1064
        %v1066 = vpop.xlane.xlu0 %1065
        %v1067 = vsel %vm394, %v1061, -inf
        %1068 = vmax.xlane.f32.xlu0 %v1067
        %v1069 = vpop.xlane.xlu0 %1068
        %v1070 = vsel %vm394, %v1062, -inf
        %1071 = vmax.xlane.f32.xlu0 %v1070
        %v1072 = vpop.xlane.xlu0 %1071
        %v1073 = vsel %vm394, %v1063, -inf
        %1074 = vmax.xlane.f32.xlu0 %v1073
        %v1075 = vpop.xlane.xlu0 %1074
        %v1076 = vsub.f32 %v1060, %v1066
        %v1077 = vsub.f32 %v1061, %v1069
        %v1078 = vsub.f32 %v1062, %v1072
        %v1079 = vsub.f32 %v1063, %v1075
        %v1080 = vmul.f32 %v1076, 1.442695
        %v1081 = vpow.pop %v1080
        %v1082 = vmul.f32 %v1077, 1.442695
        %v1083 = vpow.pop %v1082
        %v1084 = vmul.f32 %v1078, 1.442695
        %v1085 = vpow.pop %v1084
        %v1086 = vmul.f32 %v1079, 1.442695
        %v1087 = vpow.pop %v1086
        %v1088 = vsel %vm394, %v1081, 0.0
        %1089 = vadd.xlane.f32.xlu0 %v1088
        %v1090 = vpop.xlane.xlu0 %1089
        %v1091 = vsel %vm394, %v1083, 0.0
        %1092 = vadd.xlane.f32.xlu0 %v1091
        %v1093 = vpop.xlane.xlu0 %1092
        %v1094 = vsel %vm394, %v1085, 0.0
        %1095 = vadd.xlane.f32.xlu0 %v1094
        %v1096 = vpop.xlane.xlu0 %1095
        %v1097 = vsel %vm394, %v1087, 0.0
        %1098 = vadd.xlane.f32.xlu0 %v1097
        %v1099 = vpop.xlane.xlu0 %1098
        %v1100 = vrcp.pop %v1090
        %v1101 = vrcp.pop %v1093
        %v1102 = vrcp.pop %v1096
        %v1103 = vrcp.pop %v1099
        %v1104 = vmul.f32 %v1081, %v1100
        %v1105 = vmul.f32 %v1083, %v1101
        %v1106 = vmul.f32 %v1085, %v1102
        %v1107 = vmul.f32 %v1087, %v1103
        %v1108 = vpack.c.bf16 %v1105, %v1104
        %v1109 = vpack.c.bf16 %v1107, %v1106
        %1110 = vrot.lane.b32.xlu0 %v450, 40
        %v1111 = vpop.permute.xlu0 %1110
        %1112 = vrot.lane.b32.xlu0 %v451, 40
        %v1113 = vpop.permute.xlu0 %1112
        %v1117 = vsel %vm394, %v1108, 0
        %v1120 = vsel %vm394, %v1109, 0
        %1122 = vmatprep.subr.bf16.mxu0 0
        %1123 = vmatpush1.bf16.msra.mxu0 0
        %1124 = vmatprep.subr.bf16.mxu0 0
        %1125 = vmatpush1.bf16.msra.mxu0 0
        %1126 = vmatprep.subr.bf16.mxu0 0
        %1127 = vmatpush1.bf16.msra.mxu0 0
        %1128 = vmatprep.subr.bf16.mxu0 0
        %1129 = vmatpush1.bf16.msra.mxu0 0
        %1130 = vmatprep.subr.bf16.mxu0 0
        %1131 = vmatpush1.bf16.msra.mxu0 0
        %1132 = vmatprep.subr.bf16.mxu0 0
        %1133 = vmatpush1.bf16.msra.mxu0 0
        %1134 = vmatprep.subr.bf16.mxu0 0
        %1135 = vmatpush1.bf16.msra.mxu0 %v1113
        %1136 = vmatprep.subr.bf16.mxu0 0
        %1137 = vmatpush1.bf16.msra.mxu0 %v1111
        %1138 = vmatprep.subr.bf16.mxu0 0
        %1139 = vmatpush2.bf16.msra.mxu0 0
        %1140 = vmatprep.subr.bf16.mxu0 0
        %1141 = vmatpush2.bf16.msra.mxu0 0
        %1142 = vmatprep.subr.bf16.mxu0 0
        %1143 = vmatpush2.bf16.msra.mxu0 0
        %1144 = vmatprep.subr.bf16.mxu0 0
        %1145 = vmatpush2.bf16.msra.mxu0 0
        %1146 = vmatprep.subr.bf16.mxu0 0
        %1147 = vmatpush2.bf16.msra.mxu0 0
        %1148 = vmatprep.subr.bf16.mxu0 0
        %1149 = vmatpush2.bf16.msra.mxu0 0
        %1150 = vmatprep.subr.bf16.mxu0 0
        %1151 = vmatpush2.bf16.msra.mxu0 0
        %1152 = vmatprep.subr.bf16.mxu0 0
        %1153 = vmatpush2.bf16.msra.mxu0 0
        %1154 = vmatprep.mubr.bf16.mxu0 0
        %1155 = vmatmul.mubr.bf16.gmra.mxu0 %v1117
        %v1156 = vpop.f32.mrf.mxu0
        %v1157 = vadd.f32 0.0, %v1156
        %v1158 = vpop.f32.mrf.mxu0
        %v1159 = vpop.f32.mrf.mxu0
        %v1160 = vadd.f32 0.0, %v1159
        %v1161 = vpop.f32.mrf.mxu0
        %1162 = vmatprep.mubr.bf16.mxu0 0
        %1163 = vmatmul.mubr.bf16.gmra.mxu0 %v1120
        %v1164 = vpop.f32.mrf.mxu0
        %v1165 = vadd.f32 0.0, %v1164
        %v1166 = vpop.f32.mrf.mxu0
        %v1167 = vpop.f32.mrf.mxu0
        %v1168 = vadd.f32 0.0, %v1167
        %v1169 = vpop.f32.mrf.mxu0
        %1170 = vdwg.mxu0
        %1175 = vrot.lane.b32.xlu0 %v797, 8
        %v1176 = vpop.permute.xlu0 %1175
        %1177 = vrot.lane.b32.xlu0 %v800, 8
        %v1178 = vpop.permute.xlu0 %1177
        %1179 = vrot.lane.b32.xlu0 %v805, 8
        %v1180 = vpop.permute.xlu0 %1179
        %1181 = vrot.lane.b32.xlu0 %v808, 8
        %v1182 = vpop.permute.xlu0 %1181
        %1191 = vrot.lane.b32.xlu0 %v977, 16
        %v1192 = vpop.permute.xlu0 %1191
        %1193 = vrot.lane.b32.xlu0 %v980, 16
        %v1194 = vpop.permute.xlu0 %1193
        %1195 = vrot.lane.b32.xlu0 %v985, 16
        %v1196 = vpop.permute.xlu0 %1195
        %1197 = vrot.lane.b32.xlu0 %v988, 16
        %v1198 = vpop.permute.xlu0 %1197
        %1207 = vrot.lane.b32.xlu0 %v1157, 24
        %v1208 = vpop.permute.xlu0 %1207
        %1209 = vrot.lane.b32.xlu0 %v1160, 24
        %v1210 = vpop.permute.xlu0 %1209
        %1211 = vrot.lane.b32.xlu0 %v1165, 24
        %v1212 = vpop.permute.xlu0 %1211
        %1213 = vrot.lane.b32.xlu0 %v1168, 24
        %v1214 = vpop.permute.xlu0 %1213
        %v1219 = vsel %vm458, %v617, %v1176
        %v1220 = vsel %vm458, %v620, %v1178
        %v1221 = vsel %vm458, %v625, %v1180
        %v1222 = vsel %vm458, %v628, %v1182
        %vm1223 = vcmask 130048
        %v1224 = vsel %vm1223, %v1219, %v1192
        %v1225 = vsel %vm1223, %v1220, %v1194
        %v1226 = vsel %vm1223, %v1221, %v1196
        %v1227 = vsel %vm1223, %v1222, %v1198
        %vm1228 = vcmask 195584
        %v1229 = vsel %vm1228, %v1224, %v1208
        %v1230 = vsel %vm1228, %v1225, %v1210
        %v1231 = vsel %vm1228, %v1226, %v1212
        %v1232 = vsel %vm1228, %v1227, %v1214
        %v1233 = vpack.c.bf16 %v1230, %v1229
        %v1234 = vpack.c.bf16 %v1232, %v1231
        %v1235 = vld [vmem:[#allocation6] sm:$0xf]
        %v1236 = vld [vmem:[#allocation6 + $0x4] sm:$0xf]
        %v1237 = vld [vmem:[#allocation6 + $0x8] sm:$0xf]
        %v1238 = vld [vmem:[#allocation6 + $0xc] sm:$0xf]
        %v1239 = vld [vmem:[#allocation7] sm:$0x1]
        %v1241 = vlaneseq
        %v1242 = vshrl.u32 %v1241, 7
        %v1243 = vsub.s32 0, %v1242
        %v1244 = vrot.slane %v1239, %v1243
        %v1250 = vunpack.c.l.b16 %v1235
        %v1251 = vunpack.c.l.b16 %v1236
        %v1252 = vunpack.c.l.b16 %v1237
        %v1253 = vunpack.c.l.b16 %v1238
        %v1254 = vpack.c.b16 %v1251, %v1250
        %v1255 = vpack.c.b16 %v1253, %v1252
        %v1259 = vsel %vm394, %v1233, 0
        %v1262 = vsel %vm394, %v1234, 0
        %1264 = vmatprep.subr.bf16.mxu0 0
        %1265 = vmatpush1.bf16.msra.mxu0 0
        %1266 = vmatprep.subr.bf16.mxu0 0
        %1267 = vmatpush1.bf16.msra.mxu0 0
        %1268 = vmatprep.subr.bf16.mxu0 0
        %1269 = vmatpush1.bf16.msra.mxu0 0
        %1270 = vmatprep.subr.bf16.mxu0 0
        %1271 = vmatpush1.bf16.msra.mxu0 0
        %1272 = vmatprep.subr.bf16.mxu0 0
        %1273 = vmatpush1.bf16.msra.mxu0 0
        %1274 = vmatprep.subr.bf16.mxu0 0
        %1275 = vmatpush1.bf16.msra.mxu0 0
        %1276 = vmatprep.subr.bf16.mxu0 0
        %1277 = vmatpush1.bf16.msra.mxu0 %v1255
        %1278 = vmatprep.subr.bf16.mxu0 0
        %1279 = vmatpush1.bf16.msra.mxu0 %v1254
        %1280 = vmatprep.subr.bf16.mxu0 0
        %1281 = vmatpush2.bf16.msra.mxu0 0
        %1282 = vmatprep.subr.bf16.mxu0 0
        %1283 = vmatpush2.bf16.msra.mxu0 0
        %1284 = vmatprep.subr.bf16.mxu0 0
        %1285 = vmatpush2.bf16.msra.mxu0 0
        %1286 = vmatprep.subr.bf16.mxu0 0
        %1287 = vmatpush2.bf16.msra.mxu0 0
        %1288 = vmatprep.subr.bf16.mxu0 0
        %1289 = vmatpush2.bf16.msra.mxu0 0
        %1290 = vmatprep.subr.bf16.mxu0 0
        %1291 = vmatpush2.bf16.msra.mxu0 0
        %1292 = vmatprep.subr.bf16.mxu0 0
        %1293 = vmatpush2.bf16.msra.mxu0 0
        %1294 = vmatprep.subr.bf16.mxu0 0
        %1295 = vmatpush2.bf16.msra.mxu0 0
        %1296 = vmatprep.mubr.bf16.mxu0 0
        %1297 = vmatmul.mubr.bf16.gmra.mxu0 %v1259
        %v1298 = vpop.f32.mrf.mxu0
        %v1299 = vadd.f32 %v1244, %v1298
        %v1300 = vpop.f32.mrf.mxu0
        %v1301 = vpop.f32.mrf.mxu0
        %v1302 = vadd.f32 %v1244, %v1301
        %v1303 = vpop.f32.mrf.mxu0
        %1304 = vmatprep.mubr.bf16.mxu0 0
        %1305 = vmatmul.mubr.bf16.gmra.mxu0 %v1262
        %v1306 = vpop.f32.mrf.mxu0
        %v1307 = vadd.f32 %v1244, %v1306
        %v1308 = vpop.f32.mrf.mxu0
        %v1309 = vpop.f32.mrf.mxu0
        %v1310 = vadd.f32 %v1244, %v1309
        %v1311 = vpop.f32.mrf.mxu0
        %1312 = vdwg.mxu0
        %v1313 = vadd.f32 %v1299, %v365
        %v1314 = vadd.f32 %v1302, %v366
        %v1315 = vadd.f32 %v1307, %v367
        %v1316 = vadd.f32 %v1310, %v368
        %v1317 = vsel %vm394, %v1313, 0.0
        %1318 = vadd.xlane.f32.xlu0 %v1317
        %v1319 = vpop.xlane.xlu0 %1318
        %v1320 = vsel %vm394, %v1314, 0.0
        %1321 = vadd.xlane.f32.xlu0 %v1320
        %v1322 = vpop.xlane.xlu0 %1321
        %v1323 = vsel %vm394, %v1315, 0.0
        %1324 = vadd.xlane.f32.xlu0 %v1323
        %v1325 = vpop.xlane.xlu0 %1324
        %v1326 = vsel %vm394, %v1316, 0.0
        %1327 = vadd.xlane.f32.xlu0 %v1326
        %v1328 = vpop.xlane.xlu0 %1327
        %v1329 = vrcp.pop 32.0
        %v1330 = vmul.f32 %v1319, %v1329
        %v1331 = vmul.f32 %v1322, %v1329
        %v1332 = vmul.f32 %v1325, %v1329
        %v1333 = vmul.f32 %v1328, %v1329
        %v1334 = vsub.f32 %v1313, %v1330
        %v1335 = vsub.f32 %v1314, %v1331
        %v1336 = vsub.f32 %v1315, %v1332
        %v1337 = vsub.f32 %v1316, %v1333
        %v1338 = vmul.f32 %v1334, %v1334
        %v1339 = vmul.f32 %v1335, %v1335
        %v1340 = vmul.f32 %v1336, %v1336
        %v1341 = vmul.f32 %v1337, %v1337
        %v1342 = vsel %vm394, %v1338, 0.0
        %1343 = vadd.xlane.f32.xlu0 %v1342
        %v1344 = vpop.xlane.xlu0 %1343
        %v1345 = vsel %vm394, %v1339, 0.0
        %1346 = vadd.xlane.f32.xlu0 %v1345
        %v1347 = vpop.xlane.xlu0 %1346
        %v1348 = vsel %vm394, %v1340, 0.0
        %1349 = vadd.xlane.f32.xlu0 %v1348
        %v1350 = vpop.xlane.xlu0 %1349
        %v1351 = vsel %vm394, %v1341, 0.0
        %1352 = vadd.xlane.f32.xlu0 %v1351
        %v1353 = vpop.xlane.xlu0 %1352
        %v1354 = vmul.f32 %v1344, %v1329
        %v1355 = vmul.f32 %v1347, %v1329
        %v1356 = vmul.f32 %v1350, %v1329
        %v1357 = vmul.f32 %v1353, %v1329
        %v1358 = vadd.f32 %v1354, 1e-05
        %v1359 = vadd.f32 %v1355, 1e-05
        %v1360 = vadd.f32 %v1356, 1e-05
        %v1361 = vadd.f32 %v1357, 1e-05
        %v1362 = vrsqrt.pop %v1358
        %v1363 = vrsqrt.pop %v1359
        %v1364 = vrsqrt.pop %v1360
        %v1365 = vrsqrt.pop %v1361
        %v1366 = vmul.f32 %v1334, %v1362
        %v1367 = vmul.f32 %v1335, %v1363
        %v1368 = vmul.f32 %v1336, %v1364
        %v1369 = vmul.f32 %v1337, %v1365
        %v1370 = vld [vmem:[#allocation9] sm:$0x1]
        %v1372 = vlaneseq
        %v1373 = vshrl.u32 %v1372, 7
        %v1374 = vsub.s32 0, %v1373
        %v1375 = vrot.slane %v1370, %v1374
        %v1377 = vmul.f32 %v1366, %v1375
        %v1378 = vmul.f32 %v1367, %v1375
        %v1379 = vmul.f32 %v1368, %v1375
        %v1380 = vmul.f32 %v1369, %v1375
        %v1381 = vld [vmem:[#allocation10] sm:$0x1]
        %v1383 = vlaneseq
        %v1384 = vshrl.u32 %v1383, 7
        %v1385 = vsub.s32 0, %v1384
        %v1386 = vrot.slane %v1381, %v1385
        %v1388 = vadd.f32 %v1377, %v1386
        %v1389 = vadd.f32 %v1378, %v1386
        %v1390 = vadd.f32 %v1379, %v1386
        %v1391 = vadd.f32 %v1380, %v1386
        %1392 = vst.msk [vmem:[%s363] sm:$0xff] %vm394, %v1388
        %1393 = vst.msk [vmem:[%s363 + $0x8] sm:$0xff] %vm394, %v1389
        %1394 = vst.msk [vmem:[%s363 + $0x10] sm:$0xff] %vm394, %v1390
        %1395 = vst.msk [vmem:[%s363 + $0x18] sm:$0xff] %vm394, %v1391
        %p1396 = scmp.lt.s32.totalorder %s24, 1
        %s1397 = scalar_select %p1396, %s24, 1
        %s1398 = smul.addr %s1397, 4
        %s1399 = smul.addr %s1398, 8
        %s1400 = scalar_lea.vmem %s7, %s1399
        // Predicated region
        $region73: #{transformer_encoder_layer.2} parent=47 // pred_check
          %p1401 = pneg %p194
        $region74: #{transformer_encoder_layer.2} parent=47 // pred_check_branch
          %1403 = sbr.rel (%p1401) target = $region76
        $region75: #{transformer_encoder_layer.2} parent=47 // pred_region
          _
        $region76: #{transformer_encoder_layer.2} parent=47 // pred_fallthru
          _
      $region48: #{transformer_encoder_layer.2} parent=5 // pred_fallthru
        _
      %p1404 = scmp.le.s32.totalorder 2, %s19
      // Predicated region
      $region77: #{transformer_encoder_layer.2} parent=5 // pred_check
        %p1405 = pneg %p1404
      $region78: #{transformer_encoder_layer.2} parent=5 // pred_check_branch
        %1407 = sbr.rel (%p1405) target = $region80
      $region79: #{transformer_encoder_layer.2} parent=5 // pred_region
        %s1408 = ssub.s32 %s19, 2
        // Predicated region
        $region81: #{transformer_encoder_layer.2} parent=79 // pred_check
          %p1409 = pneg %p200
        $region82: #{transformer_encoder_layer.2} parent=79 // pred_check_branch
          %1411 = sbr.rel (%p1409) target = $region84
        $region83: #{transformer_encoder_layer.2} parent=79 // pred_region
          %p1412 = scmp.lt.s32.totalorder %s25, 1
          %s1413 = scalar_select %p1412, %s25, 1
          %s1414 = smul.addr %s1413, 4
          %s1415 = smul.addr %s1414, 8
          %s1416 = scalar_lea.vmem %s7, %s1415
        $region84: #{transformer_encoder_layer.2} parent=79 // pred_fallthru
          _
      $region80: #{transformer_encoder_layer.2} parent=5 // pred_fallthru
        _
    $region6: #{transformer_encoder_layer.2} parent=1 // loop_footer
      %s23 = sadd.s32 1, %s19
    $region7: #{transformer_encoder_layer.2} parent=1 // loop_footer_branch
      %18 = sbr.rel target = $region3
    $region8: #{transformer_encoder_layer.2} parent=1 // loop_exit
      _
    %1417 = vsyncpa [#allocation3], 1
    %s1418 = scalar_lea.sflag [#allocation3], 1
    %1419 = vsyncpa %s1418, 1
    %1420 = vsyncpa [#allocation5], 1
    %1421 = vsyncpa [#allocation8], 1
    %1422 = vsyncpa [#allocation11], 1

// kernel: transformer_encoder_layer.3
$region0: #{transformer_encoder_layer.3}
  #allocation0 [shape = 'u32[]', space=smem, size = 0x4, offset = 0x4, fixed_abs, tag = 'smem constant byte address 0x4 - core index']
  #allocation1 [shape = 'u32[144,128]{1,0:T(1,128)}', space=vmem, size = 0x12000, scoped, tag = 'internal scratch']
  #allocation2 [shape = 'f32[6,10,32]{2,1,0:T(8,128)}', space=vmem, size = 0xc000, scoped, tag = 'scratch operand']
  #allocation3 [shape = 'f32[6,10,64]{2,1,0:T(8,128)}', space=vmem, size = 0xc000, scoped, tag = 'scratch operand']
  #allocation4 [shape = 'bf16[32,288]{1,0:T(8,128)(2,1)}', space=vmem, size = 0x6000, scoped, tag = 'scratch operand']
  #allocation5 [shape = 'bf16[32,576]{1,0:T(8,128)(2,1)}', space=vmem, size = 0xa000, scoped, tag = 'scratch operand']
  %s0 = inlined_call_operand.vmem [shape: f32[2,32,32], index: 0, kind: input, shape index: {}, may-alias: {0,1}]
  %s1 = inlined_call_operand.vmem [shape: f32[2,32,32], index: 1, kind: input, shape index: {}, may-alias: {0,1}]
  %s2 = inlined_call_operand.vmem [shape: bf16[288,64], index: 2, kind: input, shape index: {}]
  %s3 = inlined_call_operand.vmem [shape: bf16[576,32], index: 3, kind: input, shape index: {}]
  %s4 = inlined_call_operand.vmem [shape: f32[1,32], index: 4, kind: input, shape index: {}]
  %s5 = inlined_call_operand.vmem [shape: f32[1,32], index: 5, kind: input, shape index: {}]
  %s6 = inlined_call_operand.hbm [shape: f32[2,32,32], index: 6, kind: output, shape index: {}]
  %s7 = sld [smem:[#allocation0]]
  $region57: #{transformer_encoder_layer.3} parent=0
    _
  %s9 = ssub.s32 1, %s7
  %s10 = scalar_select 0, %s9, %s7
  $region1: #{transformer_encoder_layer.3} parent=0
    #allocation6 [shape = 'u8[32768]{0}', space=vmem, size = 0x8000, scoped, tag = 'output window, operand 0']
    #allocation7 [shape = 's32[2]{0}', space=sflag, size = 0x8, scoped, tag = 'scoped memory for transformer_encoder_layer.3']
    %11 = vsyncpa [#allocation7], 0
    %s12 = scalar_lea.sflag [#allocation7], 1
    %13 = vsyncpa %s12, 0
    loop: start=0, step=1, limit=4
    $region2: #{transformer_encoder_layer.3} parent=1 // loop_pre_header
      _
    $region3: #{transformer_encoder_layer.3} parent=1 // loop_header
      %s15 = sphi 0, %s19
      %p16 = scmp.ge.s32.totalorder %s15, 4
      %s25 = sphi 0, %s27
      %s28 = sphi 0, %s25
      %s29 = sphi 0, %s28
      %s45 = sphi 0, %s29
      %s51 = sphi 0, %s53
      %s54 = sphi 0, %s51
      %s55 = sphi 0, %s54
      %s71 = sphi 0, %s55
      %s75 = sphi 0, %s75
      %s77 = sphi 0, %s75
      %s78 = sphi 0, %s77
      %s92 = sphi 0, %s78
      %s96 = sphi 0, %s96
      %s98 = sphi 0, %s96
      %s99 = sphi 0, %s98
      %s113 = sphi 0, %s99
      %s117 = sphi 0, %s117
      %s119 = sphi 0, %s117
      %s120 = sphi 0, %s119
      %s134 = sphi 0, %s120
      %s138 = sphi 0, %s138
      %s140 = sphi 0, %s138
      %s141 = sphi 0, %s140
      %s155 = sphi 0, %s141
      %s161 = sphi 0, %s163
      %s164 = sphi 0, %s161
      %s165 = sphi 0, %s164
      %s181 = sphi 0, %s165
    $region4: #{transformer_encoder_layer.3} parent=1 // loop_header_branch
      %18 = sbr.rel (%p16) target = $region8
    $region5: #{transformer_encoder_layer.3} parent=1 // loop_body
      %s20 = ssub.s32 %s15, 1
      %s21 = ssub.s32 %s15, 2
      %s22 = sadd.s32 %s15, 1
      %s23 = ssub.s32 %s15, %s22
      %p24 = scmp.eq.s32.totalorder %s23, 0
      %s26 = sadd.s32 %s25, 1
      %s27 = scalar_select %p24, %s25, %s26
      %p30 = pneg %p24
      %p31 = scmp.eq.s32.totalorder %s15, 1
      %p32 = por %p30, %p31
      %p33 = scmp.ne.s32.totalorder %s25, %s28
      %p34 = scmp.eq.s32.totalorder %s15, 0
      %p35 = por %p33, %p34
      %p36 = scmp.ne.s32.totalorder %s25, %s28
      %p37 = scmp.eq.s32.totalorder %s20, 1
      %p38 = por %p36, %p37
      %p39 = scmp.ne.s32.totalorder %s28, %s29
      %p40 = scmp.eq.s32.totalorder %s20, 0
      %p41 = por %p39, %p40
      %p42 = scmp.ne.s32.totalorder %s28, %s29
      %p43 = scmp.eq.s32.totalorder %s21, 1
      %p44 = por %p42, %p43
      %p46 = scmp.ne.s32.totalorder %s29, %s45
      %p47 = scmp.eq.s32.totalorder %s21, 0
      %p48 = por %p46, %p47
      %s49 = ssub.s32 %s15, %s22
      %p50 = scmp.eq.s32.totalorder %s49, 0
      %s52 = sadd.s32 %s51, 1
      %s53 = scalar_select %p50, %s51, %s52
      %p56 = pneg %p50
      %p57 = scmp.eq.s32.totalorder %s15, 1
      %p58 = por %p56, %p57
      %p59 = scmp.ne.s32.totalorder %s51, %s54
      %p60 = scmp.eq.s32.totalorder %s15, 0
      %p61 = por %p59, %p60
      %p62 = scmp.ne.s32.totalorder %s51, %s54
      %p63 = scmp.eq.s32.totalorder %s20, 1
      %p64 = por %p62, %p63
      %p65 = scmp.ne.s32.totalorder %s54, %s55
      %p66 = scmp.eq.s32.totalorder %s20, 0
      %p67 = por %p65, %p66
      %p68 = scmp.ne.s32.totalorder %s54, %s55
      %p69 = scmp.eq.s32.totalorder %s21, 1
      %p70 = por %p68, %p69
      %p72 = scmp.ne.s32.totalorder %s55, %s71
      %p73 = scmp.eq.s32.totalorder %s21, 0
      %p74 = por %p72, %p73
      %s76 = sadd.s32 %s75, 1
      %p79 = scmp.eq.s32.totalorder %s15, 1
      %p80 = scmp.ne.s32.totalorder %s75, %s77
      %p81 = scmp.eq.s32.totalorder %s15, 0
      %p82 = por %p80, %p81
      %p83 = scmp.ne.s32.totalorder %s75, %s77
      %p84 = scmp.eq.s32.totalorder %s20, 1
      %p85 = por %p83, %p84
      %p86 = scmp.ne.s32.totalorder %s77, %s78
      %p87 = scmp.eq.s32.totalorder %s20, 0
      %p88 = por %p86, %p87
      %p89 = scmp.ne.s32.totalorder %s77, %s78
      %p90 = scmp.eq.s32.totalorder %s21, 1
      %p91 = por %p89, %p90
      %p93 = scmp.ne.s32.totalorder %s78, %s92
      %p94 = scmp.eq.s32.totalorder %s21, 0
      %p95 = por %p93, %p94
      %s97 = sadd.s32 %s96, 1
      %p100 = scmp.eq.s32.totalorder %s15, 1
      %p101 = scmp.ne.s32.totalorder %s96, %s98
      %p102 = scmp.eq.s32.totalorder %s15, 0
      %p103 = por %p101, %p102
      %p104 = scmp.ne.s32.totalorder %s96, %s98
      %p105 = scmp.eq.s32.totalorder %s20, 1
      %p106 = por %p104, %p105
      %p107 = scmp.ne.s32.totalorder %s98, %s99
      %p108 = scmp.eq.s32.totalorder %s20, 0
      %p109 = por %p107, %p108
      %p110 = scmp.ne.s32.totalorder %s98, %s99
      %p111 = scmp.eq.s32.totalorder %s21, 1
      %p112 = por %p110, %p111
      %p114 = scmp.ne.s32.totalorder %s99, %s113
      %p115 = scmp.eq.s32.totalorder %s21, 0
      %p116 = por %p114, %p115
      %s118 = sadd.s32 %s117, 1
      %p121 = scmp.eq.s32.totalorder %s15, 1
      %p122 = scmp.ne.s32.totalorder %s117, %s119
      %p123 = scmp.eq.s32.totalorder %s15, 0
      %p124 = por %p122, %p123
      %p125 = scmp.ne.s32.totalorder %s117, %s119
      %p126 = scmp.eq.s32.totalorder %s20, 1
      %p127 = por %p125, %p126
      %p128 = scmp.ne.s32.totalorder %s119, %s120
      %p129 = scmp.eq.s32.totalorder %s20, 0
      %p130 = por %p128, %p129
      %p131 = scmp.ne.s32.totalorder %s119, %s120
      %p132 = scmp.eq.s32.totalorder %s21, 1
      %p133 = por %p131, %p132
      %p135 = scmp.ne.s32.totalorder %s120, %s134
      %p136 = scmp.eq.s32.totalorder %s21, 0
      %p137 = por %p135, %p136
      %s139 = sadd.s32 %s138, 1
      %p142 = scmp.eq.s32.totalorder %s15, 1
      %p143 = scmp.ne.s32.totalorder %s138, %s140
      %p144 = scmp.eq.s32.totalorder %s15, 0
      %p145 = por %p143, %p144
      %p146 = scmp.ne.s32.totalorder %s138, %s140
      %p147 = scmp.eq.s32.totalorder %s20, 1
      %p148 = por %p146, %p147
      %p149 = scmp.ne.s32.totalorder %s140, %s141
      %p150 = scmp.eq.s32.totalorder %s20, 0
      %p151 = por %p149, %p150
      %p152 = scmp.ne.s32.totalorder %s140, %s141
      %p153 = scmp.eq.s32.totalorder %s21, 1
      %p154 = por %p152, %p153
      %p156 = scmp.ne.s32.totalorder %s141, %s155
      %p157 = scmp.eq.s32.totalorder %s21, 0
      %p158 = por %p156, %p157
      %s159 = ssub.s32 %s15, %s22
      %p160 = scmp.eq.s32.totalorder %s159, 0
      %s162 = sadd.s32 %s161, 1
      %s163 = scalar_select %p160, %s161, %s162
      %p166 = pneg %p160
      %p167 = scmp.eq.s32.totalorder %s15, 1
      %p168 = por %p166, %p167
      %p169 = scmp.ne.s32.totalorder %s161, %s164
      %p170 = scmp.eq.s32.totalorder %s15, 0
      %p171 = por %p169, %p170
      %p172 = scmp.ne.s32.totalorder %s161, %s164
      %p173 = scmp.eq.s32.totalorder %s20, 1
      %p174 = por %p172, %p173
      %p175 = scmp.ne.s32.totalorder %s164, %s165
      %p176 = scmp.eq.s32.totalorder %s20, 0
      %p177 = por %p175, %p176
      %p178 = scmp.ne.s32.totalorder %s164, %s165
      %p179 = scmp.eq.s32.totalorder %s21, 1
      %p180 = por %p178, %p179
      %p182 = scmp.ne.s32.totalorder %s165, %s181
      %p183 = scmp.eq.s32.totalorder %s21, 0
      %p184 = por %p182, %p183
      %p185 = scmp.le.s32.totalorder 1, %s15
      %p186 = scmp.lt.s32.totalorder %s15, 3
      %p187 = pnand %p185, %p186
      %p188 = pneg %p187
      // Predicated region
      $region9: #{transformer_encoder_layer.3} parent=5 // pred_check
        _
      $region10: #{transformer_encoder_layer.3} parent=5 // pred_check_branch
        %190 = sbr.rel (%p187) target = $region12
      $region11: #{transformer_encoder_layer.3} parent=5 // pred_region
        %s191 = ssub.s32 %s15, 1
        // Predicated region
        $region13: #{transformer_encoder_layer.3} parent=11 // pred_check
          %p192 = pneg %p88
        $region14: #{transformer_encoder_layer.3} parent=11 // pred_check_branch
          %194 = sbr.rel (%p192) target = $region16
        $region15: #{transformer_encoder_layer.3} parent=11 // pred_region
          _
        $region16: #{transformer_encoder_layer.3} parent=11 // pred_fallthru
          _
        // Predicated region
        $region17: #{transformer_encoder_layer.3} parent=11 // pred_check
          %p195 = pneg %p109
        $region18: #{transformer_encoder_layer.3} parent=11 // pred_check_branch
          %197 = sbr.rel (%p195) target = $region20
        $region19: #{transformer_encoder_layer.3} parent=11 // pred_region
          _
        $region20: #{transformer_encoder_layer.3} parent=11 // pred_fallthru
          _
        // Predicated region
        $region21: #{transformer_encoder_layer.3} parent=11 // pred_check
          %p198 = pneg %p130
        $region22: #{transformer_encoder_layer.3} parent=11 // pred_check_branch
          %200 = sbr.rel (%p198) target = $region24
        $region23: #{transformer_encoder_layer.3} parent=11 // pred_region
          _
        $region24: #{transformer_encoder_layer.3} parent=11 // pred_fallthru
          _
        // Predicated region
        $region25: #{transformer_encoder_layer.3} parent=11 // pred_check
          %p201 = pneg %p151
        $region26: #{transformer_encoder_layer.3} parent=11 // pred_check_branch
          %203 = sbr.rel (%p201) target = $region28
        $region27: #{transformer_encoder_layer.3} parent=11 // pred_region
          _
        $region28: #{transformer_encoder_layer.3} parent=11 // pred_fallthru
          _
      $region12: #{transformer_encoder_layer.3} parent=5 // pred_fallthru
        _
      %p204 = scmp.lt.s32.totalorder %s15, 2
      // Predicated region
      $region29: #{transformer_encoder_layer.3} parent=5 // pred_check
        %p205 = pneg %p204
      $region30: #{transformer_encoder_layer.3} parent=5 // pred_check_branch
        %207 = sbr.rel (%p205) target = $region32
      $region31: #{transformer_encoder_layer.3} parent=5 // pred_region
        // Predicated region
        $region33: #{transformer_encoder_layer.3} parent=31 // pred_check
          %p208 = pneg %p35
        $region34: #{transformer_encoder_layer.3} parent=31 // pred_check_branch
          %210 = sbr.rel (%p208) target = $region36
        $region35: #{transformer_encoder_layer.3} parent=31 // pred_region
          %p211 = scmp.lt.s32.totalorder %s15, 1
          %s212 = scalar_select %p211, %s15, 1
          %s213 = smul.addr %s212, 4
          %s214 = smul.addr %s213, 8
          %s215 = scalar_lea.vmem %s0, %s214
        $region36: #{transformer_encoder_layer.3} parent=31 // pred_fallthru
          _
        // Predicated region
        $region37: #{transformer_encoder_layer.3} parent=31 // pred_check
          %p216 = pneg %p61
        $region38: #{transformer_encoder_layer.3} parent=31 // pred_check_branch
          %218 = sbr.rel (%p216) target = $region40
        $region39: #{transformer_encoder_layer.3} parent=31 // pred_region
          %p219 = scmp.lt.s32.totalorder %s15, 1
          %s220 = scalar_select %p219, %s15, 1
          %s221 = smul.addr %s220, 4
          %s222 = smul.addr %s221, 8
          %s223 = scalar_lea.vmem %s1, %s222
        $region40: #{transformer_encoder_layer.3} parent=31 // pred_fallthru
          _
      $region32: #{transformer_encoder_layer.3} parent=5 // pred_fallthru
        _
      %p224 = scmp.le.s32.totalorder 1, %s15
      %p225 = scmp.lt.s32.totalorder %s15, 3
      %p226 = pnand %p224, %p225
      %p227 = pneg %p226
      // Predicated region
      $region41: #{transformer_encoder_layer.3} parent=5 // pred_check
        _
      $region42: #{transformer_encoder_layer.3} parent=5 // pred_check_branch
        %229 = sbr.rel (%p226) target = $region44
      $region43: #{transformer_encoder_layer.3} parent=5 // pred_region
        %s230 = ssub.s32 %s15, 1
        %p231 = scmp.lt.s32.totalorder %s20, 1
        %s232 = scalar_select %p231, %s20, 1
        %s233 = smul.addr %s232, 4
        %s234 = smul.addr %s233, 8
        %s235 = scalar_lea.vmem %s0, %s234
        %p236 = pneg %p41
        %p237 = pneg %p38
        %p238 = scmp.lt.s32.totalorder %s20, 1
        %s239 = scalar_select %p238, %s20, 1
        %s240 = smul.addr %s239, 4
        %s241 = smul.addr %s240, 8
        %s242 = scalar_lea.vmem %s1, %s241
        %p243 = pneg %p67
        %p244 = pneg %p64
        %p245 = pneg %p88
        %p246 = pneg %p85
        %p247 = pneg %p109
        %p248 = pneg %p106
        %p249 = pneg %p130
        %p250 = pneg %p127
        %p251 = pneg %p151
        %p252 = pneg %p148
        %p253 = pneg %p177
        %p254 = pneg %p174
        %s255 = sand.u32 %s164, 1
        %s256 = scalar_lea.sflag [#allocation7], %s255
        %s257 = sand.u32 %s164, 1
        %s258 = smul.addr %s257, 32
        %s259 = scalar_lea.vmem [#allocation6], %s258
        %p260 = scmp.lt.s32.totalorder %s20, 1
        %s261 = scalar_select %p260, %s20, 1
        %s262 = smul.addr %s261, 4
        %s263 = smul.addr %s262, 8
        %s264 = scalar_lea.vmem %s0, %s263
        %p265 = scmp.lt.s32.totalorder %s20, 1
        %s266 = scalar_select %p265, %s20, 1
        %s267 = smul.addr %s266, 4
        %s268 = smul.addr %s267, 8
        %s269 = scalar_lea.vmem %s1, %s268
        %vm271 = vcmask 261120
        %272 = vst.msk [vmem:[#allocation2] sm:$0xff] %vm271, 0.0
        %vm273 = vcmask 254976
        %274 = vst.msk [vmem:[#allocation2 + $0x8] sm:$0x3] %vm273, 0.0
        %s275 = scalar_lea.vmem [#allocation2], 80
        %276 = vst.msk [vmem:[%s275] sm:$0xff] %vm271, 0.0
        %277 = vst.msk [vmem:[%s275 + $0x8] sm:$0x3] %vm273, 0.0
        %vm278 = vcmask 253952
        %279 = vst.msk [vmem:[#allocation2] sm:$0x1] %vm278, 0.0
        %280 = vst.msk [vmem:[#allocation2 + $0x10] sm:$0x1] %vm278, 0.0
        %281 = vst.msk [vmem:[#allocation2 + $0x20] sm:$0x1] %vm278, 0.0
        %282 = vst.msk [vmem:[#allocation2 + $0x30] sm:$0x1] %vm278, 0.0
        %283 = vst.msk [vmem:[#allocation2 + $0x40] sm:$0x1] %vm278, 0.0
        %284 = vst.msk [vmem:[#allocation2 + $0x50] sm:$0x1] %vm278, 0.0
        %285 = vst.msk [vmem:[#allocation2 + $0x9] sm:$0x1] %vm278, 0.0
        %286 = vst.msk [vmem:[#allocation2 + $0x19] sm:$0x1] %vm278, 0.0
        %287 = vst.msk [vmem:[#allocation2 + $0x29] sm:$0x1] %vm278, 0.0
        %288 = vst.msk [vmem:[#allocation2 + $0x39] sm:$0x1] %vm278, 0.0
        %289 = vst.msk [vmem:[#allocation2 + $0x49] sm:$0x1] %vm278, 0.0
        %290 = vst.msk [vmem:[#allocation2 + $0x59] sm:$0x1] %vm278, 0.0
        %vm291 = vcmask 523264
        %292 = vst.msk [vmem:[#allocation3] sm:$0xff] %vm291, 0.0
        %vm293 = vcmask 517120
        %294 = vst.msk [vmem:[#allocation3 + $0x8] sm:$0x3] %vm293, 0.0
        %s295 = scalar_lea.vmem [#allocation3], 80
        %296 = vst.msk [vmem:[%s295] sm:$0xff] %vm291, 0.0
        %297 = vst.msk [vmem:[%s295 + $0x8] sm:$0x3] %vm293, 0.0
        %vm298 = vcmask 516096
        %299 = vst.msk [vmem:[#allocation3] sm:$0x1] %vm298, 0.0
        %300 = vst.msk [vmem:[#allocation3 + $0x10] sm:$0x1] %vm298, 0.0
        %301 = vst.msk [vmem:[#allocation3 + $0x20] sm:$0x1] %vm298, 0.0
        %302 = vst.msk [vmem:[#allocation3 + $0x30] sm:$0x1] %vm298, 0.0
        %303 = vst.msk [vmem:[#allocation3 + $0x40] sm:$0x1] %vm298, 0.0
        %304 = vst.msk [vmem:[#allocation3 + $0x50] sm:$0x1] %vm298, 0.0
        %305 = vst.msk [vmem:[#allocation3 + $0x9] sm:$0x1] %vm298, 0.0
        %306 = vst.msk [vmem:[#allocation3 + $0x19] sm:$0x1] %vm298, 0.0
        %307 = vst.msk [vmem:[#allocation3 + $0x29] sm:$0x1] %vm298, 0.0
        %308 = vst.msk [vmem:[#allocation3 + $0x39] sm:$0x1] %vm298, 0.0
        %309 = vst.msk [vmem:[#allocation3 + $0x49] sm:$0x1] %vm298, 0.0
        %310 = vst.msk [vmem:[#allocation3 + $0x59] sm:$0x1] %vm298, 0.0
        %v311 = vld [vmem:[%s264] sm:$0xff]
        %v312 = vld [vmem:[%s264 + $0x8] sm:$0xff]
        %v313 = vld [vmem:[%s264 + $0x10] sm:$0xff]
        %v314 = vld [vmem:[%s264 + $0x18] sm:$0xff]
        %315 = vxpose.xlu0.b32.start [1/16] %v311, 128
        %316 = vxpose.xlu0.b32.cont [2/16] %v312, 128
        %317 = vxpose.xlu0.b32.cont [3/16] %v313, 128
        %318 = vxpose.xlu0.b32.cont [4/16] %v314, 128
        %319 = vxpose.xlu0.b32.cont [5/16] 0.0, 128
        %320 = vxpose.xlu0.b32.cont [6/16] 0.0, 128
        %321 = vxpose.xlu0.b32.cont [7/16] 0.0, 128
        %322 = vxpose.xlu0.b32.cont [8/16] 0.0, 128
        %323 = vxpose.xlu0.b32.cont [9/16] 0.0, 128
        %324 = vxpose.xlu0.b32.cont [10/16] 0.0, 128
        %325 = vxpose.xlu0.b32.cont [11/16] 0.0, 128
        %326 = vxpose.xlu0.b32.cont [12/16] 0.0, 128
        %327 = vxpose.xlu0.b32.cont [13/16] 0.0, 128
        %328 = vxpose.xlu0.b32.cont [14/16] 0.0, 128
        %329 = vxpose.xlu0.b32.cont [15/16] 0.0, 128
        %330 = vxpose.xlu0.b32.end [16/16] 0.0, 128
        %v331 = vpop.trf.xlu0
        %v332 = vpop.trf.xlu0
        %v333 = vpop.trf.xlu0
        %v334 = vpop.trf.xlu0
        %v335 = vpop.trf.xlu0
        %v336 = vpop.trf.xlu0
        %v337 = vpop.trf.xlu0
        %v338 = vpop.trf.xlu0
        %v339 = vpop.trf.xlu0
        %v340 = vpop.trf.xlu0
        %v341 = vpop.trf.xlu0
        %v342 = vpop.trf.xlu0
        %v343 = vpop.trf.xlu0
        %v344 = vpop.trf.xlu0
        %v345 = vpop.trf.xlu0
        %v346 = vpop.trf.xlu0
        %s347 = scalar_lea.vmem [#allocation2], 16
        %348 = vst.msk [vmem:[%s347 + $0x1] sm:$0xff] %vm271, %v331
        %349 = vst.msk [vmem:[%s347 + $0x11] sm:$0xff] %vm271, %v332
        %350 = vst.msk [vmem:[%s347 + $0x21] sm:$0xff] %vm271, %v333
        %351 = vst.msk [vmem:[%s347 + $0x31] sm:$0xff] %vm271, %v334
        %v352 = vld [vmem:[#allocation2] sm:$0xff]
        %v353 = vld [vmem:[#allocation2 + $0x10] sm:$0xff]
        %v354 = vld [vmem:[#allocation2 + $0x20] sm:$0xff]
        %v355 = vld [vmem:[#allocation2 + $0x30] sm:$0xff]
        %v356 = vpack.c.bf16 %v353, %v352
        %v357 = vpack.c.bf16 %v355, %v354
        %v360 = vunpack.c.l.b16 %v356
        %v361 = vunpack.c.h.b16 %v356
        %v362 = vunpack.c.l.b16 %v357
        %v363 = vunpack.c.h.b16 %v357
        %v364 = vpack.c.b16 %v360, %v360
        %v365 = vpack.c.b16 %v361, %v361
        %v366 = vpack.c.b16 %v362, %v362
        %v367 = vpack.c.b16 %v363, %v363
        %vm372 = vcmask 257024
        %373 = vst.msk [vmem:[#allocation4] sm:$0xf] %vm372, %v364
        %374 = vst.msk [vmem:[#allocation4 + $0xc] sm:$0xf] %vm372, %v365
        %375 = vst.msk [vmem:[#allocation4 + $0x18] sm:$0xf] %vm372, %v366
        %376 = vst.msk [vmem:[#allocation4 + $0x24] sm:$0xf] %vm372, %v367
        %v377 = vld [vmem:[#allocation2 + $0x1] sm:$0xff]
        %v378 = vld [vmem:[#allocation2 + $0x11] sm:$0xff]
        %v379 = vld [vmem:[#allocation2 + $0x21] sm:$0xff]
        %v380 = vld [vmem:[#allocation2 + $0x31] sm:$0xff]
        %v381 = vpack.c.bf16 %v378, %v377
        %v382 = vpack.c.bf16 %v380, %v379
        %v385 = vunpack.c.l.b16 %v381
        %v386 = vunpack.c.h.b16 %v381
        %v387 = vunpack.c.l.b16 %v382
        %v388 = vunpack.c.h.b16 %v382
        %v389 = vpack.c.b16 %v385, %v385
        %v390 = vpack.c.b16 %v386, %v386
        %v391 = vpack.c.b16 %v387, %v387
        %v392 = vpack.c.b16 %v388, %v388
        %393 = vrot.lane.b32.xlu0 %v389, 32
        %v394 = vpop.permute.xlu0 %393
        %395 = vrot.lane.b32.xlu0 %v390, 32
        %v396 = vpop.permute.xlu0 %395
        %397 = vrot.lane.b32.xlu0 %v391, 32
        %v398 = vpop.permute.xlu0 %397
        %399 = vrot.lane.b32.xlu0 %v392, 32
        %v400 = vpop.permute.xlu0 %399
        %vm405 = vcmask 519424
        %406 = vst.msk [vmem:[#allocation4] sm:$0xf] %vm405, %v394
        %407 = vst.msk [vmem:[#allocation4 + $0xc] sm:$0xf] %vm405, %v396
        %408 = vst.msk [vmem:[#allocation4 + $0x18] sm:$0xf] %vm405, %v398
        %409 = vst.msk [vmem:[#allocation4 + $0x24] sm:$0xf] %vm405, %v400
        %v410 = vld [vmem:[#allocation2 + $0x2] sm:$0xff]
        %v411 = vld [vmem:[#allocation2 + $0x12] sm:$0xff]
        %v412 = vld [vmem:[#allocation2 + $0x22] sm:$0xff]
        %v413 = vld [vmem:[#allocation2 + $0x32] sm:$0xff]
        %v414 = vpack.c.bf16 %v411, %v410
        %v415 = vpack.c.bf16 %v413, %v412
        %v418 = vunpack.c.l.b16 %v414
        %v419 = vunpack.c.h.b16 %v414
        %v420 = vunpack.c.l.b16 %v415
        %v421 = vunpack.c.h.b16 %v415
        %v422 = vpack.c.b16 %v418, %v418
        %v423 = vpack.c.b16 %v419, %v419
        %v424 = vpack.c.b16 %v420, %v420
        %v425 = vpack.c.b16 %v421, %v421
        %426 = vrot.lane.b32.xlu0 %v422, 64
        %v427 = vpop.permute.xlu0 %426
        %428 = vrot.lane.b32.xlu0 %v423, 64
        %v429 = vpop.permute.xlu0 %428
        %430 = vrot.lane.b32.xlu0 %v424, 64
        %v431 = vpop.permute.xlu0 %430
        %432 = vrot.lane.b32.xlu0 %v425, 64
        %v433 = vpop.permute.xlu0 %432
        %vm438 = vcmask 781824
        %439 = vst.msk [vmem:[#allocation4] sm:$0xf] %vm438, %v427
        %440 = vst.msk [vmem:[#allocation4 + $0xc] sm:$0xf] %vm438, %v429
        %441 = vst.msk [vmem:[#allocation4 + $0x18] sm:$0xf] %vm438, %v431
        %442 = vst.msk [vmem:[#allocation4 + $0x24] sm:$0xf] %vm438, %v433
        %v443 = vld [vmem:[%s347] sm:$0xff]
        %v444 = vld [vmem:[%s347 + $0x10] sm:$0xff]
        %v445 = vld [vmem:[%s347 + $0x20] sm:$0xff]
        %v446 = vld [vmem:[%s347 + $0x30] sm:$0xff]
        %v447 = vpack.c.bf16 %v444, %v443
        %v448 = vpack.c.bf16 %v446, %v445
        %v451 = vunpack.c.l.b16 %v447
        %v452 = vunpack.c.h.b16 %v447
        %v453 = vunpack.c.l.b16 %v448
        %v454 = vunpack.c.h.b16 %v448
        %v455 = vpack.c.b16 %v451, %v451
        %v456 = vpack.c.b16 %v452, %v452
        %v457 = vpack.c.b16 %v453, %v453
        %v458 = vpack.c.b16 %v454, %v454
        %459 = vrot.lane.b32.xlu0 %v455, 96
        %v460 = vpop.permute.xlu0 %459
        %461 = vrot.lane.b32.xlu0 %v456, 96
        %v462 = vpop.permute.xlu0 %461
        %463 = vrot.lane.b32.xlu0 %v457, 96
        %v464 = vpop.permute.xlu0 %463
        %465 = vrot.lane.b32.xlu0 %v458, 96
        %v466 = vpop.permute.xlu0 %465
        %vm471 = vcmask 1044224
        %472 = vst.msk [vmem:[#allocation4] sm:$0xf] %vm471, %v460
        %473 = vst.msk [vmem:[#allocation4 + $0xc] sm:$0xf] %vm471, %v462
        %474 = vst.msk [vmem:[#allocation4 + $0x18] sm:$0xf] %vm471, %v464
        %475 = vst.msk [vmem:[#allocation4 + $0x24] sm:$0xf] %vm471, %v466
        %v476 = vld [vmem:[%s347 + $0x1] sm:$0xff]
        %v477 = vld [vmem:[%s347 + $0x11] sm:$0xff]
        %v478 = vld [vmem:[%s347 + $0x21] sm:$0xff]
        %v479 = vld [vmem:[%s347 + $0x31] sm:$0xff]
        %v480 = vpack.c.bf16 %v477, %v476
        %v481 = vpack.c.bf16 %v479, %v478
        %v484 = vunpack.c.l.b16 %v480
        %v485 = vunpack.c.h.b16 %v480
        %v486 = vunpack.c.l.b16 %v481
        %v487 = vunpack.c.h.b16 %v481
        %v488 = vpack.c.b16 %v484, %v484
        %v489 = vpack.c.b16 %v485, %v485
        %v490 = vpack.c.b16 %v486, %v486
        %v491 = vpack.c.b16 %v487, %v487
        %496 = vst.msk [vmem:[#allocation4 + $0x4] sm:$0xf] %vm372, %v488
        %497 = vst.msk [vmem:[#allocation4 + $0x10] sm:$0xf] %vm372, %v489
        %498 = vst.msk [vmem:[#allocation4 + $0x1c] sm:$0xf] %vm372, %v490
        %499 = vst.msk [vmem:[#allocation4 + $0x28] sm:$0xf] %vm372, %v491
        %v500 = vld [vmem:[%s347 + $0x2] sm:$0xff]
        %v501 = vld [vmem:[%s347 + $0x12] sm:$0xff]
        %v502 = vld [vmem:[%s347 + $0x22] sm:$0xff]
        %v503 = vld [vmem:[%s347 + $0x32] sm:$0xff]
        %v504 = vpack.c.bf16 %v501, %v500
        %v505 = vpack.c.bf16 %v503, %v502
        %v508 = vunpack.c.l.b16 %v504
        %v509 = vunpack.c.h.b16 %v504
        %v510 = vunpack.c.l.b16 %v505
        %v511 = vunpack.c.h.b16 %v505
        %v512 = vpack.c.b16 %v508, %v508
        %v513 = vpack.c.b16 %v509, %v509
        %v514 = vpack.c.b16 %v510, %v510
        %v515 = vpack.c.b16 %v511, %v511
        %516 = vrot.lane.b32.xlu0 %v512, 32
        %v517 = vpop.permute.xlu0 %516
        %518 = vrot.lane.b32.xlu0 %v513, 32
        %v519 = vpop.permute.xlu0 %518
        %520 = vrot.lane.b32.xlu0 %v514, 32
        %v521 = vpop.permute.xlu0 %520
        %522 = vrot.lane.b32.xlu0 %v515, 32
        %v523 = vpop.permute.xlu0 %522
        %528 = vst.msk [vmem:[#allocation4 + $0x4] sm:$0xf] %vm405, %v517
        %529 = vst.msk [vmem:[#allocation4 + $0x10] sm:$0xf] %vm405, %v519
        %530 = vst.msk [vmem:[#allocation4 + $0x1c] sm:$0xf] %vm405, %v521
        %531 = vst.msk [vmem:[#allocation4 + $0x28] sm:$0xf] %vm405, %v523
        %s532 = scalar_lea.vmem [#allocation2], 32
        %v533 = vld [vmem:[%s532] sm:$0xff]
        %v534 = vld [vmem:[%s532 + $0x10] sm:$0xff]
        %v535 = vld [vmem:[%s532 + $0x20] sm:$0xff]
        %v536 = vld [vmem:[%s532 + $0x30] sm:$0xff]
        %v537 = vpack.c.bf16 %v534, %v533
        %v538 = vpack.c.bf16 %v536, %v535
        %v541 = vunpack.c.l.b16 %v537
        %v542 = vunpack.c.h.b16 %v537
        %v543 = vunpack.c.l.b16 %v538
        %v544 = vunpack.c.h.b16 %v538
        %v545 = vpack.c.b16 %v541, %v541
        %v546 = vpack.c.b16 %v542, %v542
        %v547 = vpack.c.b16 %v543, %v543
        %v548 = vpack.c.b16 %v544, %v544
        %549 = vrot.lane.b32.xlu0 %v545, 64
        %v550 = vpop.permute.xlu0 %549
        %551 = vrot.lane.b32.xlu0 %v546, 64
        %v552 = vpop.permute.xlu0 %551
        %553 = vrot.lane.b32.xlu0 %v547, 64
        %v554 = vpop.permute.xlu0 %553
        %555 = vrot.lane.b32.xlu0 %v548, 64
        %v556 = vpop.permute.xlu0 %555
        %561 = vst.msk [vmem:[#allocation4 + $0x4] sm:$0xf] %vm438, %v550
        %562 = vst.msk [vmem:[#allocation4 + $0x10] sm:$0xf] %vm438, %v552
        %563 = vst.msk [vmem:[#allocation4 + $0x1c] sm:$0xf] %vm438, %v554
        %564 = vst.msk [vmem:[#allocation4 + $0x28] sm:$0xf] %vm438, %v556
        %v565 = vld [vmem:[%s532 + $0x1] sm:$0xff]
        %v566 = vld [vmem:[%s532 + $0x11] sm:$0xff]
        %v567 = vld [vmem:[%s532 + $0x21] sm:$0xff]
        %v568 = vld [vmem:[%s532 + $0x31] sm:$0xff]
        %v569 = vpack.c.bf16 %v566, %v565
        %v570 = vpack.c.bf16 %v568, %v567
        %v573 = vunpack.c.l.b16 %v569
        %v574 = vunpack.c.h.b16 %v569
        %v575 = vunpack.c.l.b16 %v570
        %v576 = vunpack.c.h.b16 %v570
        %v577 = vpack.c.b16 %v573, %v573
        %v578 = vpack.c.b16 %v574, %v574
        %v579 = vpack.c.b16 %v575, %v575
        %v580 = vpack.c.b16 %v576, %v576
        %581 = vrot.lane.b32.xlu0 %v577, 96
        %v582 = vpop.permute.xlu0 %581
        %583 = vrot.lane.b32.xlu0 %v578, 96
        %v584 = vpop.permute.xlu0 %583
        %585 = vrot.lane.b32.xlu0 %v579, 96
        %v586 = vpop.permute.xlu0 %585
        %587 = vrot.lane.b32.xlu0 %v580, 96
        %v588 = vpop.permute.xlu0 %587
        %593 = vst.msk [vmem:[#allocation4 + $0x4] sm:$0xf] %vm471, %v582
        %594 = vst.msk [vmem:[#allocation4 + $0x10] sm:$0xf] %vm471, %v584
        %595 = vst.msk [vmem:[#allocation4 + $0x1c] sm:$0xf] %vm471, %v586
        %596 = vst.msk [vmem:[#allocation4 + $0x28] sm:$0xf] %vm471, %v588
        %v597 = vld [vmem:[%s532 + $0x2] sm:$0xff]
        %v598 = vld [vmem:[%s532 + $0x12] sm:$0xff]
        %v599 = vld [vmem:[%s532 + $0x22] sm:$0xff]
        %v600 = vld [vmem:[%s532 + $0x32] sm:$0xff]
        %v601 = vpack.c.bf16 %v598, %v597
        %v602 = vpack.c.bf16 %v600, %v599
        %v605 = vunpack.c.l.b16 %v601
        %v606 = vunpack.c.h.b16 %v601
        %v607 = vunpack.c.l.b16 %v602
        %v608 = vunpack.c.h.b16 %v602
        %v609 = vpack.c.b16 %v605, %v605
        %v610 = vpack.c.b16 %v606, %v606
        %v611 = vpack.c.b16 %v607, %v607
        %v612 = vpack.c.b16 %v608, %v608
        %617 = vst.msk [vmem:[#allocation4 + $0x8] sm:$0xf] %vm372, %v609
        %618 = vst.msk [vmem:[#allocation4 + $0x14] sm:$0xf] %vm372, %v610
        %619 = vst.msk [vmem:[#allocation4 + $0x20] sm:$0xf] %vm372, %v611
        %620 = vst.msk [vmem:[#allocation4 + $0x2c] sm:$0xf] %vm372, %v612
        %v621 = vld [vmem:[#allocation4] sm:$0xff]
        %v622 = vld [vmem:[#allocation4 + $0x8] sm:$0xf]
        %v623 = vld [vmem:[#allocation4 + $0xc] sm:$0xff]
        %v624 = vld [vmem:[#allocation4 + $0x14] sm:$0xf]
        %v625 = vld [vmem:[#allocation4 + $0x18] sm:$0xff]
        %v626 = vld [vmem:[#allocation4 + $0x20] sm:$0xf]
        %v627 = vld [vmem:[#allocation4 + $0x24] sm:$0xff]
        %v628 = vld [vmem:[#allocation4 + $0x2c] sm:$0xf]
        %v629 = vld [vmem:[%s2] sm:$0xf]
        %v630 = vld [vmem:[%s2 + $0x4] sm:$0xf]
        %v631 = vld [vmem:[%s2 + $0x8] sm:$0xf]
        %v632 = vld [vmem:[%s2 + $0xc] sm:$0xf]
        %v633 = vld [vmem:[%s2 + $0x10] sm:$0xf]
        %v634 = vld [vmem:[%s2 + $0x14] sm:$0xf]
        %v635 = vld [vmem:[%s2 + $0x18] sm:$0xf]
        %v636 = vld [vmem:[%s2 + $0x1c] sm:$0xf]
        %v637 = vld [vmem:[%s2 + $0x20] sm:$0xf]
        %v638 = vld [vmem:[%s2 + $0x24] sm:$0xf]
        %v639 = vld [vmem:[%s2 + $0x28] sm:$0xf]
        %v640 = vld [vmem:[%s2 + $0x2c] sm:$0xf]
        %v641 = vld [vmem:[%s2 + $0x30] sm:$0xf]
        %v642 = vld [vmem:[%s2 + $0x34] sm:$0xf]
        %v643 = vld [vmem:[%s2 + $0x38] sm:$0xf]
        %v644 = vld [vmem:[%s2 + $0x3c] sm:$0xf]
        %v645 = vld [vmem:[%s2 + $0x40] sm:$0xf]
        %v646 = vld [vmem:[%s2 + $0x44] sm:$0xf]
        %v647 = vld [vmem:[%s2 + $0x48] sm:$0xf]
        %v648 = vld [vmem:[%s2 + $0x4c] sm:$0xf]
        %v649 = vld [vmem:[%s2 + $0x50] sm:$0xf]
        %v650 = vld [vmem:[%s2 + $0x54] sm:$0xf]
        %v651 = vld [vmem:[%s2 + $0x58] sm:$0xf]
        %v652 = vld [vmem:[%s2 + $0x5c] sm:$0xf]
        %v653 = vld [vmem:[%s2 + $0x60] sm:$0xf]
        %v654 = vld [vmem:[%s2 + $0x64] sm:$0xf]
        %v655 = vld [vmem:[%s2 + $0x68] sm:$0xf]
        %v656 = vld [vmem:[%s2 + $0x6c] sm:$0xf]
        %v657 = vld [vmem:[%s2 + $0x70] sm:$0xf]
        %v658 = vld [vmem:[%s2 + $0x74] sm:$0xf]
        %v659 = vld [vmem:[%s2 + $0x78] sm:$0xf]
        %v660 = vld [vmem:[%s2 + $0x7c] sm:$0xf]
        %v661 = vld [vmem:[%s2 + $0x80] sm:$0xf]
        %v662 = vld [vmem:[%s2 + $0x84] sm:$0xf]
        %v663 = vld [vmem:[%s2 + $0x88] sm:$0xf]
        %v664 = vld [vmem:[%s2 + $0x8c] sm:$0xf]
        %v673 = vunpack.c.l.b16 %v621
        %v674 = vunpack.c.h.b16 %v621
        %v675 = vunpack.c.l.b16 %v622
        %v676 = vunpack.c.l.b16 %v623
        %v677 = vunpack.c.h.b16 %v623
        %v678 = vunpack.c.l.b16 %v624
        %v679 = vunpack.c.l.b16 %v625
        %v680 = vunpack.c.h.b16 %v625
        %v681 = vunpack.c.l.b16 %v626
        %v682 = vunpack.c.l.b16 %v627
        %v683 = vunpack.c.h.b16 %v627
        %v684 = vunpack.c.l.b16 %v628
        %v685 = vpack.c.b16 %v676, %v673
        %v686 = vpack.c.b16 %v677, %v674
        %v687 = vpack.c.b16 %v678, %v675
        %v688 = vpack.c.b16 %v682, %v679
        %v689 = vpack.c.b16 %v683, %v680
        %v690 = vpack.c.b16 %v684, %v681
        %v731 = vunpack.c.l.b16 %v629
        %v732 = vunpack.c.l.b16 %v630
        %v733 = vunpack.c.l.b16 %v631
        %v734 = vunpack.c.l.b16 %v632
        %v735 = vunpack.c.l.b16 %v633
        %v736 = vunpack.c.l.b16 %v634
        %v737 = vunpack.c.l.b16 %v635
        %v738 = vunpack.c.l.b16 %v636
        %v739 = vunpack.c.l.b16 %v637
        %v740 = vunpack.c.l.b16 %v638
        %v741 = vunpack.c.l.b16 %v639
        %v742 = vunpack.c.l.b16 %v640
        %v743 = vunpack.c.l.b16 %v641
        %v744 = vunpack.c.l.b16 %v642
        %v745 = vunpack.c.l.b16 %v643
        %v746 = vunpack.c.l.b16 %v644
        %v747 = vunpack.c.l.b16 %v645
        %v748 = vunpack.c.l.b16 %v646
        %v749 = vunpack.c.l.b16 %v647
        %v750 = vunpack.c.l.b16 %v648
        %v751 = vunpack.c.l.b16 %v649
        %v752 = vunpack.c.l.b16 %v650
        %v753 = vunpack.c.l.b16 %v651
        %v754 = vunpack.c.l.b16 %v652
        %v755 = vunpack.c.l.b16 %v653
        %v756 = vunpack.c.l.b16 %v654
        %v757 = vunpack.c.l.b16 %v655
        %v758 = vunpack.c.l.b16 %v656
        %v759 = vunpack.c.l.b16 %v657
        %v760 = vunpack.c.l.b16 %v658
        %v761 = vunpack.c.l.b16 %v659
        %v762 = vunpack.c.l.b16 %v660
        %v763 = vunpack.c.l.b16 %v661
        %v764 = vunpack.c.l.b16 %v662
        %v765 = vunpack.c.l.b16 %v663
        %v766 = vunpack.c.l.b16 %v664
        %v767 = vpack.c.b16 %v732, %v731
        %v768 = vpack.c.b16 %v734, %v733
        %v769 = vpack.c.b16 %v736, %v735
        %v770 = vpack.c.b16 %v738, %v737
        %v771 = vpack.c.b16 %v740, %v739
        %v772 = vpack.c.b16 %v742, %v741
        %v773 = vpack.c.b16 %v744, %v743
        %v774 = vpack.c.b16 %v746, %v745
        %v775 = vpack.c.b16 %v748, %v747
        %v776 = vpack.c.b16 %v750, %v749
        %v777 = vpack.c.b16 %v752, %v751
        %v778 = vpack.c.b16 %v754, %v753
        %v779 = vpack.c.b16 %v756, %v755
        %v780 = vpack.c.b16 %v758, %v757
        %v781 = vpack.c.b16 %v760, %v759
        %v782 = vpack.c.b16 %v762, %v761
        %v783 = vpack.c.b16 %v764, %v763
        %v784 = vpack.c.b16 %v766, %v765
        %v804 = vsel %vm271, %v687, 0
        %v807 = vsel %vm271, %v690, 0
        %809 = vmatprep.subr.bf16.mxu0 0
        %810 = vmatpush1.bf16.msra.mxu0 %v774
        %811 = vmatprep.subr.bf16.mxu0 0
        %812 = vmatpush1.bf16.msra.mxu0 %v773
        %813 = vmatprep.subr.bf16.mxu0 0
        %814 = vmatpush1.bf16.msra.mxu0 %v772
        %815 = vmatprep.subr.bf16.mxu0 0
        %816 = vmatpush1.bf16.msra.mxu0 %v771
        %817 = vmatprep.subr.bf16.mxu0 0
        %818 = vmatpush1.bf16.msra.mxu0 %v770
        %819 = vmatprep.subr.bf16.mxu0 0
        %820 = vmatpush1.bf16.msra.mxu0 %v769
        %821 = vmatprep.subr.bf16.mxu0 0
        %822 = vmatpush1.bf16.msra.mxu0 %v768
        %823 = vmatprep.subr.bf16.mxu0 0
        %824 = vmatpush1.bf16.msra.mxu0 %v767
        %825 = vmatprep.subr.bf16.mxu0 0
        %826 = vmatpush2.bf16.msra.mxu0 %v782
        %827 = vmatprep.subr.bf16.mxu0 0
        %828 = vmatpush2.bf16.msra.mxu0 %v781
        %829 = vmatprep.subr.bf16.mxu0 0
        %830 = vmatpush2.bf16.msra.mxu0 %v780
        %831 = vmatprep.subr.bf16.mxu0 0
        %832 = vmatpush2.bf16.msra.mxu0 %v779
        %833 = vmatprep.subr.bf16.mxu0 0
        %834 = vmatpush2.bf16.msra.mxu0 %v778
        %835 = vmatprep.subr.bf16.mxu0 0
        %836 = vmatpush2.bf16.msra.mxu0 %v777
        %837 = vmatprep.subr.bf16.mxu0 0
        %838 = vmatpush2.bf16.msra.mxu0 %v776
        %839 = vmatprep.subr.bf16.mxu0 0
        %840 = vmatpush2.bf16.msra.mxu0 %v775
        %841 = vmatprep.mubr.bf16.mxu0 %v686
        %842 = vmatmul.mubr.bf16.gmra.mxu0 %v685
        %v843 = vpop.f32.mrf.mxu0
        %v844 = vadd.f32 0.0, %v843
        %v845 = vpop.f32.mrf.mxu0
        %v846 = vpop.f32.mrf.mxu0
        %v847 = vadd.f32 0.0, %v846
        %v848 = vpop.f32.mrf.mxu0
        %849 = vmatprep.mubr.bf16.mxu0 %v689
        %850 = vmatmul.mubr.bf16.gmra.mxu0 %v688
        %v851 = vpop.f32.mrf.mxu0
        %v852 = vadd.f32 0.0, %v851
        %v853 = vpop.f32.mrf.mxu0
        %v854 = vpop.f32.mrf.mxu0
        %v855 = vadd.f32 0.0, %v854
        %v856 = vpop.f32.mrf.mxu0
        %857 = vdwg.mxu0
        %858 = vmatprep.subr.bf16.mxu0 0
        %859 = vmatpush1.bf16.msra.mxu0 0
        %860 = vmatprep.subr.bf16.mxu0 0
        %861 = vmatpush1.bf16.msra.mxu0 0
        %862 = vmatprep.subr.bf16.mxu0 0
        %863 = vmatpush1.bf16.msra.mxu0 0
        %864 = vmatprep.subr.bf16.mxu0 0
        %865 = vmatpush1.bf16.msra.mxu0 0
        %866 = vmatprep.subr.bf16.mxu0 0
        %867 = vmatpush1.bf16.msra.mxu0 0
        %868 = vmatprep.subr.bf16.mxu0 0
        %869 = vmatpush1.bf16.msra.mxu0 0
        %870 = vmatprep.subr.bf16.mxu0 0
        %871 = vmatpush1.bf16.msra.mxu0 %v784
        %872 = vmatprep.subr.bf16.mxu0 0
        %873 = vmatpush1.bf16.msra.mxu0 %v783
        %874 = vmatprep.subr.bf16.mxu0 0
        %875 = vmatpush2.bf16.msra.mxu0 0
        %876 = vmatprep.subr.bf16.mxu0 0
        %877 = vmatpush2.bf16.msra.mxu0 0
        %878 = vmatprep.subr.bf16.mxu0 0
        %879 = vmatpush2.bf16.msra.mxu0 0
        %880 = vmatprep.subr.bf16.mxu0 0
        %881 = vmatpush2.bf16.msra.mxu0 0
        %882 = vmatprep.subr.bf16.mxu0 0
        %883 = vmatpush2.bf16.msra.mxu0 0
        %884 = vmatprep.subr.bf16.mxu0 0
        %885 = vmatpush2.bf16.msra.mxu0 0
        %886 = vmatprep.subr.bf16.mxu0 0
        %887 = vmatpush2.bf16.msra.mxu0 0
        %888 = vmatprep.subr.bf16.mxu0 0
        %889 = vmatpush2.bf16.msra.mxu0 0
        %890 = vmatprep.mubr.bf16.mxu0 0
        %891 = vmatmul.mubr.bf16.gmra.mxu0 %v804
        %v892 = vpop.f32.mrf.mxu0
        %v893 = vadd.f32 %v844, %v892
        %v894 = vpop.f32.mrf.mxu0
        %v895 = vpop.f32.mrf.mxu0
        %v896 = vadd.f32 %v847, %v895
        %v897 = vpop.f32.mrf.mxu0
        %898 = vmatprep.mubr.bf16.mxu0 0
        %899 = vmatmul.mubr.bf16.gmra.mxu0 %v807
        %v900 = vpop.f32.mrf.mxu0
        %v901 = vadd.f32 %v852, %v900
        %v902 = vpop.f32.mrf.mxu0
        %v903 = vpop.f32.mrf.mxu0
        %v904 = vadd.f32 %v855, %v903
        %v905 = vpop.f32.mrf.mxu0
        %906 = vdwg.mxu0
        %v907 = vmax.f32 %v893, 0.0
        %v908 = vmax.f32 %v896, 0.0
        %v909 = vmax.f32 %v901, 0.0
        %v910 = vmax.f32 %v904, 0.0
        %s911 = scalar_lea.vmem [#allocation3], 16
        %912 = vst.msk [vmem:[%s911 + $0x1] sm:$0xff] %vm291, %v907
        %913 = vst.msk [vmem:[%s911 + $0x11] sm:$0xff] %vm291, %v908
        %914 = vst.msk [vmem:[%s911 + $0x21] sm:$0xff] %vm291, %v909
        %915 = vst.msk [vmem:[%s911 + $0x31] sm:$0xff] %vm291, %v910
        %v916 = vld [vmem:[#allocation3] sm:$0xff]
        %v917 = vld [vmem:[#allocation3 + $0x10] sm:$0xff]
        %v918 = vld [vmem:[#allocation3 + $0x20] sm:$0xff]
        %v919 = vld [vmem:[#allocation3 + $0x30] sm:$0xff]
        %v920 = vpack.c.bf16 %v917, %v916
        %v921 = vpack.c.bf16 %v919, %v918
        %v924 = vunpack.c.l.b16 %v920
        %v925 = vunpack.c.h.b16 %v920
        %v926 = vunpack.c.l.b16 %v921
        %v927 = vunpack.c.h.b16 %v921
        %v928 = vpack.c.b16 %v924, %v924
        %v929 = vpack.c.b16 %v925, %v925
        %v930 = vpack.c.b16 %v926, %v926
        %v931 = vpack.c.b16 %v927, %v927
        %vm936 = vcmask 519168
        %937 = vst.msk [vmem:[#allocation5] sm:$0xf] %vm936, %v928
        %938 = vst.msk [vmem:[#allocation5 + $0x14] sm:$0xf] %vm936, %v929
        %939 = vst.msk [vmem:[#allocation5 + $0x28] sm:$0xf] %vm936, %v930
        %940 = vst.msk [vmem:[#allocation5 + $0x3c] sm:$0xf] %vm936, %v931
        %v941 = vld [vmem:[#allocation3 + $0x1] sm:$0xff]
        %v942 = vld [vmem:[#allocation3 + $0x11] sm:$0xff]
        %v943 = vld [vmem:[#allocation3 + $0x21] sm:$0xff]
        %v944 = vld [vmem:[#allocation3 + $0x31] sm:$0xff]
        %v945 = vpack.c.bf16 %v942, %v941
        %v946 = vpack.c.bf16 %v944, %v943
        %v949 = vunpack.c.l.b16 %v945
        %v950 = vunpack.c.h.b16 %v945
        %v951 = vunpack.c.l.b16 %v946
        %v952 = vunpack.c.h.b16 %v946
        %v953 = vpack.c.b16 %v949, %v949
        %v954 = vpack.c.b16 %v950, %v950
        %v955 = vpack.c.b16 %v951, %v951
        %v956 = vpack.c.b16 %v952, %v952
        %957 = vrot.lane.b32.xlu0 %v953, 64
        %v958 = vpop.permute.xlu0 %957
        %959 = vrot.lane.b32.xlu0 %v954, 64
        %v960 = vpop.permute.xlu0 %959
        %961 = vrot.lane.b32.xlu0 %v955, 64
        %v962 = vpop.permute.xlu0 %961
        %963 = vrot.lane.b32.xlu0 %v956, 64
        %v964 = vpop.permute.xlu0 %963
        %vm969 = vcmask 1043968
        %970 = vst.msk [vmem:[#allocation5] sm:$0xf] %vm969, %v958
        %971 = vst.msk [vmem:[#allocation5 + $0x14] sm:$0xf] %vm969, %v960
        %972 = vst.msk [vmem:[#allocation5 + $0x28] sm:$0xf] %vm969, %v962
        %973 = vst.msk [vmem:[#allocation5 + $0x3c] sm:$0xf] %vm969, %v964
        %v974 = vld [vmem:[#allocation3 + $0x2] sm:$0xff]
        %v975 = vld [vmem:[#allocation3 + $0x12] sm:$0xff]
        %v976 = vld [vmem:[#allocation3 + $0x22] sm:$0xff]
        %v977 = vld [vmem:[#allocation3 + $0x32] sm:$0xff]
        %v978 = vpack.c.bf16 %v975, %v974
        %v979 = vpack.c.bf16 %v977, %v976
        %v982 = vunpack.c.l.b16 %v978
        %v983 = vunpack.c.h.b16 %v978
        %v984 = vunpack.c.l.b16 %v979
        %v985 = vunpack.c.h.b16 %v979
        %v986 = vpack.c.b16 %v982, %v982
        %v987 = vpack.c.b16 %v983, %v983
        %v988 = vpack.c.b16 %v984, %v984
        %v989 = vpack.c.b16 %v985, %v985
        %994 = vst.msk [vmem:[#allocation5 + $0x4] sm:$0xf] %vm936, %v986
        %995 = vst.msk [vmem:[#allocation5 + $0x18] sm:$0xf] %vm936, %v987
        %996 = vst.msk [vmem:[#allocation5 + $0x2c] sm:$0xf] %vm936, %v988
        %997 = vst.msk [vmem:[#allocation5 + $0x40] sm:$0xf] %vm936, %v989
        %v998 = vld [vmem:[%s911] sm:$0xff]
        %v999 = vld [vmem:[%s911 + $0x10] sm:$0xff]
        %v1000 = vld [vmem:[%s911 + $0x20] sm:$0xff]
        %v1001 = vld [vmem:[%s911 + $0x30] sm:$0xff]
        %v1002 = vpack.c.bf16 %v999, %v998
        %v1003 = vpack.c.bf16 %v1001, %v1000
        %v1006 = vunpack.c.l.b16 %v1002
        %v1007 = vunpack.c.h.b16 %v1002
        %v1008 = vunpack.c.l.b16 %v1003
        %v1009 = vunpack.c.h.b16 %v1003
        %v1010 = vpack.c.b16 %v1006, %v1006
        %v1011 = vpack.c.b16 %v1007, %v1007
        %v1012 = vpack.c.b16 %v1008, %v1008
        %v1013 = vpack.c.b16 %v1009, %v1009
        %1014 = vrot.lane.b32.xlu0 %v1010, 64
        %v1015 = vpop.permute.xlu0 %1014
        %1016 = vrot.lane.b32.xlu0 %v1011, 64
        %v1017 = vpop.permute.xlu0 %1016
        %1018 = vrot.lane.b32.xlu0 %v1012, 64
        %v1019 = vpop.permute.xlu0 %1018
        %1020 = vrot.lane.b32.xlu0 %v1013, 64
        %v1021 = vpop.permute.xlu0 %1020
        %1026 = vst.msk [vmem:[#allocation5 + $0x4] sm:$0xf] %vm969, %v1015
        %1027 = vst.msk [vmem:[#allocation5 + $0x18] sm:$0xf] %vm969, %v1017
        %1028 = vst.msk [vmem:[#allocation5 + $0x2c] sm:$0xf] %vm969, %v1019
        %1029 = vst.msk [vmem:[#allocation5 + $0x40] sm:$0xf] %vm969, %v1021
        %v1030 = vld [vmem:[%s911 + $0x1] sm:$0xff]
        %v1031 = vld [vmem:[%s911 + $0x11] sm:$0xff]
        %v1032 = vld [vmem:[%s911 + $0x21] sm:$0xff]
        %v1033 = vld [vmem:[%s911 + $0x31] sm:$0xff]
        %v1034 = vpack.c.bf16 %v1031, %v1030
        %v1035 = vpack.c.bf16 %v1033, %v1032
        %v1038 = vunpack.c.l.b16 %v1034
        %v1039 = vunpack.c.h.b16 %v1034
        %v1040 = vunpack.c.l.b16 %v1035
        %v1041 = vunpack.c.h.b16 %v1035
        %v1042 = vpack.c.b16 %v1038, %v1038
        %v1043 = vpack.c.b16 %v1039, %v1039
        %v1044 = vpack.c.b16 %v1040, %v1040
        %v1045 = vpack.c.b16 %v1041, %v1041
        %1050 = vst.msk [vmem:[#allocation5 + $0x8] sm:$0xf] %vm936, %v1042
        %1051 = vst.msk [vmem:[#allocation5 + $0x1c] sm:$0xf] %vm936, %v1043
        %1052 = vst.msk [vmem:[#allocation5 + $0x30] sm:$0xf] %vm936, %v1044
        %1053 = vst.msk [vmem:[#allocation5 + $0x44] sm:$0xf] %vm936, %v1045
        %v1054 = vld [vmem:[%s911 + $0x2] sm:$0xff]
        %v1055 = vld [vmem:[%s911 + $0x12] sm:$0xff]
        %v1056 = vld [vmem:[%s911 + $0x22] sm:$0xff]
        %v1057 = vld [vmem:[%s911 + $0x32] sm:$0xff]
        %v1058 = vpack.c.bf16 %v1055, %v1054
        %v1059 = vpack.c.bf16 %v1057, %v1056
        %v1062 = vunpack.c.l.b16 %v1058
        %v1063 = vunpack.c.h.b16 %v1058
        %v1064 = vunpack.c.l.b16 %v1059
        %v1065 = vunpack.c.h.b16 %v1059
        %v1066 = vpack.c.b16 %v1062, %v1062
        %v1067 = vpack.c.b16 %v1063, %v1063
        %v1068 = vpack.c.b16 %v1064, %v1064
        %v1069 = vpack.c.b16 %v1065, %v1065
        %1070 = vrot.lane.b32.xlu0 %v1066, 64
        %v1071 = vpop.permute.xlu0 %1070
        %1072 = vrot.lane.b32.xlu0 %v1067, 64
        %v1073 = vpop.permute.xlu0 %1072
        %1074 = vrot.lane.b32.xlu0 %v1068, 64
        %v1075 = vpop.permute.xlu0 %1074
        %1076 = vrot.lane.b32.xlu0 %v1069, 64
        %v1077 = vpop.permute.xlu0 %1076
        %1082 = vst.msk [vmem:[#allocation5 + $0x8] sm:$0xf] %vm969, %v1071
        %1083 = vst.msk [vmem:[#allocation5 + $0x1c] sm:$0xf] %vm969, %v1073
        %1084 = vst.msk [vmem:[#allocation5 + $0x30] sm:$0xf] %vm969, %v1075
        %1085 = vst.msk [vmem:[#allocation5 + $0x44] sm:$0xf] %vm969, %v1077
        %s1086 = scalar_lea.vmem [#allocation3], 32
        %v1087 = vld [vmem:[%s1086] sm:$0xff]
        %v1088 = vld [vmem:[%s1086 + $0x10] sm:$0xff]
        %v1089 = vld [vmem:[%s1086 + $0x20] sm:$0xff]
        %v1090 = vld [vmem:[%s1086 + $0x30] sm:$0xff]
        %v1091 = vpack.c.bf16 %v1088, %v1087
        %v1092 = vpack.c.bf16 %v1090, %v1089
        %v1095 = vunpack.c.l.b16 %v1091
        %v1096 = vunpack.c.h.b16 %v1091
        %v1097 = vunpack.c.l.b16 %v1092
        %v1098 = vunpack.c.h.b16 %v1092
        %v1099 = vpack.c.b16 %v1095, %v1095
        %v1100 = vpack.c.b16 %v1096, %v1096
        %v1101 = vpack.c.b16 %v1097, %v1097
        %v1102 = vpack.c.b16 %v1098, %v1098
        %1107 = vst.msk [vmem:[#allocation5 + $0xc] sm:$0xf] %vm936, %v1099
        %1108 = vst.msk [vmem:[#allocation5 + $0x20] sm:$0xf] %vm936, %v1100
        %1109 = vst.msk [vmem:[#allocation5 + $0x34] sm:$0xf] %vm936, %v1101
        %1110 = vst.msk [vmem:[#allocation5 + $0x48] sm:$0xf] %vm936, %v1102
        %v1111 = vld [vmem:[%s1086 + $0x1] sm:$0xff]
        %v1112 = vld [vmem:[%s1086 + $0x11] sm:$0xff]
        %v1113 = vld [vmem:[%s1086 + $0x21] sm:$0xff]
        %v1114 = vld [vmem:[%s1086 + $0x31] sm:$0xff]
        %v1115 = vpack.c.bf16 %v1112, %v1111
        %v1116 = vpack.c.bf16 %v1114, %v1113
        %v1119 = vunpack.c.l.b16 %v1115
        %v1120 = vunpack.c.h.b16 %v1115
        %v1121 = vunpack.c.l.b16 %v1116
        %v1122 = vunpack.c.h.b16 %v1116
        %v1123 = vpack.c.b16 %v1119, %v1119
        %v1124 = vpack.c.b16 %v1120, %v1120
        %v1125 = vpack.c.b16 %v1121, %v1121
        %v1126 = vpack.c.b16 %v1122, %v1122
        %1127 = vrot.lane.b32.xlu0 %v1123, 64
        %v1128 = vpop.permute.xlu0 %1127
        %1129 = vrot.lane.b32.xlu0 %v1124, 64
        %v1130 = vpop.permute.xlu0 %1129
        %1131 = vrot.lane.b32.xlu0 %v1125, 64
        %v1132 = vpop.permute.xlu0 %1131
        %1133 = vrot.lane.b32.xlu0 %v1126, 64
        %v1134 = vpop.permute.xlu0 %1133
        %1139 = vst.msk [vmem:[#allocation5 + $0xc] sm:$0xf] %vm969, %v1128
        %1140 = vst.msk [vmem:[#allocation5 + $0x20] sm:$0xf] %vm969, %v1130
        %1141 = vst.msk [vmem:[#allocation5 + $0x34] sm:$0xf] %vm969, %v1132
        %1142 = vst.msk [vmem:[#allocation5 + $0x48] sm:$0xf] %vm969, %v1134
        %v1143 = vld [vmem:[%s1086 + $0x2] sm:$0xff]
        %v1144 = vld [vmem:[%s1086 + $0x12] sm:$0xff]
        %v1145 = vld [vmem:[%s1086 + $0x22] sm:$0xff]
        %v1146 = vld [vmem:[%s1086 + $0x32] sm:$0xff]
        %v1147 = vpack.c.bf16 %v1144, %v1143
        %v1148 = vpack.c.bf16 %v1146, %v1145
        %v1151 = vunpack.c.l.b16 %v1147
        %v1152 = vunpack.c.h.b16 %v1147
        %v1153 = vunpack.c.l.b16 %v1148
        %v1154 = vunpack.c.h.b16 %v1148
        %v1155 = vpack.c.b16 %v1151, %v1151
        %v1156 = vpack.c.b16 %v1152, %v1152
        %v1157 = vpack.c.b16 %v1153, %v1153
        %v1158 = vpack.c.b16 %v1154, %v1154
        %1163 = vst.msk [vmem:[#allocation5 + $0x10] sm:$0xf] %vm936, %v1155
        %1164 = vst.msk [vmem:[#allocation5 + $0x24] sm:$0xf] %vm936, %v1156
        %1165 = vst.msk [vmem:[#allocation5 + $0x38] sm:$0xf] %vm936, %v1157
        %1166 = vst.msk [vmem:[#allocation5 + $0x4c] sm:$0xf] %vm936, %v1158
        %v1167 = vld [vmem:[#allocation5] sm:$0xff]
        %v1168 = vld [vmem:[#allocation5 + $0x8] sm:$0xff]
        %v1169 = vld [vmem:[#allocation5 + $0x10] sm:$0xf]
        %v1170 = vld [vmem:[#allocation5 + $0x14] sm:$0xff]
        %v1171 = vld [vmem:[#allocation5 + $0x1c] sm:$0xff]
        %v1172 = vld [vmem:[#allocation5 + $0x24] sm:$0xf]
        %v1173 = vld [vmem:[#allocation5 + $0x28] sm:$0xff]
        %v1174 = vld [vmem:[#allocation5 + $0x30] sm:$0xff]
        %v1175 = vld [vmem:[#allocation5 + $0x38] sm:$0xf]
        %v1176 = vld [vmem:[#allocation5 + $0x3c] sm:$0xff]
        %v1177 = vld [vmem:[#allocation5 + $0x44] sm:$0xff]
        %v1178 = vld [vmem:[#allocation5 + $0x4c] sm:$0xf]
        %v1179 = vld [vmem:[%s3] sm:$0xf]
        %v1180 = vld [vmem:[%s3 + $0x4] sm:$0xf]
        %v1181 = vld [vmem:[%s3 + $0x8] sm:$0xf]
        %v1182 = vld [vmem:[%s3 + $0xc] sm:$0xf]
        %v1183 = vld [vmem:[%s3 + $0x10] sm:$0xf]
        %v1184 = vld [vmem:[%s3 + $0x14] sm:$0xf]
        %v1185 = vld [vmem:[%s3 + $0x18] sm:$0xf]
        %v1186 = vld [vmem:[%s3 + $0x1c] sm:$0xf]
        %v1187 = vld [vmem:[%s3 + $0x20] sm:$0xf]
        %v1188 = vld [vmem:[%s3 + $0x24] sm:$0xf]
        %v1189 = vld [vmem:[%s3 + $0x28] sm:$0xf]
        %v1190 = vld [vmem:[%s3 + $0x2c] sm:$0xf]
        %v1191 = vld [vmem:[%s3 + $0x30] sm:$0xf]
        %v1192 = vld [vmem:[%s3 + $0x34] sm:$0xf]
        %v1193 = vld [vmem:[%s3 + $0x38] sm:$0xf]
        %v1194 = vld [vmem:[%s3 + $0x3c] sm:$0xf]
        %v1195 = vld [vmem:[%s3 + $0x40] sm:$0xf]
        %v1196 = vld [vmem:[%s3 + $0x44] sm:$0xf]
        %v1197 = vld [vmem:[%s3 + $0x48] sm:$0xf]
        %v1198 = vld [vmem:[%s3 + $0x4c] sm:$0xf]
        %v1199 = vld [vmem:[%s3 + $0x50] sm:$0xf]
        %v1200 = vld [vmem:[%s3 + $0x54] sm:$0xf]
        %v1201 = vld [vmem:[%s3 + $0x58] sm:$0xf]
        %v1202 = vld [vmem:[%s3 + $0x5c] sm:$0xf]
        %v1203 = vld [vmem:[%s3 + $0x60] sm:$0xf]
        %v1204 = vld [vmem:[%s3 + $0x64] sm:$0xf]
        %v1205 = vld [vmem:[%s3 + $0x68] sm:$0xf]
        %v1206 = vld [vmem:[%s3 + $0x6c] sm:$0xf]
        %v1207 = vld [vmem:[%s3 + $0x70] sm:$0xf]
        %v1208 = vld [vmem:[%s3 + $0x74] sm:$0xf]
        %v1209 = vld [vmem:[%s3 + $0x78] sm:$0xf]
        %v1210 = vld [vmem:[%s3 + $0x7c] sm:$0xf]
        %v1211 = vld [vmem:[%s3 + $0x80] sm:$0xf]
        %v1212 = vld [vmem:[%s3 + $0x84] sm:$0xf]
        %v1213 = vld [vmem:[%s3 + $0x88] sm:$0xf]
        %v1214 = vld [vmem:[%s3 + $0x8c] sm:$0xf]
        %v1215 = vld [vmem:[%s3 + $0x90] sm:$0xf]
        %v1216 = vld [vmem:[%s3 + $0x94] sm:$0xf]
        %v1217 = vld [vmem:[%s3 + $0x98] sm:$0xf]
        %v1218 = vld [vmem:[%s3 + $0x9c] sm:$0xf]
        %v1219 = vld [vmem:[%s3 + $0xa0] sm:$0xf]
        %v1220 = vld [vmem:[%s3 + $0xa4] sm:$0xf]
        %v1221 = vld [vmem:[%s3 + $0xa8] sm:$0xf]
        %v1222 = vld [vmem:[%s3 + $0xac] sm:$0xf]
        %v1223 = vld [vmem:[%s3 + $0xb0] sm:$0xf]
        %v1224 = vld [vmem:[%s3 + $0xb4] sm:$0xf]
        %v1225 = vld [vmem:[%s3 + $0xb8] sm:$0xf]
        %v1226 = vld [vmem:[%s3 + $0xbc] sm:$0xf]
        %v1227 = vld [vmem:[%s3 + $0xc0] sm:$0xf]
        %v1228 = vld [vmem:[%s3 + $0xc4] sm:$0xf]
        %v1229 = vld [vmem:[%s3 + $0xc8] sm:$0xf]
        %v1230 = vld [vmem:[%s3 + $0xcc] sm:$0xf]
        %v1231 = vld [vmem:[%s3 + $0xd0] sm:$0xf]
        %v1232 = vld [vmem:[%s3 + $0xd4] sm:$0xf]
        %v1233 = vld [vmem:[%s3 + $0xd8] sm:$0xf]
        %v1234 = vld [vmem:[%s3 + $0xdc] sm:$0xf]
        %v1235 = vld [vmem:[%s3 + $0xe0] sm:$0xf]
        %v1236 = vld [vmem:[%s3 + $0xe4] sm:$0xf]
        %v1237 = vld [vmem:[%s3 + $0xe8] sm:$0xf]
        %v1238 = vld [vmem:[%s3 + $0xec] sm:$0xf]
        %v1239 = vld [vmem:[%s3 + $0xf0] sm:$0xf]
        %v1240 = vld [vmem:[%s3 + $0xf4] sm:$0xf]
        %v1241 = vld [vmem:[%s3 + $0xf8] sm:$0xf]
        %v1242 = vld [vmem:[%s3 + $0xfc] sm:$0xf]
        %v1243 = vld [vmem:[%s3 + $0x100] sm:$0xf]
        %v1244 = vld [vmem:[%s3 + $0x104] sm:$0xf]
        %v1245 = vld [vmem:[%s3 + $0x108] sm:$0xf]
        %v1246 = vld [vmem:[%s3 + $0x10c] sm:$0xf]
        %v1247 = vld [vmem:[%s3 + $0x110] sm:$0xf]
        %v1248 = vld [vmem:[%s3 + $0x114] sm:$0xf]
        %v1249 = vld [vmem:[%s3 + $0x118] sm:$0xf]
        %v1250 = vld [vmem:[%s3 + $0x11c] sm:$0xf]
        %v1263 = vunpack.c.l.b16 %v1167
        %v1264 = vunpack.c.h.b16 %v1167
        %v1265 = vunpack.c.l.b16 %v1168
        %v1266 = vunpack.c.h.b16 %v1168
        %v1267 = vunpack.c.l.b16 %v1169
        %v1268 = vunpack.c.l.b16 %v1170
        %v1269 = vunpack.c.h.b16 %v1170
        %v1270 = vunpack.c.l.b16 %v1171
        %v1271 = vunpack.c.h.b16 %v1171
        %v1272 = vunpack.c.l.b16 %v1172
        %v1273 = vunpack.c.l.b16 %v1173
        %v1274 = vunpack.c.h.b16 %v1173
        %v1275 = vunpack.c.l.b16 %v1174
        %v1276 = vunpack.c.h.b16 %v1174
        %v1277 = vunpack.c.l.b16 %v1175
        %v1278 = vunpack.c.l.b16 %v1176
        %v1279 = vunpack.c.h.b16 %v1176
        %v1280 = vunpack.c.l.b16 %v1177
        %v1281 = vunpack.c.h.b16 %v1177
        %v1282 = vunpack.c.l.b16 %v1178
        %v1283 = vpack.c.b16 %v1268, %v1263
        %v1284 = vpack.c.b16 %v1269, %v1264
        %v1285 = vpack.c.b16 %v1270, %v1265
        %v1286 = vpack.c.b16 %v1271, %v1266
        %v1287 = vpack.c.b16 %v1272, %v1267
        %v1288 = vpack.c.b16 %v1278, %v1273
        %v1289 = vpack.c.b16 %v1279, %v1274
        %v1290 = vpack.c.b16 %v1280, %v1275
        %v1291 = vpack.c.b16 %v1281, %v1276
        %v1292 = vpack.c.b16 %v1282, %v1277
        %v1373 = vunpack.c.l.b16 %v1179
        %v1374 = vunpack.c.l.b16 %v1180
        %v1375 = vunpack.c.l.b16 %v1181
        %v1376 = vunpack.c.l.b16 %v1182
        %v1377 = vunpack.c.l.b16 %v1183
        %v1378 = vunpack.c.l.b16 %v1184
        %v1379 = vunpack.c.l.b16 %v1185
        %v1380 = vunpack.c.l.b16 %v1186
        %v1381 = vunpack.c.l.b16 %v1187
        %v1382 = vunpack.c.l.b16 %v1188
        %v1383 = vunpack.c.l.b16 %v1189
        %v1384 = vunpack.c.l.b16 %v1190
        %v1385 = vunpack.c.l.b16 %v1191
        %v1386 = vunpack.c.l.b16 %v1192
        %v1387 = vunpack.c.l.b16 %v1193
        %v1388 = vunpack.c.l.b16 %v1194
        %v1389 = vunpack.c.l.b16 %v1195
        %v1390 = vunpack.c.l.b16 %v1196
        %v1391 = vunpack.c.l.b16 %v1197
        %v1392 = vunpack.c.l.b16 %v1198
        %v1393 = vunpack.c.l.b16 %v1199
        %v1394 = vunpack.c.l.b16 %v1200
        %v1395 = vunpack.c.l.b16 %v1201
        %v1396 = vunpack.c.l.b16 %v1202
        %v1397 = vunpack.c.l.b16 %v1203
        %v1398 = vunpack.c.l.b16 %v1204
        %v1399 = vunpack.c.l.b16 %v1205
        %v1400 = vunpack.c.l.b16 %v1206
        %v1401 = vunpack.c.l.b16 %v1207
        %v1402 = vunpack.c.l.b16 %v1208
        %v1403 = vunpack.c.l.b16 %v1209
        %v1404 = vunpack.c.l.b16 %v1210
        %v1405 = vunpack.c.l.b16 %v1211
        %v1406 = vunpack.c.l.b16 %v1212
        %v1407 = vunpack.c.l.b16 %v1213
        %v1408 = vunpack.c.l.b16 %v1214
        %v1409 = vunpack.c.l.b16 %v1215
        %v1410 = vunpack.c.l.b16 %v1216
        %v1411 = vunpack.c.l.b16 %v1217
        %v1412 = vunpack.c.l.b16 %v1218
        %v1413 = vunpack.c.l.b16 %v1219
        %v1414 = vunpack.c.l.b16 %v1220
        %v1415 = vunpack.c.l.b16 %v1221
        %v1416 = vunpack.c.l.b16 %v1222
        %v1417 = vunpack.c.l.b16 %v1223
        %v1418 = vunpack.c.l.b16 %v1224
        %v1419 = vunpack.c.l.b16 %v1225
        %v1420 = vunpack.c.l.b16 %v1226
        %v1421 = vunpack.c.l.b16 %v1227
        %v1422 = vunpack.c.l.b16 %v1228
        %v1423 = vunpack.c.l.b16 %v1229
        %v1424 = vunpack.c.l.b16 %v1230
        %v1425 = vunpack.c.l.b16 %v1231
        %v1426 = vunpack.c.l.b16 %v1232
        %v1427 = vunpack.c.l.b16 %v1233
        %v1428 = vunpack.c.l.b16 %v1234
        %v1429 = vunpack.c.l.b16 %v1235
        %v1430 = vunpack.c.l.b16 %v1236
        %v1431 = vunpack.c.l.b16 %v1237
        %v1432 = vunpack.c.l.b16 %v1238
        %v1433 = vunpack.c.l.b16 %v1239
        %v1434 = vunpack.c.l.b16 %v1240
        %v1435 = vunpack.c.l.b16 %v1241
        %v1436 = vunpack.c.l.b16 %v1242
        %v1437 = vunpack.c.l.b16 %v1243
        %v1438 = vunpack.c.l.b16 %v1244
        %v1439 = vunpack.c.l.b16 %v1245
        %v1440 = vunpack.c.l.b16 %v1246
        %v1441 = vunpack.c.l.b16 %v1247
        %v1442 = vunpack.c.l.b16 %v1248
        %v1443 = vunpack.c.l.b16 %v1249
        %v1444 = vunpack.c.l.b16 %v1250
        %v1445 = vpack.c.b16 %v1374, %v1373
        %v1446 = vpack.c.b16 %v1376, %v1375
        %v1447 = vpack.c.b16 %v1378, %v1377
        %v1448 = vpack.c.b16 %v1380, %v1379
        %v1449 = vpack.c.b16 %v1382, %v1381
        %v1450 = vpack.c.b16 %v1384, %v1383
        %v1451 = vpack.c.b16 %v1386, %v1385
        %v1452 = vpack.c.b16 %v1388, %v1387
        %v1453 = vpack.c.b16 %v1390, %v1389
        %v1454 = vpack.c.b16 %v1392, %v1391
        %v1455 = vpack.c.b16 %v1394, %v1393
        %v1456 = vpack.c.b16 %v1396, %v1395
        %v1457 = vpack.c.b16 %v1398, %v1397
        %v1458 = vpack.c.b16 %v1400, %v1399
        %v1459 = vpack.c.b16 %v1402, %v1401
        %v1460 = vpack.c.b16 %v1404, %v1403
        %v1461 = vpack.c.b16 %v1406, %v1405
        %v1462 = vpack.c.b16 %v1408, %v1407
        %v1463 = vpack.c.b16 %v1410, %v1409
        %v1464 = vpack.c.b16 %v1412, %v1411
        %v1465 = vpack.c.b16 %v1414, %v1413
        %v1466 = vpack.c.b16 %v1416, %v1415
        %v1467 = vpack.c.b16 %v1418, %v1417
        %v1468 = vpack.c.b16 %v1420, %v1419
        %v1469 = vpack.c.b16 %v1422, %v1421
        %v1470 = vpack.c.b16 %v1424, %v1423
        %v1471 = vpack.c.b16 %v1426, %v1425
        %v1472 = vpack.c.b16 %v1428, %v1427
        %v1473 = vpack.c.b16 %v1430, %v1429
        %v1474 = vpack.c.b16 %v1432, %v1431
        %v1475 = vpack.c.b16 %v1434, %v1433
        %v1476 = vpack.c.b16 %v1436, %v1435
        %v1477 = vpack.c.b16 %v1438, %v1437
        %v1478 = vpack.c.b16 %v1440, %v1439
        %v1479 = vpack.c.b16 %v1442, %v1441
        %v1480 = vpack.c.b16 %v1444, %v1443
        %v1518 = vsel %vm291, %v1287, 0
        %v1521 = vsel %vm291, %v1292, 0
        %1523 = vmatprep.subr.bf16.mxu0 0
        %1524 = vmatpush1.bf16.msra.mxu0 %v1452
        %1525 = vmatprep.subr.bf16.mxu0 0
        %1526 = vmatpush1.bf16.msra.mxu0 %v1451
        %1527 = vmatprep.subr.bf16.mxu0 0
        %1528 = vmatpush1.bf16.msra.mxu0 %v1450
        %1529 = vmatprep.subr.bf16.mxu0 0
        %1530 = vmatpush1.bf16.msra.mxu0 %v1449
        %1531 = vmatprep.subr.bf16.mxu0 0
        %1532 = vmatpush1.bf16.msra.mxu0 %v1448
        %1533 = vmatprep.subr.bf16.mxu0 0
        %1534 = vmatpush1.bf16.msra.mxu0 %v1447
        %1535 = vmatprep.subr.bf16.mxu0 0
        %1536 = vmatpush1.bf16.msra.mxu0 %v1446
        %1537 = vmatprep.subr.bf16.mxu0 0
        %1538 = vmatpush1.bf16.msra.mxu0 %v1445
        %1539 = vmatprep.subr.bf16.mxu0 0
        %1540 = vmatpush2.bf16.msra.mxu0 %v1460
        %1541 = vmatprep.subr.bf16.mxu0 0
        %1542 = vmatpush2.bf16.msra.mxu0 %v1459
        %1543 = vmatprep.subr.bf16.mxu0 0
        %1544 = vmatpush2.bf16.msra.mxu0 %v1458
        %1545 = vmatprep.subr.bf16.mxu0 0
        %1546 = vmatpush2.bf16.msra.mxu0 %v1457
        %1547 = vmatprep.subr.bf16.mxu0 0
        %1548 = vmatpush2.bf16.msra.mxu0 %v1456
        %1549 = vmatprep.subr.bf16.mxu0 0
        %1550 = vmatpush2.bf16.msra.mxu0 %v1455
        %1551 = vmatprep.subr.bf16.mxu0 0
        %1552 = vmatpush2.bf16.msra.mxu0 %v1454
        %1553 = vmatprep.subr.bf16.mxu0 0
        %1554 = vmatpush2.bf16.msra.mxu0 %v1453
        %1555 = vmatprep.mubr.bf16.mxu0 %v1284
        %1556 = vmatmul.mubr.bf16.gmra.mxu0 %v1283
        %v1557 = vpop.f32.mrf.mxu0
        %v1558 = vadd.f32 0.0, %v1557
        %v1559 = vpop.f32.mrf.mxu0
        %v1560 = vpop.f32.mrf.mxu0
        %v1561 = vadd.f32 0.0, %v1560
        %v1562 = vpop.f32.mrf.mxu0
        %1563 = vmatprep.mubr.bf16.mxu0 %v1289
        %1564 = vmatmul.mubr.bf16.gmra.mxu0 %v1288
        %v1565 = vpop.f32.mrf.mxu0
        %v1566 = vadd.f32 0.0, %v1565
        %v1567 = vpop.f32.mrf.mxu0
        %v1568 = vpop.f32.mrf.mxu0
        %v1569 = vadd.f32 0.0, %v1568
        %v1570 = vpop.f32.mrf.mxu0
        %1571 = vdwg.mxu0
        %1572 = vmatprep.subr.bf16.mxu0 0
        %1573 = vmatpush1.bf16.msra.mxu0 %v1468
        %1574 = vmatprep.subr.bf16.mxu0 0
        %1575 = vmatpush1.bf16.msra.mxu0 %v1467
        %1576 = vmatprep.subr.bf16.mxu0 0
        %1577 = vmatpush1.bf16.msra.mxu0 %v1466
        %1578 = vmatprep.subr.bf16.mxu0 0
        %1579 = vmatpush1.bf16.msra.mxu0 %v1465
        %1580 = vmatprep.subr.bf16.mxu0 0
        %1581 = vmatpush1.bf16.msra.mxu0 %v1464
        %1582 = vmatprep.subr.bf16.mxu0 0
        %1583 = vmatpush1.bf16.msra.mxu0 %v1463
        %1584 = vmatprep.subr.bf16.mxu0 0
        %1585 = vmatpush1.bf16.msra.mxu0 %v1462
        %1586 = vmatprep.subr.bf16.mxu0 0
        %1587 = vmatpush1.bf16.msra.mxu0 %v1461
        %1588 = vmatprep.subr.bf16.mxu0 0
        %1589 = vmatpush2.bf16.msra.mxu0 %v1476
        %1590 = vmatprep.subr.bf16.mxu0 0
        %1591 = vmatpush2.bf16.msra.mxu0 %v1475
        %1592 = vmatprep.subr.bf16.mxu0 0
        %1593 = vmatpush2.bf16.msra.mxu0 %v1474
        %1594 = vmatprep.subr.bf16.mxu0 0
        %1595 = vmatpush2.bf16.msra.mxu0 %v1473
        %1596 = vmatprep.subr.bf16.mxu0 0
        %1597 = vmatpush2.bf16.msra.mxu0 %v1472
        %1598 = vmatprep.subr.bf16.mxu0 0
        %1599 = vmatpush2.bf16.msra.mxu0 %v1471
        %1600 = vmatprep.subr.bf16.mxu0 0
        %1601 = vmatpush2.bf16.msra.mxu0 %v1470
        %1602 = vmatprep.subr.bf16.mxu0 0
        %1603 = vmatpush2.bf16.msra.mxu0 %v1469
        %1604 = vmatprep.mubr.bf16.mxu0 %v1286
        %1605 = vmatmul.mubr.bf16.gmra.mxu0 %v1285
        %v1606 = vpop.f32.mrf.mxu0
        %v1607 = vadd.f32 %v1558, %v1606
        %v1608 = vpop.f32.mrf.mxu0
        %v1609 = vpop.f32.mrf.mxu0
        %v1610 = vadd.f32 %v1561, %v1609
        %v1611 = vpop.f32.mrf.mxu0
        %1612 = vmatprep.mubr.bf16.mxu0 %v1291
        %1613 = vmatmul.mubr.bf16.gmra.mxu0 %v1290
        %v1614 = vpop.f32.mrf.mxu0
        %v1615 = vadd.f32 %v1566, %v1614
        %v1616 = vpop.f32.mrf.mxu0
        %v1617 = vpop.f32.mrf.mxu0
        %v1618 = vadd.f32 %v1569, %v1617
        %v1619 = vpop.f32.mrf.mxu0
        %1620 = vdwg.mxu0
        %1621 = vmatprep.subr.bf16.mxu0 0
        %1622 = vmatpush1.bf16.msra.mxu0 0
        %1623 = vmatprep.subr.bf16.mxu0 0
        %1624 = vmatpush1.bf16.msra.mxu0 0
        %1625 = vmatprep.subr.bf16.mxu0 0
        %1626 = vmatpush1.bf16.msra.mxu0 0
        %1627 = vmatprep.subr.bf16.mxu0 0
        %1628 = vmatpush1.bf16.msra.mxu0 0
        %1629 = vmatprep.subr.bf16.mxu0 0
        %1630 = vmatpush1.bf16.msra.mxu0 %v1480
        %1631 = vmatprep.subr.bf16.mxu0 0
        %1632 = vmatpush1.bf16.msra.mxu0 %v1479
        %1633 = vmatprep.subr.bf16.mxu0 0
        %1634 = vmatpush1.bf16.msra.mxu0 %v1478
        %1635 = vmatprep.subr.bf16.mxu0 0
        %1636 = vmatpush1.bf16.msra.mxu0 %v1477
        %1637 = vmatprep.subr.bf16.mxu0 0
        %1638 = vmatpush2.bf16.msra.mxu0 0
        %1639 = vmatprep.subr.bf16.mxu0 0
        %1640 = vmatpush2.bf16.msra.mxu0 0
        %1641 = vmatprep.subr.bf16.mxu0 0
        %1642 = vmatpush2.bf16.msra.mxu0 0
        %1643 = vmatprep.subr.bf16.mxu0 0
        %1644 = vmatpush2.bf16.msra.mxu0 0
        %1645 = vmatprep.subr.bf16.mxu0 0
        %1646 = vmatpush2.bf16.msra.mxu0 0
        %1647 = vmatprep.subr.bf16.mxu0 0
        %1648 = vmatpush2.bf16.msra.mxu0 0
        %1649 = vmatprep.subr.bf16.mxu0 0
        %1650 = vmatpush2.bf16.msra.mxu0 0
        %1651 = vmatprep.subr.bf16.mxu0 0
        %1652 = vmatpush2.bf16.msra.mxu0 0
        %1653 = vmatprep.mubr.bf16.mxu0 0
        %1654 = vmatmul.mubr.bf16.gmra.mxu0 %v1518
        %v1655 = vpop.f32.mrf.mxu0
        %v1656 = vadd.f32 %v1607, %v1655
        %v1657 = vpop.f32.mrf.mxu0
        %v1658 = vpop.f32.mrf.mxu0
        %v1659 = vadd.f32 %v1610, %v1658
        %v1660 = vpop.f32.mrf.mxu0
        %1661 = vmatprep.mubr.bf16.mxu0 0
        %1662 = vmatmul.mubr.bf16.gmra.mxu0 %v1521
        %v1663 = vpop.f32.mrf.mxu0
        %v1664 = vadd.f32 %v1615, %v1663
        %v1665 = vpop.f32.mrf.mxu0
        %v1666 = vpop.f32.mrf.mxu0
        %v1667 = vadd.f32 %v1618, %v1666
        %v1668 = vpop.f32.mrf.mxu0
        %1669 = vdwg.mxu0
        %v1670 = vmax.f32 %v1656, 0.0
        %v1671 = vmax.f32 %v1659, 0.0
        %v1672 = vmax.f32 %v1664, 0.0
        %v1673 = vmax.f32 %v1667, 0.0
        %1674 = vxpose.xlu0.b32.start [1/16] %v1670, 128
        %1675 = vxpose.xlu0.b32.cont [2/16] %v1671, 128
        %1676 = vxpose.xlu0.b32.cont [3/16] %v1672, 128
        %1677 = vxpose.xlu0.b32.cont [4/16] %v1673, 128
        %1678 = vxpose.xlu0.b32.cont [5/16] 0.0, 128
        %1679 = vxpose.xlu0.b32.cont [6/16] 0.0, 128
        %1680 = vxpose.xlu0.b32.cont [7/16] 0.0, 128
        %1681 = vxpose.xlu0.b32.cont [8/16] 0.0, 128
        %1682 = vxpose.xlu0.b32.cont [9/16] 0.0, 128
        %1683 = vxpose.xlu0.b32.cont [10/16] 0.0, 128
        %1684 = vxpose.xlu0.b32.cont [11/16] 0.0, 128
        %1685 = vxpose.xlu0.b32.cont [12/16] 0.0, 128
        %1686 = vxpose.xlu0.b32.cont [13/16] 0.0, 128
        %1687 = vxpose.xlu0.b32.cont [14/16] 0.0, 128
        %1688 = vxpose.xlu0.b32.cont [15/16] 0.0, 128
        %1689 = vxpose.xlu0.b32.end [16/16] 0.0, 128
        %v1690 = vpop.trf.xlu0
        %v1691 = vpop.trf.xlu0
        %v1692 = vpop.trf.xlu0
        %v1693 = vpop.trf.xlu0
        %v1694 = vpop.trf.xlu0
        %v1695 = vpop.trf.xlu0
        %v1696 = vpop.trf.xlu0
        %v1697 = vpop.trf.xlu0
        %v1698 = vpop.trf.xlu0
        %v1699 = vpop.trf.xlu0
        %v1700 = vpop.trf.xlu0
        %v1701 = vpop.trf.xlu0
        %v1702 = vpop.trf.xlu0
        %v1703 = vpop.trf.xlu0
        %v1704 = vpop.trf.xlu0
        %v1705 = vpop.trf.xlu0
        %v1706 = vld [vmem:[%s269] sm:$0xff]
        %v1707 = vld [vmem:[%s269 + $0x8] sm:$0xff]
        %v1708 = vld [vmem:[%s269 + $0x10] sm:$0xff]
        %v1709 = vld [vmem:[%s269 + $0x18] sm:$0xff]
        %v1710 = vadd.f32 %v1690, %v1706
        %v1711 = vadd.f32 %v1691, %v1707
        %v1712 = vadd.f32 %v1692, %v1708
        %v1713 = vadd.f32 %v1693, %v1709
        %v1714 = vsel %vm271, %v1710, 0.0
        %1715 = vadd.xlane.f32.xlu0 %v1714
        %v1716 = vpop.xlane.xlu0 %1715
        %v1717 = vsel %vm271, %v1711, 0.0
        %1718 = vadd.xlane.f32.xlu0 %v1717
        %v1719 = vpop.xlane.xlu0 %1718
        %v1720 = vsel %vm271, %v1712, 0.0
        %1721 = vadd.xlane.f32.xlu0 %v1720
        %v1722 = vpop.xlane.xlu0 %1721
        %v1723 = vsel %vm271, %v1713, 0.0
        %1724 = vadd.xlane.f32.xlu0 %v1723
        %v1725 = vpop.xlane.xlu0 %1724
        %v1726 = vrcp.pop 32.0
        %v1727 = vmul.f32 %v1716, %v1726
        %v1728 = vmul.f32 %v1719, %v1726
        %v1729 = vmul.f32 %v1722, %v1726
        %v1730 = vmul.f32 %v1725, %v1726
        %v1731 = vsub.f32 %v1710, %v1727
        %v1732 = vsub.f32 %v1711, %v1728
        %v1733 = vsub.f32 %v1712, %v1729
        %v1734 = vsub.f32 %v1713, %v1730
        %v1735 = vmul.f32 %v1731, %v1731
        %v1736 = vmul.f32 %v1732, %v1732
        %v1737 = vmul.f32 %v1733, %v1733
        %v1738 = vmul.f32 %v1734, %v1734
        %v1739 = vsel %vm271, %v1735, 0.0
        %1740 = vadd.xlane.f32.xlu0 %v1739
        %v1741 = vpop.xlane.xlu0 %1740
        %v1742 = vsel %vm271, %v1736, 0.0
        %1743 = vadd.xlane.f32.xlu0 %v1742
        %v1744 = vpop.xlane.xlu0 %1743
        %v1745 = vsel %vm271, %v1737, 0.0
        %1746 = vadd.xlane.f32.xlu0 %v1745
        %v1747 = vpop.xlane.xlu0 %1746
        %v1748 = vsel %vm271, %v1738, 0.0
        %1749 = vadd.xlane.f32.xlu0 %v1748
        %v1750 = vpop.xlane.xlu0 %1749
        %v1751 = vmul.f32 %v1741, %v1726
        %v1752 = vmul.f32 %v1744, %v1726
        %v1753 = vmul.f32 %v1747, %v1726
        %v1754 = vmul.f32 %v1750, %v1726
        %v1755 = vadd.f32 %v1751, 1e-05
        %v1756 = vadd.f32 %v1752, 1e-05
        %v1757 = vadd.f32 %v1753, 1e-05
        %v1758 = vadd.f32 %v1754, 1e-05
        %v1759 = vrsqrt.pop %v1755
        %v1760 = vrsqrt.pop %v1756
        %v1761 = vrsqrt.pop %v1757
        %v1762 = vrsqrt.pop %v1758
        %v1763 = vmul.f32 %v1731, %v1759
        %v1764 = vmul.f32 %v1732, %v1760
        %v1765 = vmul.f32 %v1733, %v1761
        %v1766 = vmul.f32 %v1734, %v1762
        %v1767 = vld [vmem:[%s4] sm:$0x1]
        %v1769 = vlaneseq
        %v1770 = vshrl.u32 %v1769, 7
        %v1771 = vsub.s32 0, %v1770
        %v1772 = vrot.slane %v1767, %v1771
        %v1774 = vmul.f32 %v1763, %v1772
        %v1775 = vmul.f32 %v1764, %v1772
        %v1776 = vmul.f32 %v1765, %v1772
        %v1777 = vmul.f32 %v1766, %v1772
        %v1778 = vld [vmem:[%s5] sm:$0x1]
        %v1780 = vlaneseq
        %v1781 = vshrl.u32 %v1780, 7
        %v1782 = vsub.s32 0, %v1781
        %v1783 = vrot.slane %v1778, %v1782
        %v1785 = vadd.f32 %v1774, %v1783
        %v1786 = vadd.f32 %v1775, %v1783
        %v1787 = vadd.f32 %v1776, %v1783
        %v1788 = vadd.f32 %v1777, %v1783
        %1789 = vst.msk [vmem:[%s259] sm:$0xff] %vm271, %v1785
        %1790 = vst.msk [vmem:[%s259 + $0x8] sm:$0xff] %vm271, %v1786
        %1791 = vst.msk [vmem:[%s259 + $0x10] sm:$0xff] %vm271, %v1787
        %1792 = vst.msk [vmem:[%s259 + $0x18] sm:$0xff] %vm271, %v1788
        %s1793 = sand.u32 %s164, 1
        %s1794 = scalar_lea.sflag [#allocation7], %s1793
        %s1795 = sand.u32 %s164, 1
        %s1796 = smul.addr %s1795, 32
        %s1797 = scalar_lea.vmem [#allocation6], %s1796
        // Predicated region
        $region45: #{transformer_encoder_layer.3} parent=43 // pred_check
          %p1798 = pneg %p174
        $region46: #{transformer_encoder_layer.3} parent=43 // pred_check_branch
          %1800 = sbr.rel (%p1798) target = $region48
        $region47: #{transformer_encoder_layer.3} parent=43 // pred_region
          %s1802 = ssub.s32 512, 512
          %1803 = vsyncadd %s1794, %s1802
          %s1804 = smul.addr %s20, 4
          %s1805 = smul.addr %s1804, 128
          %s1806 = scalar_lea.hbm %s6, %s1805
          %s1807 = sshll.u32 %s1797, 4
          %s1808 = int_to_ptr.vmem [resolvable:$true] %s1807
          %1813 = dma.vmem_to_hbm [thread:$0]  %s1808, 512, %s1806, %s1794, 128, 128, 8
        $region48: #{transformer_encoder_layer.3} parent=43 // pred_fallthru
          _
      $region44: #{transformer_encoder_layer.3} parent=5 // pred_fallthru
        _
      %p1814 = scmp.le.s32.totalorder 2, %s15
      // Predicated region
      $region49: #{transformer_encoder_layer.3} parent=5 // pred_check
        %p1815 = pneg %p1814
      $region50: #{transformer_encoder_layer.3} parent=5 // pred_check_branch
        %1817 = sbr.rel (%p1815) target = $region52
      $region51: #{transformer_encoder_layer.3} parent=5 // pred_region
        %s1818 = ssub.s32 %s15, 2
        // Predicated region
        $region53: #{transformer_encoder_layer.3} parent=51 // pred_check
          %p1819 = pneg %p180
        $region54: #{transformer_encoder_layer.3} parent=51 // pred_check_branch
          %1821 = sbr.rel (%p1819) target = $region56
        $region55: #{transformer_encoder_layer.3} parent=51 // pred_region
          %s1822 = sand.u32 %s165, 1
          %s1823 = scalar_lea.sflag [#allocation7], %s1822
          %s1824 = sand.u32 %s165, 1
          %s1825 = smul.addr %s1824, 32
          %s1826 = scalar_lea.vmem [#allocation6], %s1825
          %1827 = dma.done %s1823, 512
        $region56: #{transformer_encoder_layer.3} parent=51 // pred_fallthru
          _
      $region52: #{transformer_encoder_layer.3} parent=5 // pred_fallthru
        _
    $region6: #{transformer_encoder_layer.3} parent=1 // loop_footer
      %s19 = sadd.s32 1, %s15
    $region7: #{transformer_encoder_layer.3} parent=1 // loop_footer_branch
      %14 = sbr.rel target = $region3
    $region8: #{transformer_encoder_layer.3} parent=1 // loop_exit
      _
    %1828 = vsyncpa [#allocation7], 1
    %s1829 = scalar_lea.sflag [#allocation7], 1
    %1830 = vsyncpa %s1829, 1

</llo_original>
